<compile_context>
chip_gen: v6e
topology: v6e:2x2x1
jax: 0.10.0
libtpu: 0.0.40
codegen_flags: <defaults>
</compile_context>

<pallas_src>
import math
import functools

import jax
import jax.numpy as jnp
from jax.experimental import pallas as pl
from jax.experimental.pallas import tpu as pltpu

# ----------------------------------------------------------------------------
# Small CLIP configuration (ViT visual tower: vision_layers is an int)
# ----------------------------------------------------------------------------
EMBED_DIM = 32
IMAGE_RES = 16
VISION_LAYERS = 2
VISION_WIDTH = 64
VISION_PATCH = 8
CONTEXT_LEN = 8
VOCAB = 64
T_WIDTH = 64
T_HEADS = 2
T_LAYERS = 2
VISION_HEADS = max(1, VISION_WIDTH // 64)   # matches CLIP: vision_width // 64

NEG_INF = -1e30  # finite stand-in for torch's float('-inf') mask


# ----------------------------------------------------------------------------
# In-kernel helpers (operate on jnp values / refs, called from kernel bodies)
# ----------------------------------------------------------------------------
def _ln(x, g, b):
    """Single-pass LayerNorm: one sum + one sum-of-squares reduction."""
    x = x.astype(jnp.float32)
    n = x.shape[-1]
    s1 = jnp.sum(x, axis=-1, keepdims=True)
    s2 = jnp.sum(x * x, axis=-1, keepdims=True)
    mu = s1 * (1.0 / n)
    var = s2 * (1.0 / n) - mu * mu
    return (x - mu) * jax.lax.rsqrt(var + 1e-5) * g + b


def _run_transformer(x, bt, sp, mask, n_layers, n_head,
                     ln1_g, ln1_b, w_qkv, b_qkv, w_out, b_out,
                     ln2_g, ln2_b, w_fc, b_fc, w_proj, b_proj):
    """x: (bt*sp, D) f32 activation slab. Weights are bf16, biases/LN f32.

    Dense matmuls (QKV / out-proj / MLP) run on the full M = bt*sp slab; only
    the score / P@V attention steps are per-sample, per-head 2-D dots on
    sublane-aligned (sp, Dh) slices (sp is a multiple of 8).
    """
    M, D = x.shape
    H = n_head
    Dh = D // H
    scale = Dh ** -0.5
    bf16 = jnp.bfloat16

    for l in range(n_layers):
        # ---- multi-head self-attention: fused QKV + fused out-proj ----
        h = _ln(x, ln1_g[l], ln1_b[l])
        qkv = jnp.dot(h.astype(bf16), w_qkv[l],
                      preferred_element_type=jnp.float32) + b_qkv[l]   # (M, 3D)
        per_sample = []
        for b in range(bt):
            rows = slice(b * sp, (b + 1) * sp)
            heads = []
            for hd in range(H):
                q = qkv[rows, hd * Dh:(hd + 1) * Dh] * scale           # (sp, Dh)
                k = qkv[rows, D + hd * Dh:D + (hd + 1) * Dh]
                v = qkv[rows, 2 * D + hd * Dh:2 * D + (hd + 1) * Dh]
                s = jax.lax.dot_general(q.astype(bf16), k.astype(bf16),
                                        (((1,), (1,)), ((), ())),
                                        preferred_element_type=jnp.float32)
                if mask is not None:
                    s = s + mask
                s = s - jnp.max(s, axis=-1, keepdims=True)
                p = jnp.exp(s)
                p = p * pl.reciprocal(jnp.sum(p, axis=-1, keepdims=True),
                                      approx=True)
                heads.append(jnp.dot(p.astype(bf16), v.astype(bf16),
                                     preferred_element_type=jnp.float32))
            per_sample.append(heads[0] if H == 1
                              else jnp.concatenate(heads, axis=1))     # (sp, D)
        o = per_sample[0] if bt == 1 else jnp.concatenate(per_sample, axis=0)
        x = x + jnp.dot(o.astype(bf16), w_out[l],
                        preferred_element_type=jnp.float32) + b_out[l]

        # ---- MLP (fc -> QuickGELU -> proj) with fused bias / residual ----
        h = _ln(x, ln2_g[l], ln2_b[l])
        h = jnp.dot(h.astype(bf16), w_fc[l],
                    preferred_element_type=jnp.float32) + b_fc[l]
        h = h * jax.nn.sigmoid(1.702 * h)                              # QuickGELU
        h = jnp.dot(h.astype(bf16), w_proj[l],
                    preferred_element_type=jnp.float32) + b_proj[l]
        x = x + h
    return x


# ----------------------------------------------------------------------------
# Fused tower kernels (one pallas_call per tower, grid over batch tiles)
# ----------------------------------------------------------------------------
def _vision_tower_kernel(patches_ref, w_patch_ref, pos_ref,
                         ln_pre_g, ln_pre_b,
                         ln1_g, ln1_b, w_qkv, b_qkv, w_out, b_out,
                         ln2_g, ln2_b, w_fc, b_fc, w_proj, b_proj,
                         ln_post_g, ln_post_b, proj_ref,
                         o_ref, *, bt, sp, s_real, n_layers, n_head):
    # patches_ref block: (bt*sp, 3*p*p) bf16; per-sample row 0 is the (zero) cls
    # slot and rows >= s_real are zero padding. pos_ref already carries
    # cls+pos (row 0), pos (rows 1..s_real-1), zeros (pad rows), tiled over bt.
    x = jnp.dot(patches_ref[...], w_patch_ref[...],
                preferred_element_type=jnp.float32)                    # (bt*sp, D)
    x = x + pos_ref[...]
    x = _ln(x, ln_pre_g[...], ln_pre_b[...])

    # Key-padding mask for the padded sequence slots (pad keys never attended).
    col = jax.lax.broadcasted_iota(jnp.int32, (sp, sp), 1)
    mask = jnp.where(col >= s_real, jnp.float32(NEG_INF), jnp.float32(0.0))

    x = _run_transformer(x, bt, sp, mask, n_layers, n_head,
                         ln1_g, ln1_b, w_qkv, b_qkv, w_out, b_out,
                         ln2_g, ln2_b, w_fc, b_fc, w_proj, b_proj)

    # cls token = row 0 of each per-sample (sublane-aligned) tile.
    cls_rows = (x[0:1, :] if bt == 1 else
                jnp.concatenate([x[b * sp:b * sp + 1, :] for b in range(bt)],
                                axis=0))                               # (bt, D)
    cls_rows = _ln(cls_rows, ln_post_g[...], ln_post_b[...])
    o_ref[...] = jnp.dot(cls_rows.astype(jnp.bfloat16), proj_ref[...],
                         preferred_element_type=jnp.float32)           # (bt, E)


def _text_tower_kernel(eot_ref, x_emb_ref, pos_ref,
                       ln1_g, ln1_b, w_qkv, b_qkv, w_out, b_out,
                       ln2_g, ln2_b, w_fc, b_fc, w_proj, b_proj,
                       ln_final_g, ln_final_b, text_proj_ref,
                       o_ref, x_scratch, *, bt, seq_len, n_layers, n_head):
    L = seq_len
    x = x_emb_ref[...] + pos_ref[...]                                  # (bt*L, D)

    # Causal mask generated in-kernel (no L x L input DMA).
    row = jax.lax.broadcasted_iota(jnp.int32, (L, L), 0)
    col = jax.lax.broadcasted_iota(jnp.int32, (L, L), 1)
    mask = jnp.where(col > row, jnp.float32(NEG_INF), jnp.float32(0.0))

    x = _run_transformer(x, bt, L, mask, n_layers, n_head,
                         ln1_g, ln1_b, w_qkv, b_qkv, w_out, b_out,
                         ln2_g, ln2_b, w_fc, b_fc, w_proj, b_proj)

    # EOT gather: scalar-prefetched indices + dynamic row slice from scratch.
    # (LayerNorm is per-token, so gather-then-LN == LN-then-gather.)
    x_scratch[...] = x
    pid = pl.program_id(0)
    rows = []
    for b in range(bt):
        idx = eot_ref[pid * bt + b]
        rows.append(x_scratch[pl.ds(b * L + idx, 1), :])               # (1, D)
    x_eot = rows[0] if bt == 1 else jnp.concatenate(rows, axis=0)      # (bt, D)
    x_eot = _ln(x_eot, ln_final_g[...], ln_final_b[...])
    o_ref[...] = jnp.dot(x_eot.astype(jnp.bfloat16), text_proj_ref[...],
                         preferred_element_type=jnp.float32)           # (bt, E)


def _clip_head_kernel(img_ref, txt_ref, scale_ref, o_ref):
    img = img_ref[...].astype(jnp.float32)
    txt = txt_ref[...].astype(jnp.float32)
    img = img * jax.lax.rsqrt(jnp.sum(img * img, axis=-1, keepdims=True))
    txt = txt * jax.lax.rsqrt(jnp.sum(txt * txt, axis=-1, keepdims=True))
    s = jnp.exp(scale_ref[0, 0])
    logits = jax.lax.dot_general(img, txt, (((1,), (1,)), ((), ())),
                                 preferred_element_type=jnp.float32)
    o_ref[...] = s * logits
    # TODO(synk): at real batch sizes make the (bi, bt) lane axis a multiple of
    # 128 or fold this head into the text-tower epilogue.


# ----------------------------------------------------------------------------
# Parameter re-layout (trace-time glue): stack layers, matmul weights -> bf16
# ----------------------------------------------------------------------------
def _prep_blocks(blocks):
    bf16 = jnp.bfloat16

    def stack(name, dtype=None):
        w = jnp.stack([b[name] for b in blocks])
        return w.astype(dtype) if dtype is not None else w

    return (stack("ln1_g"), stack("ln1_b"),
            stack("w_qkv", bf16), stack("b_qkv"),
            stack("w_out", bf16), stack("b_out"),
            stack("ln2_g"), stack("ln2_b"),
            stack("w_fc", bf16), stack("b_fc"),
            stack("w_proj", bf16), stack("b_proj"))


def _rep_spec(a, n_prefetch=0):
    """Full-array VMEM block with a constant index_map (no per-step re-DMA)."""
    nd = a.ndim
    if n_prefetch == 0:
        return pl.BlockSpec(a.shape, lambda i, _nd=nd: (0,) * _nd)
    return pl.BlockSpec(a.shape, lambda i, _sref, _nd=nd: (0,) * _nd)
    # TODO(synk): at real CLIP widths, switch these to layer-streamed,
    # single-buffered (pl.Buffered(1)) specs with a layer grid axis instead of
    # keeping every layer resident (v7x has only 64 MiB VMEM).


def _pick_bt(batch, seq, target_rows=256):
    """Largest divisor of batch s.t. bt*seq stays within the target M rows."""
    best = 1
    for bt in range(1, batch + 1):
        if batch % bt == 0 and bt * seq <= max(seq, target_rows):
            best = bt
    return best


def _vmem_limit_bytes(operands, margin=16 << 20):
    total = sum(int(a.size) * a.dtype.itemsize for a in operands)
    return int(min(100 << 20, max(32 << 20, 2 * total + margin)))


# ----------------------------------------------------------------------------
# Encoders / forward
# ----------------------------------------------------------------------------
def encode_image(image, vp):
    B = image.shape[0]
    p = VISION_PATCH
    g = IMAGE_RES // p
    D = VISION_WIDTH
    Cpp = 3 * p * p
    S = g * g + 1                       # real sequence length (cls + patches)
    SP = ((S + 7) // 8) * 8             # padded to a sublane multiple of 8
    E = EMBED_DIM
    Bt = _pick_bt(B, SP)                # batch items folded into matmul M dim

    # Patch extraction: NCHW -> (B, g*g, ci*kh*kw), same ordering as Conv2d weight.
    patches = image.reshape(B, 3, g, p, g, p).transpose(0, 2, 4, 1, 3, 5)
    patches = patches.reshape(B, g * g, Cpp)
    # Row 0 = zero cls slot (cls embedding folded into pos row 0); rows >= S = pad.
    patches_ext = jnp.zeros((B, SP, Cpp), jnp.float32).at[:, 1:1 + g * g, :].set(patches)
    patches_flat = patches_ext.reshape(B * SP, Cpp).astype(jnp.bfloat16)

    w_patch = vp["conv1_w"].reshape(D, Cpp).T.astype(jnp.bfloat16)       # (Cpp, D)
    pos_cls = vp["pos"].at[0].add(vp["cls"])                             # (S, D)
    pos_pad = jnp.zeros((SP, D), jnp.float32).at[:S].set(pos_cls)
    pos_tiled = jnp.tile(pos_pad, (Bt, 1))                               # (Bt*SP, D)

    stacked = _prep_blocks(vp["blocks"])
    weights = (w_patch, pos_tiled, vp["ln_pre_g"], vp["ln_pre_b"], *stacked,
               vp["ln_post_g"], vp["ln_post_b"], vp["proj"].astype(jnp.bfloat16))

    feats = pl.pallas_call(
        functools.partial(_vision_tower_kernel, bt=Bt, sp=SP, s_real=S,
                          n_layers=VISION_LAYERS, n_head=VISION_HEADS),
        out_shape=jax.ShapeDtypeStruct((B, E), jnp.float32),
        grid=(B // Bt,),
        in_specs=[pl.BlockSpec((Bt * SP, Cpp), lambda i: (i, 0))]
                 + [_rep_spec(w) for w in weights],
        out_specs=pl.BlockSpec((Bt, E), lambda i: (i, 0)),
        compiler_params=pltpu.CompilerParams(
            dimension_semantics=("parallel",),
            vmem_limit_bytes=_vmem_limit_bytes((patches_flat,) + weights)),
    )(patches_flat, *weights)
    return feats


def encode_text(text, tp):
    B, L = text.shape
    D = T_WIDTH
    E = EMBED_DIM
    Bt = _pick_bt(B, L)

    x_emb = tp["token_emb"][text].reshape(B * L, D)                      # gather = glue
    pos_tiled = jnp.tile(tp["pos"], (Bt, 1))                             # (Bt*L, D)
    eot_idx = jnp.argmax(text, axis=-1).astype(jnp.int32)                # (B,)

    stacked = _prep_blocks(tp["blocks"])
    weights = (*stacked, tp["ln_final_g"], tp["ln_final_b"],
               tp["text_proj"].astype(jnp.bfloat16))

    feats = pl.pallas_call(
        functools.partial(_text_tower_kernel, bt=Bt, seq_len=L,
                          n_layers=T_LAYERS, n_head=T_HEADS),
        out_shape=jax.ShapeDtypeStruct((B, E), jnp.float32),
        grid_spec=pltpu.PrefetchScalarGridSpec(
            num_scalar_prefetch=1,
            grid=(B // Bt,),
            in_specs=[pl.BlockSpec((Bt * L, D), lambda i, eot: (i, 0)),
                      _rep_spec(pos_tiled, n_prefetch=1)]
                     + [_rep_spec(w, n_prefetch=1) for w in weights],
            out_specs=pl.BlockSpec((Bt, E), lambda i, eot: (i, 0)),
            scratch_shapes=[pltpu.VMEM((Bt * L, D), jnp.float32)]),
        compiler_params=pltpu.CompilerParams(
            dimension_semantics=("parallel",),
            vmem_limit_bytes=_vmem_limit_bytes((x_emb, pos_tiled) + weights)),
    )(eot_idx, x_emb, pos_tiled, *weights)
    return feats


def clip_head(img_feat, txt_feat, logit_scale):
    bi, bt = img_feat.shape[0], txt_feat.shape[0]
    return pl.pallas_call(
        _clip_head_kernel,
        out_shape=jax.ShapeDtypeStruct((bi, bt), jnp.float32),
        in_specs=[pl.BlockSpec(memory_space=pltpu.MemorySpace.VMEM),
                  pl.BlockSpec(memory_space=pltpu.MemorySpace.VMEM),
                  pl.BlockSpec(memory_space=pltpu.MemorySpace.SMEM)],
        out_specs=pl.BlockSpec(memory_space=pltpu.MemorySpace.VMEM),
    )(img_feat, txt_feat, logit_scale)


def clip_forward(image, text, vp, tp):
    img_feat = encode_image(image, vp)
    txt_feat = encode_text(text, tp)
    logits_per_image = clip_head(img_feat, txt_feat, tp["logit_scale"])
    logits_per_text = logits_per_image.T
    return logits_per_image, logits_per_text


# ----------------------------------------------------------------------------
# Deterministic parameter initialization (shapes per the module's __init__)
# ----------------------------------------------------------------------------
def init_block_params(key, d_model, n_layers):
    proj_std = d_model ** -0.5 * (2 * n_layers) ** -0.5
    attn_std = d_model ** -0.5
    fc_std = (2 * d_model) ** -0.5
    ks = jax.random.split(key, 4)
    f32 = jnp.float32
    return {
        "ln1_g": jnp.ones((1, d_model), f32), "ln1_b": jnp.zeros((1, d_model), f32),
        "ln2_g": jnp.ones((1, d_model), f32), "ln2_b": jnp.zeros((1, d_model), f32),
        # weights stored [in, out] (i.e. torch W^T) for direct x @ W use
        "w_qkv": attn_std * jax.random.normal(ks[0], (d_model, 3 * d_model), f32),
        "b_qkv": jnp.zeros((1, 3 * d_model), f32),
        "w_out": proj_std * jax.random.normal(ks[1], (d_model, d_model), f32),
        "b_out": jnp.zeros((1, d_model), f32),
        "w_fc": fc_std * jax.random.normal(ks[2], (d_model, 4 * d_model), f32),
        "b_fc": jnp.zeros((1, 4 * d_model), f32),
        "w_proj": proj_std * jax.random.normal(ks[3], (4 * d_model, d_model), f32),
        "b_proj": jnp.zeros((1, d_model), f32),
    }


def init_vision_params(key):
    scale = VISION_WIDTH ** -0.5
    g = IMAGE_RES // VISION_PATCH
    n_tok = g * g + 1
    ks = jax.random.split(key, 6)
    f32 = jnp.float32
    blocks = [init_block_params(k, VISION_WIDTH, VISION_LAYERS)
              for k in jax.random.split(ks[3], VISION_LAYERS)]
    return {
        "conv1_w": scale * jax.random.normal(
            ks[0], (VISION_WIDTH, 3, VISION_PATCH, VISION_PATCH), f32),
        "cls": scale * jax.random.normal(ks[1], (VISION_WIDTH,), f32),
        "pos": scale * jax.random.normal(ks[2], (n_tok, VISION_WIDTH), f32),
        "ln_pre_g": jnp.ones((1, VISION_WIDTH), f32),
        "ln_pre_b": jnp.zeros((1, VISION_WIDTH), f32),
        "blocks": blocks,
        "ln_post_g": jnp.ones((1, VISION_WIDTH), f32),
        "ln_post_b": jnp.zeros((1, VISION_WIDTH), f32),
        "proj": scale * jax.random.normal(ks[4], (VISION_WIDTH, EMBED_DIM), f32),
    }


def init_text_params(key):
    ks = jax.random.split(key, 4)
    f32 = jnp.float32
    blocks = [init_block_params(k, T_WIDTH, T_LAYERS)
              for k in jax.random.split(ks[2], T_LAYERS)]
    return {
        "token_emb": 0.02 * jax.random.normal(ks[0], (VOCAB, T_WIDTH), f32),
        "pos": 0.01 * jax.random.normal(ks[1], (CONTEXT_LEN, T_WIDTH), f32),
        "blocks": blocks,
        "ln_final_g": jnp.ones((1, T_WIDTH), f32),
        "ln_final_b": jnp.zeros((1, T_WIDTH), f32),
        "text_proj": T_WIDTH ** -0.5 * jax.random.normal(ks[3], (T_WIDTH, EMBED_DIM), f32),
        "logit_scale": jnp.array([[math.log(1.0 / 0.07)]], f32),
    }


# TODO(synk): ModifiedResNet visual branch (tuple vision_layers) not implemented;
# this script exercises the VisionTransformer branch of CLIP.
# TODO(synk): at real CLIP widths, add a layer-streaming grid axis (arbitrary,
# innermost) with layer-indexed BlockSpecs + single-buffered weight specs and
# tile the MLP N dim for v7x's 64 MiB VMEM; irrelevant at these toy shapes.

if __name__ == "__main__":
    key = jax.random.PRNGKey(0)
    k_img, k_txt, k_vp, k_tp = jax.random.split(key, 4)

    image = jax.random.normal(k_img, (2, 3, IMAGE_RES, IMAGE_RES), jnp.float32)
    text = jax.random.randint(k_txt, (2, CONTEXT_LEN), 1, VOCAB, dtype=jnp.int32)

    vp = init_vision_params(k_vp)
    tp = init_text_params(k_tp)

    fwd = jax.jit(clip_forward)
    logits_per_image, logits_per_text = fwd(image, text, vp, tp)
    jax.block_until_ready((logits_per_image, logits_per_text))

    assert logits_per_image.shape == (2, 2)
    assert logits_per_text.shape == (2, 2)
    print("KERNEL_OK")
</pallas_src>

<mosaic_0001>
module attributes {stable_mosaic.version = 11 : i64} {
  func.func @_vision_tower_kernel(%arg0: i32, %arg1: memref<16x192xbf16, #tpu.memory_space<vmem>>, %arg2: memref<192x64xbf16, #tpu.memory_space<vmem>>, %arg3: memref<16x64xf32, #tpu.memory_space<vmem>>, %arg4: memref<1x64xf32, #tpu.memory_space<vmem>>, %arg5: memref<1x64xf32, #tpu.memory_space<vmem>>, %arg6: memref<2x1x64xf32, #tpu.memory_space<vmem>>, %arg7: memref<2x1x64xf32, #tpu.memory_space<vmem>>, %arg8: memref<2x64x192xbf16, #tpu.memory_space<vmem>>, %arg9: memref<2x1x192xf32, #tpu.memory_space<vmem>>, %arg10: memref<2x64x64xbf16, #tpu.memory_space<vmem>>, %arg11: memref<2x1x64xf32, #tpu.memory_space<vmem>>, %arg12: memref<2x1x64xf32, #tpu.memory_space<vmem>>, %arg13: memref<2x1x64xf32, #tpu.memory_space<vmem>>, %arg14: memref<2x64x256xbf16, #tpu.memory_space<vmem>>, %arg15: memref<2x1x256xf32, #tpu.memory_space<vmem>>, %arg16: memref<2x256x64xbf16, #tpu.memory_space<vmem>>, %arg17: memref<2x1x64xf32, #tpu.memory_space<vmem>>, %arg18: memref<1x64xf32, #tpu.memory_space<vmem>>, %arg19: memref<1x64xf32, #tpu.memory_space<vmem>>, %arg20: memref<64x32xbf16, #tpu.memory_space<vmem>>, %arg21: memref<2x32xf32, #tpu.memory_space<vmem>>) attributes {dimension_semantics = [#tpu.dimension_semantics<parallel>], iteration_bounds = array<i64: 1>, scalar_prefetch = 0 : i64, scratch_operands = 0 : i64, tpu.core_type = #tpu.core_type<tc>, window_params = [{transform_indices = @transform_0, window_bounds = array<i64: 16, 192>}, {pipeline_mode = #tpu.pipeline_mode<synchronous>, transform_indices = @transform_1, window_bounds = array<i64: 192, 64>}, {pipeline_mode = #tpu.pipeline_mode<synchronous>, transform_indices = @transform_2, window_bounds = array<i64: 16, 64>}, {pipeline_mode = #tpu.pipeline_mode<synchronous>, transform_indices = @transform_3, window_bounds = array<i64: 1, 64>}, {pipeline_mode = #tpu.pipeline_mode<synchronous>, transform_indices = @transform_4, window_bounds = array<i64: 1, 64>}, {pipeline_mode = #tpu.pipeline_mode<synchronous>, transform_indices = @transform_5, window_bounds = array<i64: 2, 1, 64>}, {pipeline_mode = #tpu.pipeline_mode<synchronous>, transform_indices = @transform_6, window_bounds = array<i64: 2, 1, 64>}, {pipeline_mode = #tpu.pipeline_mode<synchronous>, transform_indices = @transform_7, window_bounds = array<i64: 2, 64, 192>}, {pipeline_mode = #tpu.pipeline_mode<synchronous>, transform_indices = @transform_8, window_bounds = array<i64: 2, 1, 192>}, {pipeline_mode = #tpu.pipeline_mode<synchronous>, transform_indices = @transform_9, window_bounds = array<i64: 2, 64, 64>}, {pipeline_mode = #tpu.pipeline_mode<synchronous>, transform_indices = @transform_10, window_bounds = array<i64: 2, 1, 64>}, {pipeline_mode = #tpu.pipeline_mode<synchronous>, transform_indices = @transform_11, window_bounds = array<i64: 2, 1, 64>}, {pipeline_mode = #tpu.pipeline_mode<synchronous>, transform_indices = @transform_12, window_bounds = array<i64: 2, 1, 64>}, {pipeline_mode = #tpu.pipeline_mode<synchronous>, transform_indices = @transform_13, window_bounds = array<i64: 2, 64, 256>}, {pipeline_mode = #tpu.pipeline_mode<synchronous>, transform_indices = @transform_14, window_bounds = array<i64: 2, 1, 256>}, {pipeline_mode = #tpu.pipeline_mode<synchronous>, transform_indices = @transform_15, window_bounds = array<i64: 2, 256, 64>}, {pipeline_mode = #tpu.pipeline_mode<synchronous>, transform_indices = @transform_16, window_bounds = array<i64: 2, 1, 64>}, {pipeline_mode = #tpu.pipeline_mode<synchronous>, transform_indices = @transform_17, window_bounds = array<i64: 1, 64>}, {pipeline_mode = #tpu.pipeline_mode<synchronous>, transform_indices = @transform_18, window_bounds = array<i64: 1, 64>}, {pipeline_mode = #tpu.pipeline_mode<synchronous>, transform_indices = @transform_19, window_bounds = array<i64: 64, 32>}, {transform_indices = @transform_20, window_bounds = array<i64: 2, 32>}]} {
    %c0 = arith.constant 0 : index
    %c0_0 = arith.constant 0 : index
    %0 = vector.load %arg1[%c0, %c0_0] : memref<16x192xbf16, #tpu.memory_space<vmem>>, vector<16x192xbf16>
    %c0_1 = arith.constant 0 : index
    %c0_2 = arith.constant 0 : index
    %1 = vector.load %arg2[%c0_1, %c0_2] : memref<192x64xbf16, #tpu.memory_space<vmem>>, vector<192x64xbf16>
    %cst = arith.constant dense<0.000000e+00> : vector<16x64xf32>
    %2 = tpu.matmul %0, %1, %cst {dimension_numbers = #tpu.dot_dimension_numbers<[1], [0], [0], [1], [0, 0, 1, 1], [], []>} : vector<16x192xbf16>, vector<192x64xbf16>, vector<16x64xf32> -> vector<16x64xf32>
    %c0_3 = arith.constant 0 : index
    %c0_4 = arith.constant 0 : index
    %3 = vector.load %arg3[%c0_3, %c0_4] : memref<16x64xf32, #tpu.memory_space<vmem>>, vector<16x64xf32>
    %4 = arith.addf %2, %3 : vector<16x64xf32>
    %c0_5 = arith.constant 0 : index
    %c0_6 = arith.constant 0 : index
    %5 = vector.load %arg4[%c0_5, %c0_6] : memref<1x64xf32, #tpu.memory_space<vmem>>, vector<1x64xf32>
    %c0_7 = arith.constant 0 : index
    %c0_8 = arith.constant 0 : index
    %6 = vector.load %arg5[%c0_7, %c0_8] : memref<1x64xf32, #tpu.memory_space<vmem>>, vector<1x64xf32>
    %cst_9 = arith.constant dense<0.000000e+00> : vector<16xf32>
    %7 = vector.multi_reduction <add>, %4, %cst_9 [1] : vector<16x64xf32> to vector<16xf32>
    %8 = vector.shape_cast %7 : vector<16xf32> to vector<16x1xf32>
    %9 = arith.mulf %4, %4 : vector<16x64xf32>
    %cst_10 = arith.constant dense<0.000000e+00> : vector<16xf32>
    %10 = vector.multi_reduction <add>, %9, %cst_10 [1] : vector<16x64xf32> to vector<16xf32>
    %11 = vector.shape_cast %10 : vector<16xf32> to vector<16x1xf32>
    %cst_11 = arith.constant 1.562500e-02 : f32
    %12 = vector.broadcast %cst_11 : f32 to vector<16x1xf32>
    %13 = arith.mulf %8, %12 : vector<16x1xf32>
    %cst_12 = arith.constant 1.562500e-02 : f32
    %14 = vector.broadcast %cst_12 : f32 to vector<16x1xf32>
    %15 = arith.mulf %11, %14 : vector<16x1xf32>
    %16 = arith.mulf %13, %13 : vector<16x1xf32>
    %17 = arith.subf %15, %16 : vector<16x1xf32>
    %18 = vector.broadcast %13 : vector<16x1xf32> to vector<16x64xf32>
    %19 = arith.subf %4, %18 : vector<16x64xf32>
    %cst_13 = arith.constant 9.99999974E-6 : f32
    %20 = vector.broadcast %cst_13 : f32 to vector<16x1xf32>
    %21 = arith.addf %17, %20 : vector<16x1xf32>
    %22 = math.rsqrt %21 : vector<16x1xf32>
    %23 = vector.broadcast %22 : vector<16x1xf32> to vector<16x64xf32>
    %24 = arith.mulf %19, %23 : vector<16x64xf32>
    %25 = vector.broadcast %5 : vector<1x64xf32> to vector<16x64xf32>
    %26 = arith.mulf %24, %25 : vector<16x64xf32>
    %27 = vector.broadcast %6 : vector<1x64xf32> to vector<16x64xf32>
    %28 = arith.addf %26, %27 : vector<16x64xf32>
    %29 = tpu.iota {dimensions = array<i32: 1>} : vector<8x8xi32>
    %c5_i32 = arith.constant 5 : i32
    %30 = vector.broadcast %c5_i32 : i32 to vector<8x8xi32>
    %31 = arith.cmpi sge, %29, %30 : vector<8x8xi32>
    %cst_14 = arith.constant -1.000000e+30 : f32
    %cst_15 = arith.constant 0.000000e+00 : f32
    %32 = vector.broadcast %cst_14 : f32 to vector<8x8xf32>
    %33 = vector.broadcast %cst_15 : f32 to vector<8x8xf32>
    %34 = arith.select %31, %32, %33 : vector<8x8xi1>, vector<8x8xf32>
    %c0_16 = arith.constant 0 : index
    %c0_17 = arith.constant 0 : index
    %c0_18 = arith.constant 0 : index
    %35 = vector.load %arg6[%c0_16, %c0_17, %c0_18] : memref<2x1x64xf32, #tpu.memory_space<vmem>>, vector<1x1x64xf32>
    %36 = vector.shape_cast %35 : vector<1x1x64xf32> to vector<1x64xf32>
    %c0_19 = arith.constant 0 : index
    %c0_20 = arith.constant 0 : index
    %c0_21 = arith.constant 0 : index
    %37 = vector.load %arg7[%c0_19, %c0_20, %c0_21] : memref<2x1x64xf32, #tpu.memory_space<vmem>>, vector<1x1x64xf32>
    %38 = vector.shape_cast %37 : vector<1x1x64xf32> to vector<1x64xf32>
    %cst_22 = arith.constant dense<0.000000e+00> : vector<16xf32>
    %39 = vector.multi_reduction <add>, %28, %cst_22 [1] : vector<16x64xf32> to vector<16xf32>
    %40 = vector.shape_cast %39 : vector<16xf32> to vector<16x1xf32>
    %41 = arith.mulf %28, %28 : vector<16x64xf32>
    %cst_23 = arith.constant dense<0.000000e+00> : vector<16xf32>
    %42 = vector.multi_reduction <add>, %41, %cst_23 [1] : vector<16x64xf32> to vector<16xf32>
    %43 = vector.shape_cast %42 : vector<16xf32> to vector<16x1xf32>
    %cst_24 = arith.constant 1.562500e-02 : f32
    %44 = vector.broadcast %cst_24 : f32 to vector<16x1xf32>
    %45 = arith.mulf %40, %44 : vector<16x1xf32>
    %cst_25 = arith.constant 1.562500e-02 : f32
    %46 = vector.broadcast %cst_25 : f32 to vector<16x1xf32>
    %47 = arith.mulf %43, %46 : vector<16x1xf32>
    %48 = arith.mulf %45, %45 : vector<16x1xf32>
    %49 = arith.subf %47, %48 : vector<16x1xf32>
    %50 = vector.broadcast %45 : vector<16x1xf32> to vector<16x64xf32>
    %51 = arith.subf %28, %50 : vector<16x64xf32>
    %cst_26 = arith.constant 9.99999974E-6 : f32
    %52 = vector.broadcast %cst_26 : f32 to vector<16x1xf32>
    %53 = arith.addf %49, %52 : vector<16x1xf32>
    %54 = math.rsqrt %53 : vector<16x1xf32>
    %55 = vector.broadcast %54 : vector<16x1xf32> to vector<16x64xf32>
    %56 = arith.mulf %51, %55 : vector<16x64xf32>
    %57 = vector.broadcast %36 : vector<1x64xf32> to vector<16x64xf32>
    %58 = arith.mulf %56, %57 : vector<16x64xf32>
    %59 = vector.broadcast %38 : vector<1x64xf32> to vector<16x64xf32>
    %60 = arith.addf %58, %59 : vector<16x64xf32>
    %61 = arith.truncf %60 : vector<16x64xf32> to vector<16x64xbf16>
    %c0_27 = arith.constant 0 : index
    %c0_28 = arith.constant 0 : index
    %c0_29 = arith.constant 0 : index
    %62 = vector.load %arg8[%c0_27, %c0_28, %c0_29] : memref<2x64x192xbf16, #tpu.memory_space<vmem>>, vector<1x64x192xbf16>
    %63 = vector.shape_cast %62 : vector<1x64x192xbf16> to vector<64x192xbf16>
    %cst_30 = arith.constant dense<0.000000e+00> : vector<16x192xf32>
    %64 = tpu.matmul %61, %63, %cst_30 {dimension_numbers = #tpu.dot_dimension_numbers<[1], [0], [0], [1], [0, 0, 1, 1], [], []>} : vector<16x64xbf16>, vector<64x192xbf16>, vector<16x192xf32> -> vector<16x192xf32>
    %c0_31 = arith.constant 0 : index
    %c0_32 = arith.constant 0 : index
    %c0_33 = arith.constant 0 : index
    %65 = vector.load %arg9[%c0_31, %c0_32, %c0_33] : memref<2x1x192xf32, #tpu.memory_space<vmem>>, vector<1x1x192xf32>
    %66 = vector.shape_cast %65 : vector<1x1x192xf32> to vector<1x192xf32>
    %67 = vector.broadcast %66 : vector<1x192xf32> to vector<16x192xf32>
    %68 = arith.addf %64, %67 : vector<16x192xf32>
    %69 = vector.extract_strided_slice %68 {offsets = [0, 0], sizes = [8, 64], strides = [1, 1]} : vector<16x192xf32> to vector<8x64xf32>
    %cst_34 = arith.constant 1.250000e-01 : f32
    %70 = vector.broadcast %cst_34 : f32 to vector<8x64xf32>
    %71 = arith.mulf %69, %70 : vector<8x64xf32>
    %72 = vector.extract_strided_slice %68 {offsets = [0, 64], sizes = [8, 64], strides = [1, 1]} : vector<16x192xf32> to vector<8x64xf32>
    %73 = vector.extract_strided_slice %68 {offsets = [0, 128], sizes = [8, 64], strides = [1, 1]} : vector<16x192xf32> to vector<8x64xf32>
    %74 = arith.truncf %71 : vector<8x64xf32> to vector<8x64xbf16>
    %75 = arith.truncf %72 : vector<8x64xf32> to vector<8x64xbf16>
    %cst_35 = arith.constant dense<0.000000e+00> : vector<8x8xf32>
    %76 = tpu.matmul %74, %75, %cst_35 {dimension_numbers = #tpu.dot_dimension_numbers<[1], [1], [0], [0], [0, 0, 1, 0], [], []>} : vector<8x64xbf16>, vector<8x64xbf16>, vector<8x8xf32> -> vector<8x8xf32>
    %77 = arith.addf %76, %34 : vector<8x8xf32>
    %cst_36 = arith.constant dense<0xFF800000> : vector<8xf32>
    %78 = vector.multi_reduction <maximumf>, %77, %cst_36 [1] : vector<8x8xf32> to vector<8xf32>
    %79 = vector.shape_cast %78 : vector<8xf32> to vector<8x1xf32>
    %80 = vector.broadcast %79 : vector<8x1xf32> to vector<8x8xf32>
    %81 = arith.subf %77, %80 : vector<8x8xf32>
    %82 = math.exp %81 : vector<8x8xf32>
    %cst_37 = arith.constant dense<0.000000e+00> : vector<8xf32>
    %83 = vector.multi_reduction <add>, %82, %cst_37 [1] : vector<8x8xf32> to vector<8xf32>
    %84 = vector.shape_cast %83 : vector<8xf32> to vector<8x1xf32>
    %85 = tpu.reciprocal %84 {approx = true} : vector<8x1xf32> -> vector<8x1xf32>
    %86 = vector.broadcast %85 : vector<8x1xf32> to vector<8x8xf32>
    %87 = arith.mulf %82, %86 : vector<8x8xf32>
    %88 = arith.truncf %87 : vector<8x8xf32> to vector<8x8xbf16>
    %89 = arith.truncf %73 : vector<8x64xf32> to vector<8x64xbf16>
    %cst_38 = arith.constant dense<0.000000e+00> : vector<8x64xf32>
    %90 = tpu.matmul %88, %89, %cst_38 {dimension_numbers = #tpu.dot_dimension_numbers<[1], [0], [0], [1], [0, 0, 1, 1], [], []>} : vector<8x8xbf16>, vector<8x64xbf16>, vector<8x64xf32> -> vector<8x64xf32>
    %91 = vector.extract_strided_slice %68 {offsets = [8, 0], sizes = [8, 64], strides = [1, 1]} : vector<16x192xf32> to vector<8x64xf32>
    %cst_39 = arith.constant 1.250000e-01 : f32
    %92 = vector.broadcast %cst_39 : f32 to vector<8x64xf32>
    %93 = arith.mulf %91, %92 : vector<8x64xf32>
    %94 = vector.extract_strided_slice %68 {offsets = [8, 64], sizes = [8, 64], strides = [1, 1]} : vector<16x192xf32> to vector<8x64xf32>
    %95 = vector.extract_strided_slice %68 {offsets = [8, 128], sizes = [8, 64], strides = [1, 1]} : vector<16x192xf32> to vector<8x64xf32>
    %96 = arith.truncf %93 : vector<8x64xf32> to vector<8x64xbf16>
    %97 = arith.truncf %94 : vector<8x64xf32> to vector<8x64xbf16>
    %cst_40 = arith.constant dense<0.000000e+00> : vector<8x8xf32>
    %98 = tpu.matmul %96, %97, %cst_40 {dimension_numbers = #tpu.dot_dimension_numbers<[1], [1], [0], [0], [0, 0, 1, 0], [], []>} : vector<8x64xbf16>, vector<8x64xbf16>, vector<8x8xf32> -> vector<8x8xf32>
    %99 = arith.addf %98, %34 : vector<8x8xf32>
    %cst_41 = arith.constant dense<0xFF800000> : vector<8xf32>
    %100 = vector.multi_reduction <maximumf>, %99, %cst_41 [1] : vector<8x8xf32> to vector<8xf32>
    %101 = vector.shape_cast %100 : vector<8xf32> to vector<8x1xf32>
    %102 = vector.broadcast %101 : vector<8x1xf32> to vector<8x8xf32>
    %103 = arith.subf %99, %102 : vector<8x8xf32>
    %104 = math.exp %103 : vector<8x8xf32>
    %cst_42 = arith.constant dense<0.000000e+00> : vector<8xf32>
    %105 = vector.multi_reduction <add>, %104, %cst_42 [1] : vector<8x8xf32> to vector<8xf32>
    %106 = vector.shape_cast %105 : vector<8xf32> to vector<8x1xf32>
    %107 = tpu.reciprocal %106 {approx = true} : vector<8x1xf32> -> vector<8x1xf32>
    %108 = vector.broadcast %107 : vector<8x1xf32> to vector<8x8xf32>
    %109 = arith.mulf %104, %108 : vector<8x8xf32>
    %110 = arith.truncf %109 : vector<8x8xf32> to vector<8x8xbf16>
    %111 = arith.truncf %95 : vector<8x64xf32> to vector<8x64xbf16>
    %cst_43 = arith.constant dense<0.000000e+00> : vector<8x64xf32>
    %112 = tpu.matmul %110, %111, %cst_43 {dimension_numbers = #tpu.dot_dimension_numbers<[1], [0], [0], [1], [0, 0, 1, 1], [], []>} : vector<8x8xbf16>, vector<8x64xbf16>, vector<8x64xf32> -> vector<8x64xf32>
    %113 = tpu.concatenate %90, %112 in 0 : vector<8x64xf32>, vector<8x64xf32> -> vector<16x64xf32>
    %114 = arith.truncf %113 : vector<16x64xf32> to vector<16x64xbf16>
    %c0_44 = arith.constant 0 : index
    %c0_45 = arith.constant 0 : index
    %c0_46 = arith.constant 0 : index
    %115 = vector.load %arg10[%c0_44, %c0_45, %c0_46] : memref<2x64x64xbf16, #tpu.memory_space<vmem>>, vector<1x64x64xbf16>
    %116 = vector.shape_cast %115 : vector<1x64x64xbf16> to vector<64x64xbf16>
    %cst_47 = arith.constant dense<0.000000e+00> : vector<16x64xf32>
    %117 = tpu.matmul %114, %116, %cst_47 {dimension_numbers = #tpu.dot_dimension_numbers<[1], [0], [0], [1], [0, 0, 1, 1], [], []>} : vector<16x64xbf16>, vector<64x64xbf16>, vector<16x64xf32> -> vector<16x64xf32>
    %118 = arith.addf %28, %117 : vector<16x64xf32>
    %c0_48 = arith.constant 0 : index
    %c0_49 = arith.constant 0 : index
    %c0_50 = arith.constant 0 : index
    %119 = vector.load %arg11[%c0_48, %c0_49, %c0_50] : memref<2x1x64xf32, #tpu.memory_space<vmem>>, vector<1x1x64xf32>
    %120 = vector.shape_cast %119 : vector<1x1x64xf32> to vector<1x64xf32>
    %121 = vector.broadcast %120 : vector<1x64xf32> to vector<16x64xf32>
    %122 = arith.addf %118, %121 : vector<16x64xf32>
    %c0_51 = arith.constant 0 : index
    %c0_52 = arith.constant 0 : index
    %c0_53 = arith.constant 0 : index
    %123 = vector.load %arg12[%c0_51, %c0_52, %c0_53] : memref<2x1x64xf32, #tpu.memory_space<vmem>>, vector<1x1x64xf32>
    %124 = vector.shape_cast %123 : vector<1x1x64xf32> to vector<1x64xf32>
    %c0_54 = arith.constant 0 : index
    %c0_55 = arith.constant 0 : index
    %c0_56 = arith.constant 0 : index
    %125 = vector.load %arg13[%c0_54, %c0_55, %c0_56] : memref<2x1x64xf32, #tpu.memory_space<vmem>>, vector<1x1x64xf32>
    %126 = vector.shape_cast %125 : vector<1x1x64xf32> to vector<1x64xf32>
    %cst_57 = arith.constant dense<0.000000e+00> : vector<16xf32>
    %127 = vector.multi_reduction <add>, %122, %cst_57 [1] : vector<16x64xf32> to vector<16xf32>
    %128 = vector.shape_cast %127 : vector<16xf32> to vector<16x1xf32>
    %129 = arith.mulf %122, %122 : vector<16x64xf32>
    %cst_58 = arith.constant dense<0.000000e+00> : vector<16xf32>
    %130 = vector.multi_reduction <add>, %129, %cst_58 [1] : vector<16x64xf32> to vector<16xf32>
    %131 = vector.shape_cast %130 : vector<16xf32> to vector<16x1xf32>
    %cst_59 = arith.constant 1.562500e-02 : f32
    %132 = vector.broadcast %cst_59 : f32 to vector<16x1xf32>
    %133 = arith.mulf %128, %132 : vector<16x1xf32>
    %cst_60 = arith.constant 1.562500e-02 : f32
    %134 = vector.broadcast %cst_60 : f32 to vector<16x1xf32>
    %135 = arith.mulf %131, %134 : vector<16x1xf32>
    %136 = arith.mulf %133, %133 : vector<16x1xf32>
    %137 = arith.subf %135, %136 : vector<16x1xf32>
    %138 = vector.broadcast %133 : vector<16x1xf32> to vector<16x64xf32>
    %139 = arith.subf %122, %138 : vector<16x64xf32>
    %cst_61 = arith.constant 9.99999974E-6 : f32
    %140 = vector.broadcast %cst_61 : f32 to vector<16x1xf32>
    %141 = arith.addf %137, %140 : vector<16x1xf32>
    %142 = math.rsqrt %141 : vector<16x1xf32>
    %143 = vector.broadcast %142 : vector<16x1xf32> to vector<16x64xf32>
    %144 = arith.mulf %139, %143 : vector<16x64xf32>
    %145 = vector.broadcast %124 : vector<1x64xf32> to vector<16x64xf32>
    %146 = arith.mulf %144, %145 : vector<16x64xf32>
    %147 = vector.broadcast %126 : vector<1x64xf32> to vector<16x64xf32>
    %148 = arith.addf %146, %147 : vector<16x64xf32>
    %149 = arith.truncf %148 : vector<16x64xf32> to vector<16x64xbf16>
    %c0_62 = arith.constant 0 : index
    %c0_63 = arith.constant 0 : index
    %c0_64 = arith.constant 0 : index
    %150 = vector.load %arg14[%c0_62, %c0_63, %c0_64] : memref<2x64x256xbf16, #tpu.memory_space<vmem>>, vector<1x64x256xbf16>
    %151 = vector.shape_cast %150 : vector<1x64x256xbf16> to vector<64x256xbf16>
    %cst_65 = arith.constant dense<0.000000e+00> : vector<16x256xf32>
    %152 = tpu.matmul %149, %151, %cst_65 {dimension_numbers = #tpu.dot_dimension_numbers<[1], [0], [0], [1], [0, 0, 1, 1], [], []>} : vector<16x64xbf16>, vector<64x256xbf16>, vector<16x256xf32> -> vector<16x256xf32>
    %c0_66 = arith.constant 0 : index
    %c0_67 = arith.constant 0 : index
    %c0_68 = arith.constant 0 : index
    %153 = vector.load %arg15[%c0_66, %c0_67, %c0_68] : memref<2x1x256xf32, #tpu.memory_space<vmem>>, vector<1x1x256xf32>
    %154 = vector.shape_cast %153 : vector<1x1x256xf32> to vector<1x256xf32>
    %155 = vector.broadcast %154 : vector<1x256xf32> to vector<16x256xf32>
    %156 = arith.addf %152, %155 : vector<16x256xf32>
    %cst_69 = arith.constant 1.702000e+00 : f32
    %157 = vector.broadcast %cst_69 : f32 to vector<16x256xf32>
    %158 = arith.mulf %157, %156 : vector<16x256xf32>
    %159 = arith.negf %158 : vector<16x256xf32>
    %160 = math.exp %159 : vector<16x256xf32>
    %cst_70 = arith.constant 1.000000e+00 : f32
    %161 = vector.broadcast %cst_70 : f32 to vector<16x256xf32>
    %162 = arith.addf %161, %160 : vector<16x256xf32>
    %163 = arith.divf %161, %162 : vector<16x256xf32>
    %164 = arith.mulf %156, %163 : vector<16x256xf32>
    %165 = arith.truncf %164 : vector<16x256xf32> to vector<16x256xbf16>
    %c0_71 = arith.constant 0 : index
    %c0_72 = arith.constant 0 : index
    %c0_73 = arith.constant 0 : index
    %166 = vector.load %arg16[%c0_71, %c0_72, %c0_73] : memref<2x256x64xbf16, #tpu.memory_space<vmem>>, vector<1x256x64xbf16>
    %167 = vector.shape_cast %166 : vector<1x256x64xbf16> to vector<256x64xbf16>
    %cst_74 = arith.constant dense<0.000000e+00> : vector<16x64xf32>
    %168 = tpu.matmul %165, %167, %cst_74 {dimension_numbers = #tpu.dot_dimension_numbers<[1], [0], [0], [1], [0, 0, 1, 1], [], []>} : vector<16x256xbf16>, vector<256x64xbf16>, vector<16x64xf32> -> vector<16x64xf32>
    %c0_75 = arith.constant 0 : index
    %c0_76 = arith.constant 0 : index
    %c0_77 = arith.constant 0 : index
    %169 = vector.load %arg17[%c0_75, %c0_76, %c0_77] : memref<2x1x64xf32, #tpu.memory_space<vmem>>, vector<1x1x64xf32>
    %170 = vector.shape_cast %169 : vector<1x1x64xf32> to vector<1x64xf32>
    %171 = vector.broadcast %170 : vector<1x64xf32> to vector<16x64xf32>
    %172 = arith.addf %168, %171 : vector<16x64xf32>
    %173 = arith.addf %122, %172 : vector<16x64xf32>
    %c1 = arith.constant 1 : index
    %c0_78 = arith.constant 0 : index
    %c0_79 = arith.constant 0 : index
    %174 = vector.load %arg6[%c1, %c0_78, %c0_79] : memref<2x1x64xf32, #tpu.memory_space<vmem>>, vector<1x1x64xf32>
    %175 = vector.shape_cast %174 : vector<1x1x64xf32> to vector<1x64xf32>
    %c1_80 = arith.constant 1 : index
    %c0_81 = arith.constant 0 : index
    %c0_82 = arith.constant 0 : index
    %176 = vector.load %arg7[%c1_80, %c0_81, %c0_82] : memref<2x1x64xf32, #tpu.memory_space<vmem>>, vector<1x1x64xf32>
    %177 = vector.shape_cast %176 : vector<1x1x64xf32> to vector<1x64xf32>
    %cst_83 = arith.constant dense<0.000000e+00> : vector<16xf32>
    %178 = vector.multi_reduction <add>, %173, %cst_83 [1] : vector<16x64xf32> to vector<16xf32>
    %179 = vector.shape_cast %178 : vector<16xf32> to vector<16x1xf32>
    %180 = arith.mulf %173, %173 : vector<16x64xf32>
    %cst_84 = arith.constant dense<0.000000e+00> : vector<16xf32>
    %181 = vector.multi_reduction <add>, %180, %cst_84 [1] : vector<16x64xf32> to vector<16xf32>
    %182 = vector.shape_cast %181 : vector<16xf32> to vector<16x1xf32>
    %cst_85 = arith.constant 1.562500e-02 : f32
    %183 = vector.broadcast %cst_85 : f32 to vector<16x1xf32>
    %184 = arith.mulf %179, %183 : vector<16x1xf32>
    %cst_86 = arith.constant 1.562500e-02 : f32
    %185 = vector.broadcast %cst_86 : f32 to vector<16x1xf32>
    %186 = arith.mulf %182, %185 : vector<16x1xf32>
    %187 = arith.mulf %184, %184 : vector<16x1xf32>
    %188 = arith.subf %186, %187 : vector<16x1xf32>
    %189 = vector.broadcast %184 : vector<16x1xf32> to vector<16x64xf32>
    %190 = arith.subf %173, %189 : vector<16x64xf32>
    %cst_87 = arith.constant 9.99999974E-6 : f32
    %191 = vector.broadcast %cst_87 : f32 to vector<16x1xf32>
    %192 = arith.addf %188, %191 : vector<16x1xf32>
    %193 = math.rsqrt %192 : vector<16x1xf32>
    %194 = vector.broadcast %193 : vector<16x1xf32> to vector<16x64xf32>
    %195 = arith.mulf %190, %194 : vector<16x64xf32>
    %196 = vector.broadcast %175 : vector<1x64xf32> to vector<16x64xf32>
    %197 = arith.mulf %195, %196 : vector<16x64xf32>
    %198 = vector.broadcast %177 : vector<1x64xf32> to vector<16x64xf32>
    %199 = arith.addf %197, %198 : vector<16x64xf32>
    %200 = arith.truncf %199 : vector<16x64xf32> to vector<16x64xbf16>
    %c1_88 = arith.constant 1 : index
    %c0_89 = arith.constant 0 : index
    %c0_90 = arith.constant 0 : index
    %201 = vector.load %arg8[%c1_88, %c0_89, %c0_90] : memref<2x64x192xbf16, #tpu.memory_space<vmem>>, vector<1x64x192xbf16>
    %202 = vector.shape_cast %201 : vector<1x64x192xbf16> to vector<64x192xbf16>
    %cst_91 = arith.constant dense<0.000000e+00> : vector<16x192xf32>
    %203 = tpu.matmul %200, %202, %cst_91 {dimension_numbers = #tpu.dot_dimension_numbers<[1], [0], [0], [1], [0, 0, 1, 1], [], []>} : vector<16x64xbf16>, vector<64x192xbf16>, vector<16x192xf32> -> vector<16x192xf32>
    %c1_92 = arith.constant 1 : index
    %c0_93 = arith.constant 0 : index
    %c0_94 = arith.constant 0 : index
    %204 = vector.load %arg9[%c1_92, %c0_93, %c0_94] : memref<2x1x192xf32, #tpu.memory_space<vmem>>, vector<1x1x192xf32>
    %205 = vector.shape_cast %204 : vector<1x1x192xf32> to vector<1x192xf32>
    %206 = vector.broadcast %205 : vector<1x192xf32> to vector<16x192xf32>
    %207 = arith.addf %203, %206 : vector<16x192xf32>
    %208 = vector.extract_strided_slice %207 {offsets = [0, 0], sizes = [8, 64], strides = [1, 1]} : vector<16x192xf32> to vector<8x64xf32>
    %cst_95 = arith.constant 1.250000e-01 : f32
    %209 = vector.broadcast %cst_95 : f32 to vector<8x64xf32>
    %210 = arith.mulf %208, %209 : vector<8x64xf32>
    %211 = vector.extract_strided_slice %207 {offsets = [0, 64], sizes = [8, 64], strides = [1, 1]} : vector<16x192xf32> to vector<8x64xf32>
    %212 = vector.extract_strided_slice %207 {offsets = [0, 128], sizes = [8, 64], strides = [1, 1]} : vector<16x192xf32> to vector<8x64xf32>
    %213 = arith.truncf %210 : vector<8x64xf32> to vector<8x64xbf16>
    %214 = arith.truncf %211 : vector<8x64xf32> to vector<8x64xbf16>
    %cst_96 = arith.constant dense<0.000000e+00> : vector<8x8xf32>
    %215 = tpu.matmul %213, %214, %cst_96 {dimension_numbers = #tpu.dot_dimension_numbers<[1], [1], [0], [0], [0, 0, 1, 0], [], []>} : vector<8x64xbf16>, vector<8x64xbf16>, vector<8x8xf32> -> vector<8x8xf32>
    %216 = arith.addf %215, %34 : vector<8x8xf32>
    %cst_97 = arith.constant dense<0xFF800000> : vector<8xf32>
    %217 = vector.multi_reduction <maximumf>, %216, %cst_97 [1] : vector<8x8xf32> to vector<8xf32>
    %218 = vector.shape_cast %217 : vector<8xf32> to vector<8x1xf32>
    %219 = vector.broadcast %218 : vector<8x1xf32> to vector<8x8xf32>
    %220 = arith.subf %216, %219 : vector<8x8xf32>
    %221 = math.exp %220 : vector<8x8xf32>
    %cst_98 = arith.constant dense<0.000000e+00> : vector<8xf32>
    %222 = vector.multi_reduction <add>, %221, %cst_98 [1] : vector<8x8xf32> to vector<8xf32>
    %223 = vector.shape_cast %222 : vector<8xf32> to vector<8x1xf32>
    %224 = tpu.reciprocal %223 {approx = true} : vector<8x1xf32> -> vector<8x1xf32>
    %225 = vector.broadcast %224 : vector<8x1xf32> to vector<8x8xf32>
    %226 = arith.mulf %221, %225 : vector<8x8xf32>
    %227 = arith.truncf %226 : vector<8x8xf32> to vector<8x8xbf16>
    %228 = arith.truncf %212 : vector<8x64xf32> to vector<8x64xbf16>
    %cst_99 = arith.constant dense<0.000000e+00> : vector<8x64xf32>
    %229 = tpu.matmul %227, %228, %cst_99 {dimension_numbers = #tpu.dot_dimension_numbers<[1], [0], [0], [1], [0, 0, 1, 1], [], []>} : vector<8x8xbf16>, vector<8x64xbf16>, vector<8x64xf32> -> vector<8x64xf32>
    %230 = vector.extract_strided_slice %207 {offsets = [8, 0], sizes = [8, 64], strides = [1, 1]} : vector<16x192xf32> to vector<8x64xf32>
    %cst_100 = arith.constant 1.250000e-01 : f32
    %231 = vector.broadcast %cst_100 : f32 to vector<8x64xf32>
    %232 = arith.mulf %230, %231 : vector<8x64xf32>
    %233 = vector.extract_strided_slice %207 {offsets = [8, 64], sizes = [8, 64], strides = [1, 1]} : vector<16x192xf32> to vector<8x64xf32>
    %234 = vector.extract_strided_slice %207 {offsets = [8, 128], sizes = [8, 64], strides = [1, 1]} : vector<16x192xf32> to vector<8x64xf32>
    %235 = arith.truncf %232 : vector<8x64xf32> to vector<8x64xbf16>
    %236 = arith.truncf %233 : vector<8x64xf32> to vector<8x64xbf16>
    %cst_101 = arith.constant dense<0.000000e+00> : vector<8x8xf32>
    %237 = tpu.matmul %235, %236, %cst_101 {dimension_numbers = #tpu.dot_dimension_numbers<[1], [1], [0], [0], [0, 0, 1, 0], [], []>} : vector<8x64xbf16>, vector<8x64xbf16>, vector<8x8xf32> -> vector<8x8xf32>
    %238 = arith.addf %237, %34 : vector<8x8xf32>
    %cst_102 = arith.constant dense<0xFF800000> : vector<8xf32>
    %239 = vector.multi_reduction <maximumf>, %238, %cst_102 [1] : vector<8x8xf32> to vector<8xf32>
    %240 = vector.shape_cast %239 : vector<8xf32> to vector<8x1xf32>
    %241 = vector.broadcast %240 : vector<8x1xf32> to vector<8x8xf32>
    %242 = arith.subf %238, %241 : vector<8x8xf32>
    %243 = math.exp %242 : vector<8x8xf32>
    %cst_103 = arith.constant dense<0.000000e+00> : vector<8xf32>
    %244 = vector.multi_reduction <add>, %243, %cst_103 [1] : vector<8x8xf32> to vector<8xf32>
    %245 = vector.shape_cast %244 : vector<8xf32> to vector<8x1xf32>
    %246 = tpu.reciprocal %245 {approx = true} : vector<8x1xf32> -> vector<8x1xf32>
    %247 = vector.broadcast %246 : vector<8x1xf32> to vector<8x8xf32>
    %248 = arith.mulf %243, %247 : vector<8x8xf32>
    %249 = arith.truncf %248 : vector<8x8xf32> to vector<8x8xbf16>
    %250 = arith.truncf %234 : vector<8x64xf32> to vector<8x64xbf16>
    %cst_104 = arith.constant dense<0.000000e+00> : vector<8x64xf32>
    %251 = tpu.matmul %249, %250, %cst_104 {dimension_numbers = #tpu.dot_dimension_numbers<[1], [0], [0], [1], [0, 0, 1, 1], [], []>} : vector<8x8xbf16>, vector<8x64xbf16>, vector<8x64xf32> -> vector<8x64xf32>
    %252 = tpu.concatenate %229, %251 in 0 : vector<8x64xf32>, vector<8x64xf32> -> vector<16x64xf32>
    %253 = arith.truncf %252 : vector<16x64xf32> to vector<16x64xbf16>
    %c1_105 = arith.constant 1 : index
    %c0_106 = arith.constant 0 : index
    %c0_107 = arith.constant 0 : index
    %254 = vector.load %arg10[%c1_105, %c0_106, %c0_107] : memref<2x64x64xbf16, #tpu.memory_space<vmem>>, vector<1x64x64xbf16>
    %255 = vector.shape_cast %254 : vector<1x64x64xbf16> to vector<64x64xbf16>
    %cst_108 = arith.constant dense<0.000000e+00> : vector<16x64xf32>
    %256 = tpu.matmul %253, %255, %cst_108 {dimension_numbers = #tpu.dot_dimension_numbers<[1], [0], [0], [1], [0, 0, 1, 1], [], []>} : vector<16x64xbf16>, vector<64x64xbf16>, vector<16x64xf32> -> vector<16x64xf32>
    %257 = arith.addf %173, %256 : vector<16x64xf32>
    %c1_109 = arith.constant 1 : index
    %c0_110 = arith.constant 0 : index
    %c0_111 = arith.constant 0 : index
    %258 = vector.load %arg11[%c1_109, %c0_110, %c0_111] : memref<2x1x64xf32, #tpu.memory_space<vmem>>, vector<1x1x64xf32>
    %259 = vector.shape_cast %258 : vector<1x1x64xf32> to vector<1x64xf32>
    %260 = vector.broadcast %259 : vector<1x64xf32> to vector<16x64xf32>
    %261 = arith.addf %257, %260 : vector<16x64xf32>
    %c1_112 = arith.constant 1 : index
    %c0_113 = arith.constant 0 : index
    %c0_114 = arith.constant 0 : index
    %262 = vector.load %arg12[%c1_112, %c0_113, %c0_114] : memref<2x1x64xf32, #tpu.memory_space<vmem>>, vector<1x1x64xf32>
    %263 = vector.shape_cast %262 : vector<1x1x64xf32> to vector<1x64xf32>
    %c1_115 = arith.constant 1 : index
    %c0_116 = arith.constant 0 : index
    %c0_117 = arith.constant 0 : index
    %264 = vector.load %arg13[%c1_115, %c0_116, %c0_117] : memref<2x1x64xf32, #tpu.memory_space<vmem>>, vector<1x1x64xf32>
    %265 = vector.shape_cast %264 : vector<1x1x64xf32> to vector<1x64xf32>
    %cst_118 = arith.constant dense<0.000000e+00> : vector<16xf32>
    %266 = vector.multi_reduction <add>, %261, %cst_118 [1] : vector<16x64xf32> to vector<16xf32>
    %267 = vector.shape_cast %266 : vector<16xf32> to vector<16x1xf32>
    %268 = arith.mulf %261, %261 : vector<16x64xf32>
    %cst_119 = arith.constant dense<0.000000e+00> : vector<16xf32>
    %269 = vector.multi_reduction <add>, %268, %cst_119 [1] : vector<16x64xf32> to vector<16xf32>
    %270 = vector.shape_cast %269 : vector<16xf32> to vector<16x1xf32>
    %cst_120 = arith.constant 1.562500e-02 : f32
    %271 = vector.broadcast %cst_120 : f32 to vector<16x1xf32>
    %272 = arith.mulf %267, %271 : vector<16x1xf32>
    %cst_121 = arith.constant 1.562500e-02 : f32
    %273 = vector.broadcast %cst_121 : f32 to vector<16x1xf32>
    %274 = arith.mulf %270, %273 : vector<16x1xf32>
    %275 = arith.mulf %272, %272 : vector<16x1xf32>
    %276 = arith.subf %274, %275 : vector<16x1xf32>
    %277 = vector.broadcast %272 : vector<16x1xf32> to vector<16x64xf32>
    %278 = arith.subf %261, %277 : vector<16x64xf32>
    %cst_122 = arith.constant 9.99999974E-6 : f32
    %279 = vector.broadcast %cst_122 : f32 to vector<16x1xf32>
    %280 = arith.addf %276, %279 : vector<16x1xf32>
    %281 = math.rsqrt %280 : vector<16x1xf32>
    %282 = vector.broadcast %281 : vector<16x1xf32> to vector<16x64xf32>
    %283 = arith.mulf %278, %282 : vector<16x64xf32>
    %284 = vector.broadcast %263 : vector<1x64xf32> to vector<16x64xf32>
    %285 = arith.mulf %283, %284 : vector<16x64xf32>
    %286 = vector.broadcast %265 : vector<1x64xf32> to vector<16x64xf32>
    %287 = arith.addf %285, %286 : vector<16x64xf32>
    %288 = arith.truncf %287 : vector<16x64xf32> to vector<16x64xbf16>
    %c1_123 = arith.constant 1 : index
    %c0_124 = arith.constant 0 : index
    %c0_125 = arith.constant 0 : index
    %289 = vector.load %arg14[%c1_123, %c0_124, %c0_125] : memref<2x64x256xbf16, #tpu.memory_space<vmem>>, vector<1x64x256xbf16>
    %290 = vector.shape_cast %289 : vector<1x64x256xbf16> to vector<64x256xbf16>
    %cst_126 = arith.constant dense<0.000000e+00> : vector<16x256xf32>
    %291 = tpu.matmul %288, %290, %cst_126 {dimension_numbers = #tpu.dot_dimension_numbers<[1], [0], [0], [1], [0, 0, 1, 1], [], []>} : vector<16x64xbf16>, vector<64x256xbf16>, vector<16x256xf32> -> vector<16x256xf32>
    %c1_127 = arith.constant 1 : index
    %c0_128 = arith.constant 0 : index
    %c0_129 = arith.constant 0 : index
    %292 = vector.load %arg15[%c1_127, %c0_128, %c0_129] : memref<2x1x256xf32, #tpu.memory_space<vmem>>, vector<1x1x256xf32>
    %293 = vector.shape_cast %292 : vector<1x1x256xf32> to vector<1x256xf32>
    %294 = vector.broadcast %293 : vector<1x256xf32> to vector<16x256xf32>
    %295 = arith.addf %291, %294 : vector<16x256xf32>
    %cst_130 = arith.constant 1.702000e+00 : f32
    %296 = vector.broadcast %cst_130 : f32 to vector<16x256xf32>
    %297 = arith.mulf %296, %295 : vector<16x256xf32>
    %298 = arith.negf %297 : vector<16x256xf32>
    %299 = math.exp %298 : vector<16x256xf32>
    %cst_131 = arith.constant 1.000000e+00 : f32
    %300 = vector.broadcast %cst_131 : f32 to vector<16x256xf32>
    %301 = arith.addf %300, %299 : vector<16x256xf32>
    %302 = arith.divf %300, %301 : vector<16x256xf32>
    %303 = arith.mulf %295, %302 : vector<16x256xf32>
    %304 = arith.truncf %303 : vector<16x256xf32> to vector<16x256xbf16>
    %c1_132 = arith.constant 1 : index
    %c0_133 = arith.constant 0 : index
    %c0_134 = arith.constant 0 : index
    %305 = vector.load %arg16[%c1_132, %c0_133, %c0_134] : memref<2x256x64xbf16, #tpu.memory_space<vmem>>, vector<1x256x64xbf16>
    %306 = vector.shape_cast %305 : vector<1x256x64xbf16> to vector<256x64xbf16>
    %cst_135 = arith.constant dense<0.000000e+00> : vector<16x64xf32>
    %307 = tpu.matmul %304, %306, %cst_135 {dimension_numbers = #tpu.dot_dimension_numbers<[1], [0], [0], [1], [0, 0, 1, 1], [], []>} : vector<16x256xbf16>, vector<256x64xbf16>, vector<16x64xf32> -> vector<16x64xf32>
    %c1_136 = arith.constant 1 : index
    %c0_137 = arith.constant 0 : index
    %c0_138 = arith.constant 0 : index
    %308 = vector.load %arg17[%c1_136, %c0_137, %c0_138] : memref<2x1x64xf32, #tpu.memory_space<vmem>>, vector<1x1x64xf32>
    %309 = vector.shape_cast %308 : vector<1x1x64xf32> to vector<1x64xf32>
    %310 = vector.broadcast %309 : vector<1x64xf32> to vector<16x64xf32>
    %311 = arith.addf %307, %310 : vector<16x64xf32>
    %312 = arith.addf %261, %311 : vector<16x64xf32>
    %313 = vector.extract_strided_slice %312 {offsets = [0, 0], sizes = [1, 64], strides = [1, 1]} : vector<16x64xf32> to vector<1x64xf32>
    %314 = vector.extract_strided_slice %312 {offsets = [8, 0], sizes = [1, 64], strides = [1, 1]} : vector<16x64xf32> to vector<1x64xf32>
    %315 = tpu.concatenate %313, %314 in 0 : vector<1x64xf32>, vector<1x64xf32> -> vector<2x64xf32>
    %c0_139 = arith.constant 0 : index
    %c0_140 = arith.constant 0 : index
    %316 = vector.load %arg18[%c0_139, %c0_140] : memref<1x64xf32, #tpu.memory_space<vmem>>, vector<1x64xf32>
    %c0_141 = arith.constant 0 : index
    %c0_142 = arith.constant 0 : index
    %317 = vector.load %arg19[%c0_141, %c0_142] : memref<1x64xf32, #tpu.memory_space<vmem>>, vector<1x64xf32>
    %cst_143 = arith.constant dense<0.000000e+00> : vector<2xf32>
    %318 = vector.multi_reduction <add>, %315, %cst_143 [1] : vector<2x64xf32> to vector<2xf32>
    %319 = vector.shape_cast %318 : vector<2xf32> to vector<2x1xf32>
    %320 = arith.mulf %315, %315 : vector<2x64xf32>
    %cst_144 = arith.constant dense<0.000000e+00> : vector<2xf32>
    %321 = vector.multi_reduction <add>, %320, %cst_144 [1] : vector<2x64xf32> to vector<2xf32>
    %322 = vector.shape_cast %321 : vector<2xf32> to vector<2x1xf32>
    %cst_145 = arith.constant 1.562500e-02 : f32
    %323 = vector.broadcast %cst_145 : f32 to vector<2x1xf32>
    %324 = arith.mulf %319, %323 : vector<2x1xf32>
    %cst_146 = arith.constant 1.562500e-02 : f32
    %325 = vector.broadcast %cst_146 : f32 to vector<2x1xf32>
    %326 = arith.mulf %322, %325 : vector<2x1xf32>
    %327 = arith.mulf %324, %324 : vector<2x1xf32>
    %328 = arith.subf %326, %327 : vector<2x1xf32>
    %329 = vector.broadcast %324 : vector<2x1xf32> to vector<2x64xf32>
    %330 = arith.subf %315, %329 : vector<2x64xf32>
    %cst_147 = arith.constant 9.99999974E-6 : f32
    %331 = vector.broadcast %cst_147 : f32 to vector<2x1xf32>
    %332 = arith.addf %328, %331 : vector<2x1xf32>
    %333 = math.rsqrt %332 : vector<2x1xf32>
    %334 = vector.broadcast %333 : vector<2x1xf32> to vector<2x64xf32>
    %335 = arith.mulf %330, %334 : vector<2x64xf32>
    %336 = vector.broadcast %316 : vector<1x64xf32> to vector<2x64xf32>
    %337 = arith.mulf %335, %336 : vector<2x64xf32>
    %338 = vector.broadcast %317 : vector<1x64xf32> to vector<2x64xf32>
    %339 = arith.addf %337, %338 : vector<2x64xf32>
    %340 = arith.truncf %339 : vector<2x64xf32> to vector<2x64xbf16>
    %c0_148 = arith.constant 0 : index
    %c0_149 = arith.constant 0 : index
    %341 = vector.load %arg20[%c0_148, %c0_149] : memref<64x32xbf16, #tpu.memory_space<vmem>>, vector<64x32xbf16>
    %cst_150 = arith.constant dense<0.000000e+00> : vector<2x32xf32>
    %342 = tpu.matmul %340, %341, %cst_150 {dimension_numbers = #tpu.dot_dimension_numbers<[1], [0], [0], [1], [0, 0, 1, 1], [], []>} : vector<2x64xbf16>, vector<64x32xbf16>, vector<2x32xf32> -> vector<2x32xf32>
    %c0_151 = arith.constant 0 : index
    %c0_152 = arith.constant 0 : index
    %343 = vector.load %arg21[%c0_151, %c0_152] : memref<2x32xf32, #tpu.memory_space<vmem>>, vector<2x32xf32>
    tpu.vector_store %arg21[%c0_151, %c0_152], %342 {strides = array<i32>} : memref<2x32xf32, #tpu.memory_space<vmem>>, vector<2x32xf32>,
    return
  }
  func.func @transform_0(%arg0: i32) -> (i32, i32) {
    %c0_i32 = arith.constant 0 : i32
    %c0_i32_0 = arith.constant 0 : i32
    return %arg0, %c0_i32 : i32, i32
  }
  func.func @transform_1(%arg0: i32) -> (i32, i32) {
    %c0_i32 = arith.constant 0 : i32
    %c0_i32_0 = arith.constant 0 : i32
    %c0_i32_1 = arith.constant 0 : i32
    return %c0_i32, %c0_i32_0 : i32, i32
  }
  func.func @transform_2(%arg0: i32) -> (i32, i32) {
    %c0_i32 = arith.constant 0 : i32
    %c0_i32_0 = arith.constant 0 : i32
    %c0_i32_1 = arith.constant 0 : i32
    return %c0_i32, %c0_i32_0 : i32, i32
  }
  func.func @transform_3(%arg0: i32) -> (i32, i32) {
    %c0_i32 = arith.constant 0 : i32
    %c0_i32_0 = arith.constant 0 : i32
    %c0_i32_1 = arith.constant 0 : i32
    return %c0_i32, %c0_i32_0 : i32, i32
  }
  func.func @transform_4(%arg0: i32) -> (i32, i32) {
    %c0_i32 = arith.constant 0 : i32
    %c0_i32_0 = arith.constant 0 : i32
    %c0_i32_1 = arith.constant 0 : i32
    return %c0_i32, %c0_i32_0 : i32, i32
  }
  func.func @transform_5(%arg0: i32) -> (i32, i32, i32) {
    %c0_i32 = arith.constant 0 : i32
    %c0_i32_0 = arith.constant 0 : i32
    %c0_i32_1 = arith.constant 0 : i32
    %c0_i32_2 = arith.constant 0 : i32
    return %c0_i32, %c0_i32_0, %c0_i32_1 : i32, i32, i32
  }
  func.func @transform_6(%arg0: i32) -> (i32, i32, i32) {
    %c0_i32 = arith.constant 0 : i32
    %c0_i32_0 = arith.constant 0 : i32
    %c0_i32_1 = arith.constant 0 : i32
    %c0_i32_2 = arith.constant 0 : i32
    return %c0_i32, %c0_i32_0, %c0_i32_1 : i32, i32, i32
  }
  func.func @transform_7(%arg0: i32) -> (i32, i32, i32) {
    %c0_i32 = arith.constant 0 : i32
    %c0_i32_0 = arith.constant 0 : i32
    %c0_i32_1 = arith.constant 0 : i32
    %c0_i32_2 = arith.constant 0 : i32
    return %c0_i32, %c0_i32_0, %c0_i32_1 : i32, i32, i32
  }
  func.func @transform_8(%arg0: i32) -> (i32, i32, i32) {
    %c0_i32 = arith.constant 0 : i32
    %c0_i32_0 = arith.constant 0 : i32
    %c0_i32_1 = arith.constant 0 : i32
    %c0_i32_2 = arith.constant 0 : i32
    return %c0_i32, %c0_i32_0, %c0_i32_1 : i32, i32, i32
  }
  func.func @transform_9(%arg0: i32) -> (i32, i32, i32) {
    %c0_i32 = arith.constant 0 : i32
    %c0_i32_0 = arith.constant 0 : i32
    %c0_i32_1 = arith.constant 0 : i32
    %c0_i32_2 = arith.constant 0 : i32
    return %c0_i32, %c0_i32_0, %c0_i32_1 : i32, i32, i32
  }
  func.func @transform_10(%arg0: i32) -> (i32, i32, i32) {
    %c0_i32 = arith.constant 0 : i32
    %c0_i32_0 = arith.constant 0 : i32
    %c0_i32_1 = arith.constant 0 : i32
    %c0_i32_2 = arith.constant 0 : i32
    return %c0_i32, %c0_i32_0, %c0_i32_1 : i32, i32, i32
  }
  func.func @transform_11(%arg0: i32) -> (i32, i32, i32) {
    %c0_i32 = arith.constant 0 : i32
    %c0_i32_0 = arith.constant 0 : i32
    %c0_i32_1 = arith.constant 0 : i32
    %c0_i32_2 = arith.constant 0 : i32
    return %c0_i32, %c0_i32_0, %c0_i32_1 : i32, i32, i32
  }
  func.func @transform_12(%arg0: i32) -> (i32, i32, i32) {
    %c0_i32 = arith.constant 0 : i32
    %c0_i32_0 = arith.constant 0 : i32
    %c0_i32_1 = arith.constant 0 : i32
    %c0_i32_2 = arith.constant 0 : i32
    return %c0_i32, %c0_i32_0, %c0_i32_1 : i32, i32, i32
  }
  func.func @transform_13(%arg0: i32) -> (i32, i32, i32) {
    %c0_i32 = arith.constant 0 : i32
    %c0_i32_0 = arith.constant 0 : i32
    %c0_i32_1 = arith.constant 0 : i32
    %c0_i32_2 = arith.constant 0 : i32
    return %c0_i32, %c0_i32_0, %c0_i32_1 : i32, i32, i32
  }
  func.func @transform_14(%arg0: i32) -> (i32, i32, i32) {
    %c0_i32 = arith.constant 0 : i32
    %c0_i32_0 = arith.constant 0 : i32
    %c0_i32_1 = arith.constant 0 : i32
    %c0_i32_2 = arith.constant 0 : i32
    return %c0_i32, %c0_i32_0, %c0_i32_1 : i32, i32, i32
  }
  func.func @transform_15(%arg0: i32) -> (i32, i32, i32) {
    %c0_i32 = arith.constant 0 : i32
    %c0_i32_0 = arith.constant 0 : i32
    %c0_i32_1 = arith.constant 0 : i32
    %c0_i32_2 = arith.constant 0 : i32
    return %c0_i32, %c0_i32_0, %c0_i32_1 : i32, i32, i32
  }
  func.func @transform_16(%arg0: i32) -> (i32, i32, i32) {
    %c0_i32 = arith.constant 0 : i32
    %c0_i32_0 = arith.constant 0 : i32
    %c0_i32_1 = arith.constant 0 : i32
    %c0_i32_2 = arith.constant 0 : i32
    return %c0_i32, %c0_i32_0, %c0_i32_1 : i32, i32, i32
  }
  func.func @transform_17(%arg0: i32) -> (i32, i32) {
    %c0_i32 = arith.constant 0 : i32
    %c0_i32_0 = arith.constant 0 : i32
    %c0_i32_1 = arith.constant 0 : i32
    return %c0_i32, %c0_i32_0 : i32, i32
  }
  func.func @transform_18(%arg0: i32) -> (i32, i32) {
    %c0_i32 = arith.constant 0 : i32
    %c0_i32_0 = arith.constant 0 : i32
    %c0_i32_1 = arith.constant 0 : i32
    return %c0_i32, %c0_i32_0 : i32, i32
  }
  func.func @transform_19(%arg0: i32) -> (i32, i32) {
    %c0_i32 = arith.constant 0 : i32
    %c0_i32_0 = arith.constant 0 : i32
    %c0_i32_1 = arith.constant 0 : i32
    return %c0_i32, %c0_i32_0 : i32, i32
  }
  func.func @transform_20(%arg0: i32) -> (i32, i32) {
    %c0_i32 = arith.constant 0 : i32
    %c0_i32_0 = arith.constant 0 : i32
    return %arg0, %c0_i32 : i32, i32
  }
}

module attributes {stable_mosaic.version = 11 : i64} {
  func.func @_clip_head_kernel(%arg0: memref<2x32xf32, #tpu.memory_space<vmem>>, %arg1: memref<2x32xf32, #tpu.memory_space<vmem>>, %arg2: memref<1x1xf32, #tpu.memory_space<smem>>, %arg3: memref<2x2xf32, #tpu.memory_space<vmem>>) attributes {dimension_semantics = [], scalar_prefetch = 0 : i64, scratch_operands = 0 : i64, tpu.core_type = #tpu.core_type<tc>} {
    %c0 = arith.constant 0 : index
    %c0_0 = arith.constant 0 : index
    %0 = vector.load %arg0[%c0, %c0_0] : memref<2x32xf32, #tpu.memory_space<vmem>>, vector<2x32xf32>
    %c0_1 = arith.constant 0 : index
    %c0_2 = arith.constant 0 : index
    %1 = vector.load %arg1[%c0_1, %c0_2] : memref<2x32xf32, #tpu.memory_space<vmem>>, vector<2x32xf32>
    %2 = arith.mulf %0, %0 : vector<2x32xf32>
    %cst = arith.constant dense<0.000000e+00> : vector<2xf32>
    %3 = vector.multi_reduction <add>, %2, %cst [1] : vector<2x32xf32> to vector<2xf32>
    %4 = vector.shape_cast %3 : vector<2xf32> to vector<2x1xf32>
    %5 = math.rsqrt %4 : vector<2x1xf32>
    %6 = vector.broadcast %5 : vector<2x1xf32> to vector<2x32xf32>
    %7 = arith.mulf %0, %6 : vector<2x32xf32>
    %8 = arith.mulf %1, %1 : vector<2x32xf32>
    %cst_3 = arith.constant dense<0.000000e+00> : vector<2xf32>
    %9 = vector.multi_reduction <add>, %8, %cst_3 [1] : vector<2x32xf32> to vector<2xf32>
    %10 = vector.shape_cast %9 : vector<2xf32> to vector<2x1xf32>
    %11 = math.rsqrt %10 : vector<2x1xf32>
    %12 = vector.broadcast %11 : vector<2x1xf32> to vector<2x32xf32>
    %13 = arith.mulf %1, %12 : vector<2x32xf32>
    %c0_4 = arith.constant 0 : index
    %c0_5 = arith.constant 0 : index
    %14 = memref.load %arg2[%c0_4, %c0_5] : memref<1x1xf32, #tpu.memory_space<smem>>
    %15 = math.exp %14 : f32
    %cst_6 = arith.constant dense<0.000000e+00> : vector<2x2xf32>
    %16 = tpu.matmul %7, %13, %cst_6 {dimension_numbers = #tpu.dot_dimension_numbers<[1], [1], [0], [0], [0, 0, 1, 0], [], []>} : vector<2x32xf32>, vector<2x32xf32>, vector<2x2xf32> -> vector<2x2xf32>
    %17 = vector.broadcast %15 : f32 to vector<2x2xf32>
    %18 = arith.mulf %17, %16 : vector<2x2xf32>
    %c0_7 = arith.constant 0 : index
    %c0_8 = arith.constant 0 : index
    %19 = vector.load %arg3[%c0_7, %c0_8] : memref<2x2xf32, #tpu.memory_space<vmem>>, vector<2x2xf32>
    tpu.vector_store %arg3[%c0_7, %c0_8], %18 {strides = array<i32>} : memref<2x2xf32, #tpu.memory_space<vmem>>, vector<2x2xf32>,
    return
  }
}

module attributes {stable_mosaic.version = 11 : i64} {
  func.func @_text_tower_kernel(%arg0: i32, %arg1: memref<2xi32, #tpu.memory_space<smem>>, %arg2: memref<16x64xf32, #tpu.memory_space<vmem>>, %arg3: memref<16x64xf32, #tpu.memory_space<vmem>>, %arg4: memref<2x1x64xf32, #tpu.memory_space<vmem>>, %arg5: memref<2x1x64xf32, #tpu.memory_space<vmem>>, %arg6: memref<2x64x192xbf16, #tpu.memory_space<vmem>>, %arg7: memref<2x1x192xf32, #tpu.memory_space<vmem>>, %arg8: memref<2x64x64xbf16, #tpu.memory_space<vmem>>, %arg9: memref<2x1x64xf32, #tpu.memory_space<vmem>>, %arg10: memref<2x1x64xf32, #tpu.memory_space<vmem>>, %arg11: memref<2x1x64xf32, #tpu.memory_space<vmem>>, %arg12: memref<2x64x256xbf16, #tpu.memory_space<vmem>>, %arg13: memref<2x1x256xf32, #tpu.memory_space<vmem>>, %arg14: memref<2x256x64xbf16, #tpu.memory_space<vmem>>, %arg15: memref<2x1x64xf32, #tpu.memory_space<vmem>>, %arg16: memref<1x64xf32, #tpu.memory_space<vmem>>, %arg17: memref<1x64xf32, #tpu.memory_space<vmem>>, %arg18: memref<64x32xbf16, #tpu.memory_space<vmem>>, %arg19: memref<2x32xf32, #tpu.memory_space<vmem>>, %arg20: memref<16x64xf32, #tpu.memory_space<vmem>>) attributes {dimension_semantics = [#tpu.dimension_semantics<parallel>], iteration_bounds = array<i64: 1>, scalar_prefetch = 1 : i64, scratch_operands = 1 : i64, tpu.core_type = #tpu.core_type<tc>, window_params = [{transform_indices = @transform_0, window_bounds = array<i64: 16, 64>}, {pipeline_mode = #tpu.pipeline_mode<synchronous>, transform_indices = @transform_1, window_bounds = array<i64: 16, 64>}, {pipeline_mode = #tpu.pipeline_mode<synchronous>, transform_indices = @transform_2, window_bounds = array<i64: 2, 1, 64>}, {pipeline_mode = #tpu.pipeline_mode<synchronous>, transform_indices = @transform_3, window_bounds = array<i64: 2, 1, 64>}, {pipeline_mode = #tpu.pipeline_mode<synchronous>, transform_indices = @transform_4, window_bounds = array<i64: 2, 64, 192>}, {pipeline_mode = #tpu.pipeline_mode<synchronous>, transform_indices = @transform_5, window_bounds = array<i64: 2, 1, 192>}, {pipeline_mode = #tpu.pipeline_mode<synchronous>, transform_indices = @transform_6, window_bounds = array<i64: 2, 64, 64>}, {pipeline_mode = #tpu.pipeline_mode<synchronous>, transform_indices = @transform_7, window_bounds = array<i64: 2, 1, 64>}, {pipeline_mode = #tpu.pipeline_mode<synchronous>, transform_indices = @transform_8, window_bounds = array<i64: 2, 1, 64>}, {pipeline_mode = #tpu.pipeline_mode<synchronous>, transform_indices = @transform_9, window_bounds = array<i64: 2, 1, 64>}, {pipeline_mode = #tpu.pipeline_mode<synchronous>, transform_indices = @transform_10, window_bounds = array<i64: 2, 64, 256>}, {pipeline_mode = #tpu.pipeline_mode<synchronous>, transform_indices = @transform_11, window_bounds = array<i64: 2, 1, 256>}, {pipeline_mode = #tpu.pipeline_mode<synchronous>, transform_indices = @transform_12, window_bounds = array<i64: 2, 256, 64>}, {pipeline_mode = #tpu.pipeline_mode<synchronous>, transform_indices = @transform_13, window_bounds = array<i64: 2, 1, 64>}, {pipeline_mode = #tpu.pipeline_mode<synchronous>, transform_indices = @transform_14, window_bounds = array<i64: 1, 64>}, {pipeline_mode = #tpu.pipeline_mode<synchronous>, transform_indices = @transform_15, window_bounds = array<i64: 1, 64>}, {pipeline_mode = #tpu.pipeline_mode<synchronous>, transform_indices = @transform_16, window_bounds = array<i64: 64, 32>}, {transform_indices = @transform_17, window_bounds = array<i64: 2, 32>}]} {
    %c0 = arith.constant 0 : index
    %c0_0 = arith.constant 0 : index
    %0 = vector.load %arg2[%c0, %c0_0] : memref<16x64xf32, #tpu.memory_space<vmem>>, vector<16x64xf32>
    %c0_1 = arith.constant 0 : index
    %c0_2 = arith.constant 0 : index
    %1 = vector.load %arg3[%c0_1, %c0_2] : memref<16x64xf32, #tpu.memory_space<vmem>>, vector<16x64xf32>
    %2 = arith.addf %0, %1 : vector<16x64xf32>
    %3 = tpu.iota {dimensions = array<i32: 0>} : vector<8x8xi32>
    %4 = tpu.iota {dimensions = array<i32: 1>} : vector<8x8xi32>
    %5 = arith.cmpi sgt, %4, %3 : vector<8x8xi32>
    %cst = arith.constant -1.000000e+30 : f32
    %cst_3 = arith.constant 0.000000e+00 : f32
    %6 = vector.broadcast %cst : f32 to vector<8x8xf32>
    %7 = vector.broadcast %cst_3 : f32 to vector<8x8xf32>
    %8 = arith.select %5, %6, %7 : vector<8x8xi1>, vector<8x8xf32>
    %c0_4 = arith.constant 0 : index
    %c0_5 = arith.constant 0 : index
    %c0_6 = arith.constant 0 : index
    %9 = vector.load %arg4[%c0_4, %c0_5, %c0_6] : memref<2x1x64xf32, #tpu.memory_space<vmem>>, vector<1x1x64xf32>
    %10 = vector.shape_cast %9 : vector<1x1x64xf32> to vector<1x64xf32>
    %c0_7 = arith.constant 0 : index
    %c0_8 = arith.constant 0 : index
    %c0_9 = arith.constant 0 : index
    %11 = vector.load %arg5[%c0_7, %c0_8, %c0_9] : memref<2x1x64xf32, #tpu.memory_space<vmem>>, vector<1x1x64xf32>
    %12 = vector.shape_cast %11 : vector<1x1x64xf32> to vector<1x64xf32>
    %cst_10 = arith.constant dense<0.000000e+00> : vector<16xf32>
    %13 = vector.multi_reduction <add>, %2, %cst_10 [1] : vector<16x64xf32> to vector<16xf32>
    %14 = vector.shape_cast %13 : vector<16xf32> to vector<16x1xf32>
    %15 = arith.mulf %2, %2 : vector<16x64xf32>
    %cst_11 = arith.constant dense<0.000000e+00> : vector<16xf32>
    %16 = vector.multi_reduction <add>, %15, %cst_11 [1] : vector<16x64xf32> to vector<16xf32>
    %17 = vector.shape_cast %16 : vector<16xf32> to vector<16x1xf32>
    %cst_12 = arith.constant 1.562500e-02 : f32
    %18 = vector.broadcast %cst_12 : f32 to vector<16x1xf32>
    %19 = arith.mulf %14, %18 : vector<16x1xf32>
    %cst_13 = arith.constant 1.562500e-02 : f32
    %20 = vector.broadcast %cst_13 : f32 to vector<16x1xf32>
    %21 = arith.mulf %17, %20 : vector<16x1xf32>
    %22 = arith.mulf %19, %19 : vector<16x1xf32>
    %23 = arith.subf %21, %22 : vector<16x1xf32>
    %24 = vector.broadcast %19 : vector<16x1xf32> to vector<16x64xf32>
    %25 = arith.subf %2, %24 : vector<16x64xf32>
    %cst_14 = arith.constant 9.99999974E-6 : f32
    %26 = vector.broadcast %cst_14 : f32 to vector<16x1xf32>
    %27 = arith.addf %23, %26 : vector<16x1xf32>
    %28 = math.rsqrt %27 : vector<16x1xf32>
    %29 = vector.broadcast %28 : vector<16x1xf32> to vector<16x64xf32>
    %30 = arith.mulf %25, %29 : vector<16x64xf32>
    %31 = vector.broadcast %10 : vector<1x64xf32> to vector<16x64xf32>
    %32 = arith.mulf %30, %31 : vector<16x64xf32>
    %33 = vector.broadcast %12 : vector<1x64xf32> to vector<16x64xf32>
    %34 = arith.addf %32, %33 : vector<16x64xf32>
    %35 = arith.truncf %34 : vector<16x64xf32> to vector<16x64xbf16>
    %c0_15 = arith.constant 0 : index
    %c0_16 = arith.constant 0 : index
    %c0_17 = arith.constant 0 : index
    %36 = vector.load %arg6[%c0_15, %c0_16, %c0_17] : memref<2x64x192xbf16, #tpu.memory_space<vmem>>, vector<1x64x192xbf16>
    %37 = vector.shape_cast %36 : vector<1x64x192xbf16> to vector<64x192xbf16>
    %cst_18 = arith.constant dense<0.000000e+00> : vector<16x192xf32>
    %38 = tpu.matmul %35, %37, %cst_18 {dimension_numbers = #tpu.dot_dimension_numbers<[1], [0], [0], [1], [0, 0, 1, 1], [], []>} : vector<16x64xbf16>, vector<64x192xbf16>, vector<16x192xf32> -> vector<16x192xf32>
    %c0_19 = arith.constant 0 : index
    %c0_20 = arith.constant 0 : index
    %c0_21 = arith.constant 0 : index
    %39 = vector.load %arg7[%c0_19, %c0_20, %c0_21] : memref<2x1x192xf32, #tpu.memory_space<vmem>>, vector<1x1x192xf32>
    %40 = vector.shape_cast %39 : vector<1x1x192xf32> to vector<1x192xf32>
    %41 = vector.broadcast %40 : vector<1x192xf32> to vector<16x192xf32>
    %42 = arith.addf %38, %41 : vector<16x192xf32>
    %43 = vector.extract_strided_slice %42 {offsets = [0, 0], sizes = [8, 32], strides = [1, 1]} : vector<16x192xf32> to vector<8x32xf32>
    %cst_22 = arith.constant 0.176776692 : f32
    %44 = vector.broadcast %cst_22 : f32 to vector<8x32xf32>
    %45 = arith.mulf %43, %44 : vector<8x32xf32>
    %46 = vector.extract_strided_slice %42 {offsets = [0, 64], sizes = [8, 32], strides = [1, 1]} : vector<16x192xf32> to vector<8x32xf32>
    %47 = vector.extract_strided_slice %42 {offsets = [0, 128], sizes = [8, 32], strides = [1, 1]} : vector<16x192xf32> to vector<8x32xf32>
    %48 = arith.truncf %45 : vector<8x32xf32> to vector<8x32xbf16>
    %49 = arith.truncf %46 : vector<8x32xf32> to vector<8x32xbf16>
    %cst_23 = arith.constant dense<0.000000e+00> : vector<8x8xf32>
    %50 = tpu.matmul %48, %49, %cst_23 {dimension_numbers = #tpu.dot_dimension_numbers<[1], [1], [0], [0], [0, 0, 1, 0], [], []>} : vector<8x32xbf16>, vector<8x32xbf16>, vector<8x8xf32> -> vector<8x8xf32>
    %51 = arith.addf %50, %8 : vector<8x8xf32>
    %cst_24 = arith.constant dense<0xFF800000> : vector<8xf32>
    %52 = vector.multi_reduction <maximumf>, %51, %cst_24 [1] : vector<8x8xf32> to vector<8xf32>
    %53 = vector.shape_cast %52 : vector<8xf32> to vector<8x1xf32>
    %54 = vector.broadcast %53 : vector<8x1xf32> to vector<8x8xf32>
    %55 = arith.subf %51, %54 : vector<8x8xf32>
    %56 = math.exp %55 : vector<8x8xf32>
    %cst_25 = arith.constant dense<0.000000e+00> : vector<8xf32>
    %57 = vector.multi_reduction <add>, %56, %cst_25 [1] : vector<8x8xf32> to vector<8xf32>
    %58 = vector.shape_cast %57 : vector<8xf32> to vector<8x1xf32>
    %59 = tpu.reciprocal %58 {approx = true} : vector<8x1xf32> -> vector<8x1xf32>
    %60 = vector.broadcast %59 : vector<8x1xf32> to vector<8x8xf32>
    %61 = arith.mulf %56, %60 : vector<8x8xf32>
    %62 = arith.truncf %61 : vector<8x8xf32> to vector<8x8xbf16>
    %63 = arith.truncf %47 : vector<8x32xf32> to vector<8x32xbf16>
    %cst_26 = arith.constant dense<0.000000e+00> : vector<8x32xf32>
    %64 = tpu.matmul %62, %63, %cst_26 {dimension_numbers = #tpu.dot_dimension_numbers<[1], [0], [0], [1], [0, 0, 1, 1], [], []>} : vector<8x8xbf16>, vector<8x32xbf16>, vector<8x32xf32> -> vector<8x32xf32>
    %65 = vector.extract_strided_slice %42 {offsets = [0, 32], sizes = [8, 32], strides = [1, 1]} : vector<16x192xf32> to vector<8x32xf32>
    %cst_27 = arith.constant 0.176776692 : f32
    %66 = vector.broadcast %cst_27 : f32 to vector<8x32xf32>
    %67 = arith.mulf %65, %66 : vector<8x32xf32>
    %68 = vector.extract_strided_slice %42 {offsets = [0, 96], sizes = [8, 32], strides = [1, 1]} : vector<16x192xf32> to vector<8x32xf32>
    %69 = vector.extract_strided_slice %42 {offsets = [0, 160], sizes = [8, 32], strides = [1, 1]} : vector<16x192xf32> to vector<8x32xf32>
    %70 = arith.truncf %67 : vector<8x32xf32> to vector<8x32xbf16>
    %71 = arith.truncf %68 : vector<8x32xf32> to vector<8x32xbf16>
    %cst_28 = arith.constant dense<0.000000e+00> : vector<8x8xf32>
    %72 = tpu.matmul %70, %71, %cst_28 {dimension_numbers = #tpu.dot_dimension_numbers<[1], [1], [0], [0], [0, 0, 1, 0], [], []>} : vector<8x32xbf16>, vector<8x32xbf16>, vector<8x8xf32> -> vector<8x8xf32>
    %73 = arith.addf %72, %8 : vector<8x8xf32>
    %cst_29 = arith.constant dense<0xFF800000> : vector<8xf32>
    %74 = vector.multi_reduction <maximumf>, %73, %cst_29 [1] : vector<8x8xf32> to vector<8xf32>
    %75 = vector.shape_cast %74 : vector<8xf32> to vector<8x1xf32>
    %76 = vector.broadcast %75 : vector<8x1xf32> to vector<8x8xf32>
    %77 = arith.subf %73, %76 : vector<8x8xf32>
    %78 = math.exp %77 : vector<8x8xf32>
    %cst_30 = arith.constant dense<0.000000e+00> : vector<8xf32>
    %79 = vector.multi_reduction <add>, %78, %cst_30 [1] : vector<8x8xf32> to vector<8xf32>
    %80 = vector.shape_cast %79 : vector<8xf32> to vector<8x1xf32>
    %81 = tpu.reciprocal %80 {approx = true} : vector<8x1xf32> -> vector<8x1xf32>
    %82 = vector.broadcast %81 : vector<8x1xf32> to vector<8x8xf32>
    %83 = arith.mulf %78, %82 : vector<8x8xf32>
    %84 = arith.truncf %83 : vector<8x8xf32> to vector<8x8xbf16>
    %85 = arith.truncf %69 : vector<8x32xf32> to vector<8x32xbf16>
    %cst_31 = arith.constant dense<0.000000e+00> : vector<8x32xf32>
    %86 = tpu.matmul %84, %85, %cst_31 {dimension_numbers = #tpu.dot_dimension_numbers<[1], [0], [0], [1], [0, 0, 1, 1], [], []>} : vector<8x8xbf16>, vector<8x32xbf16>, vector<8x32xf32> -> vector<8x32xf32>
    %87 = tpu.concatenate %64, %86 in 1 : vector<8x32xf32>, vector<8x32xf32> -> vector<8x64xf32>
    %88 = vector.extract_strided_slice %42 {offsets = [8, 0], sizes = [8, 32], strides = [1, 1]} : vector<16x192xf32> to vector<8x32xf32>
    %cst_32 = arith.constant 0.176776692 : f32
    %89 = vector.broadcast %cst_32 : f32 to vector<8x32xf32>
    %90 = arith.mulf %88, %89 : vector<8x32xf32>
    %91 = vector.extract_strided_slice %42 {offsets = [8, 64], sizes = [8, 32], strides = [1, 1]} : vector<16x192xf32> to vector<8x32xf32>
    %92 = vector.extract_strided_slice %42 {offsets = [8, 128], sizes = [8, 32], strides = [1, 1]} : vector<16x192xf32> to vector<8x32xf32>
    %93 = arith.truncf %90 : vector<8x32xf32> to vector<8x32xbf16>
    %94 = arith.truncf %91 : vector<8x32xf32> to vector<8x32xbf16>
    %cst_33 = arith.constant dense<0.000000e+00> : vector<8x8xf32>
    %95 = tpu.matmul %93, %94, %cst_33 {dimension_numbers = #tpu.dot_dimension_numbers<[1], [1], [0], [0], [0, 0, 1, 0], [], []>} : vector<8x32xbf16>, vector<8x32xbf16>, vector<8x8xf32> -> vector<8x8xf32>
    %96 = arith.addf %95, %8 : vector<8x8xf32>
    %cst_34 = arith.constant dense<0xFF800000> : vector<8xf32>
    %97 = vector.multi_reduction <maximumf>, %96, %cst_34 [1] : vector<8x8xf32> to vector<8xf32>
    %98 = vector.shape_cast %97 : vector<8xf32> to vector<8x1xf32>
    %99 = vector.broadcast %98 : vector<8x1xf32> to vector<8x8xf32>
    %100 = arith.subf %96, %99 : vector<8x8xf32>
    %101 = math.exp %100 : vector<8x8xf32>
    %cst_35 = arith.constant dense<0.000000e+00> : vector<8xf32>
    %102 = vector.multi_reduction <add>, %101, %cst_35 [1] : vector<8x8xf32> to vector<8xf32>
    %103 = vector.shape_cast %102 : vector<8xf32> to vector<8x1xf32>
    %104 = tpu.reciprocal %103 {approx = true} : vector<8x1xf32> -> vector<8x1xf32>
    %105 = vector.broadcast %104 : vector<8x1xf32> to vector<8x8xf32>
    %106 = arith.mulf %101, %105 : vector<8x8xf32>
    %107 = arith.truncf %106 : vector<8x8xf32> to vector<8x8xbf16>
    %108 = arith.truncf %92 : vector<8x32xf32> to vector<8x32xbf16>
    %cst_36 = arith.constant dense<0.000000e+00> : vector<8x32xf32>
    %109 = tpu.matmul %107, %108, %cst_36 {dimension_numbers = #tpu.dot_dimension_numbers<[1], [0], [0], [1], [0, 0, 1, 1], [], []>} : vector<8x8xbf16>, vector<8x32xbf16>, vector<8x32xf32> -> vector<8x32xf32>
    %110 = vector.extract_strided_slice %42 {offsets = [8, 32], sizes = [8, 32], strides = [1, 1]} : vector<16x192xf32> to vector<8x32xf32>
    %cst_37 = arith.constant 0.176776692 : f32
    %111 = vector.broadcast %cst_37 : f32 to vector<8x32xf32>
    %112 = arith.mulf %110, %111 : vector<8x32xf32>
    %113 = vector.extract_strided_slice %42 {offsets = [8, 96], sizes = [8, 32], strides = [1, 1]} : vector<16x192xf32> to vector<8x32xf32>
    %114 = vector.extract_strided_slice %42 {offsets = [8, 160], sizes = [8, 32], strides = [1, 1]} : vector<16x192xf32> to vector<8x32xf32>
    %115 = arith.truncf %112 : vector<8x32xf32> to vector<8x32xbf16>
    %116 = arith.truncf %113 : vector<8x32xf32> to vector<8x32xbf16>
    %cst_38 = arith.constant dense<0.000000e+00> : vector<8x8xf32>
    %117 = tpu.matmul %115, %116, %cst_38 {dimension_numbers = #tpu.dot_dimension_numbers<[1], [1], [0], [0], [0, 0, 1, 0], [], []>} : vector<8x32xbf16>, vector<8x32xbf16>, vector<8x8xf32> -> vector<8x8xf32>
    %118 = arith.addf %117, %8 : vector<8x8xf32>
    %cst_39 = arith.constant dense<0xFF800000> : vector<8xf32>
    %119 = vector.multi_reduction <maximumf>, %118, %cst_39 [1] : vector<8x8xf32> to vector<8xf32>
    %120 = vector.shape_cast %119 : vector<8xf32> to vector<8x1xf32>
    %121 = vector.broadcast %120 : vector<8x1xf32> to vector<8x8xf32>
    %122 = arith.subf %118, %121 : vector<8x8xf32>
    %123 = math.exp %122 : vector<8x8xf32>
    %cst_40 = arith.constant dense<0.000000e+00> : vector<8xf32>
    %124 = vector.multi_reduction <add>, %123, %cst_40 [1] : vector<8x8xf32> to vector<8xf32>
    %125 = vector.shape_cast %124 : vector<8xf32> to vector<8x1xf32>
    %126 = tpu.reciprocal %125 {approx = true} : vector<8x1xf32> -> vector<8x1xf32>
    %127 = vector.broadcast %126 : vector<8x1xf32> to vector<8x8xf32>
    %128 = arith.mulf %123, %127 : vector<8x8xf32>
    %129 = arith.truncf %128 : vector<8x8xf32> to vector<8x8xbf16>
    %130 = arith.truncf %114 : vector<8x32xf32> to vector<8x32xbf16>
    %cst_41 = arith.constant dense<0.000000e+00> : vector<8x32xf32>
    %131 = tpu.matmul %129, %130, %cst_41 {dimension_numbers = #tpu.dot_dimension_numbers<[1], [0], [0], [1], [0, 0, 1, 1], [], []>} : vector<8x8xbf16>, vector<8x32xbf16>, vector<8x32xf32> -> vector<8x32xf32>
    %132 = tpu.concatenate %109, %131 in 1 : vector<8x32xf32>, vector<8x32xf32> -> vector<8x64xf32>
    %133 = tpu.concatenate %87, %132 in 0 : vector<8x64xf32>, vector<8x64xf32> -> vector<16x64xf32>
    %134 = arith.truncf %133 : vector<16x64xf32> to vector<16x64xbf16>
    %c0_42 = arith.constant 0 : index
    %c0_43 = arith.constant 0 : index
    %c0_44 = arith.constant 0 : index
    %135 = vector.load %arg8[%c0_42, %c0_43, %c0_44] : memref<2x64x64xbf16, #tpu.memory_space<vmem>>, vector<1x64x64xbf16>
    %136 = vector.shape_cast %135 : vector<1x64x64xbf16> to vector<64x64xbf16>
    %cst_45 = arith.constant dense<0.000000e+00> : vector<16x64xf32>
    %137 = tpu.matmul %134, %136, %cst_45 {dimension_numbers = #tpu.dot_dimension_numbers<[1], [0], [0], [1], [0, 0, 1, 1], [], []>} : vector<16x64xbf16>, vector<64x64xbf16>, vector<16x64xf32> -> vector<16x64xf32>
    %138 = arith.addf %2, %137 : vector<16x64xf32>
    %c0_46 = arith.constant 0 : index
    %c0_47 = arith.constant 0 : index
    %c0_48 = arith.constant 0 : index
    %139 = vector.load %arg9[%c0_46, %c0_47, %c0_48] : memref<2x1x64xf32, #tpu.memory_space<vmem>>, vector<1x1x64xf32>
    %140 = vector.shape_cast %139 : vector<1x1x64xf32> to vector<1x64xf32>
    %141 = vector.broadcast %140 : vector<1x64xf32> to vector<16x64xf32>
    %142 = arith.addf %138, %141 : vector<16x64xf32>
    %c0_49 = arith.constant 0 : index
    %c0_50 = arith.constant 0 : index
    %c0_51 = arith.constant 0 : index
    %143 = vector.load %arg10[%c0_49, %c0_50, %c0_51] : memref<2x1x64xf32, #tpu.memory_space<vmem>>, vector<1x1x64xf32>
    %144 = vector.shape_cast %143 : vector<1x1x64xf32> to vector<1x64xf32>
    %c0_52 = arith.constant 0 : index
    %c0_53 = arith.constant 0 : index
    %c0_54 = arith.constant 0 : index
    %145 = vector.load %arg11[%c0_52, %c0_53, %c0_54] : memref<2x1x64xf32, #tpu.memory_space<vmem>>, vector<1x1x64xf32>
    %146 = vector.shape_cast %145 : vector<1x1x64xf32> to vector<1x64xf32>
    %cst_55 = arith.constant dense<0.000000e+00> : vector<16xf32>
    %147 = vector.multi_reduction <add>, %142, %cst_55 [1] : vector<16x64xf32> to vector<16xf32>
    %148 = vector.shape_cast %147 : vector<16xf32> to vector<16x1xf32>
    %149 = arith.mulf %142, %142 : vector<16x64xf32>
    %cst_56 = arith.constant dense<0.000000e+00> : vector<16xf32>
    %150 = vector.multi_reduction <add>, %149, %cst_56 [1] : vector<16x64xf32> to vector<16xf32>
    %151 = vector.shape_cast %150 : vector<16xf32> to vector<16x1xf32>
    %cst_57 = arith.constant 1.562500e-02 : f32
    %152 = vector.broadcast %cst_57 : f32 to vector<16x1xf32>
    %153 = arith.mulf %148, %152 : vector<16x1xf32>
    %cst_58 = arith.constant 1.562500e-02 : f32
    %154 = vector.broadcast %cst_58 : f32 to vector<16x1xf32>
    %155 = arith.mulf %151, %154 : vector<16x1xf32>
    %156 = arith.mulf %153, %153 : vector<16x1xf32>
    %157 = arith.subf %155, %156 : vector<16x1xf32>
    %158 = vector.broadcast %153 : vector<16x1xf32> to vector<16x64xf32>
    %159 = arith.subf %142, %158 : vector<16x64xf32>
    %cst_59 = arith.constant 9.99999974E-6 : f32
    %160 = vector.broadcast %cst_59 : f32 to vector<16x1xf32>
    %161 = arith.addf %157, %160 : vector<16x1xf32>
    %162 = math.rsqrt %161 : vector<16x1xf32>
    %163 = vector.broadcast %162 : vector<16x1xf32> to vector<16x64xf32>
    %164 = arith.mulf %159, %163 : vector<16x64xf32>
    %165 = vector.broadcast %144 : vector<1x64xf32> to vector<16x64xf32>
    %166 = arith.mulf %164, %165 : vector<16x64xf32>
    %167 = vector.broadcast %146 : vector<1x64xf32> to vector<16x64xf32>
    %168 = arith.addf %166, %167 : vector<16x64xf32>
    %169 = arith.truncf %168 : vector<16x64xf32> to vector<16x64xbf16>
    %c0_60 = arith.constant 0 : index
    %c0_61 = arith.constant 0 : index
    %c0_62 = arith.constant 0 : index
    %170 = vector.load %arg12[%c0_60, %c0_61, %c0_62] : memref<2x64x256xbf16, #tpu.memory_space<vmem>>, vector<1x64x256xbf16>
    %171 = vector.shape_cast %170 : vector<1x64x256xbf16> to vector<64x256xbf16>
    %cst_63 = arith.constant dense<0.000000e+00> : vector<16x256xf32>
    %172 = tpu.matmul %169, %171, %cst_63 {dimension_numbers = #tpu.dot_dimension_numbers<[1], [0], [0], [1], [0, 0, 1, 1], [], []>} : vector<16x64xbf16>, vector<64x256xbf16>, vector<16x256xf32> -> vector<16x256xf32>
    %c0_64 = arith.constant 0 : index
    %c0_65 = arith.constant 0 : index
    %c0_66 = arith.constant 0 : index
    %173 = vector.load %arg13[%c0_64, %c0_65, %c0_66] : memref<2x1x256xf32, #tpu.memory_space<vmem>>, vector<1x1x256xf32>
    %174 = vector.shape_cast %173 : vector<1x1x256xf32> to vector<1x256xf32>
    %175 = vector.broadcast %174 : vector<1x256xf32> to vector<16x256xf32>
    %176 = arith.addf %172, %175 : vector<16x256xf32>
    %cst_67 = arith.constant 1.702000e+00 : f32
    %177 = vector.broadcast %cst_67 : f32 to vector<16x256xf32>
    %178 = arith.mulf %177, %176 : vector<16x256xf32>
    %179 = arith.negf %178 : vector<16x256xf32>
    %180 = math.exp %179 : vector<16x256xf32>
    %cst_68 = arith.constant 1.000000e+00 : f32
    %181 = vector.broadcast %cst_68 : f32 to vector<16x256xf32>
    %182 = arith.addf %181, %180 : vector<16x256xf32>
    %183 = arith.divf %181, %182 : vector<16x256xf32>
    %184 = arith.mulf %176, %183 : vector<16x256xf32>
    %185 = arith.truncf %184 : vector<16x256xf32> to vector<16x256xbf16>
    %c0_69 = arith.constant 0 : index
    %c0_70 = arith.constant 0 : index
    %c0_71 = arith.constant 0 : index
    %186 = vector.load %arg14[%c0_69, %c0_70, %c0_71] : memref<2x256x64xbf16, #tpu.memory_space<vmem>>, vector<1x256x64xbf16>
    %187 = vector.shape_cast %186 : vector<1x256x64xbf16> to vector<256x64xbf16>
    %cst_72 = arith.constant dense<0.000000e+00> : vector<16x64xf32>
    %188 = tpu.matmul %185, %187, %cst_72 {dimension_numbers = #tpu.dot_dimension_numbers<[1], [0], [0], [1], [0, 0, 1, 1], [], []>} : vector<16x256xbf16>, vector<256x64xbf16>, vector<16x64xf32> -> vector<16x64xf32>
    %c0_73 = arith.constant 0 : index
    %c0_74 = arith.constant 0 : index
    %c0_75 = arith.constant 0 : index
    %189 = vector.load %arg15[%c0_73, %c0_74, %c0_75] : memref<2x1x64xf32, #tpu.memory_space<vmem>>, vector<1x1x64xf32>
    %190 = vector.shape_cast %189 : vector<1x1x64xf32> to vector<1x64xf32>
    %191 = vector.broadcast %190 : vector<1x64xf32> to vector<16x64xf32>
    %192 = arith.addf %188, %191 : vector<16x64xf32>
    %193 = arith.addf %142, %192 : vector<16x64xf32>
    %c1 = arith.constant 1 : index
    %c0_76 = arith.constant 0 : index
    %c0_77 = arith.constant 0 : index
    %194 = vector.load %arg4[%c1, %c0_76, %c0_77] : memref<2x1x64xf32, #tpu.memory_space<vmem>>, vector<1x1x64xf32>
    %195 = vector.shape_cast %194 : vector<1x1x64xf32> to vector<1x64xf32>
    %c1_78 = arith.constant 1 : index
    %c0_79 = arith.constant 0 : index
    %c0_80 = arith.constant 0 : index
    %196 = vector.load %arg5[%c1_78, %c0_79, %c0_80] : memref<2x1x64xf32, #tpu.memory_space<vmem>>, vector<1x1x64xf32>
    %197 = vector.shape_cast %196 : vector<1x1x64xf32> to vector<1x64xf32>
    %cst_81 = arith.constant dense<0.000000e+00> : vector<16xf32>
    %198 = vector.multi_reduction <add>, %193, %cst_81 [1] : vector<16x64xf32> to vector<16xf32>
    %199 = vector.shape_cast %198 : vector<16xf32> to vector<16x1xf32>
    %200 = arith.mulf %193, %193 : vector<16x64xf32>
    %cst_82 = arith.constant dense<0.000000e+00> : vector<16xf32>
    %201 = vector.multi_reduction <add>, %200, %cst_82 [1] : vector<16x64xf32> to vector<16xf32>
    %202 = vector.shape_cast %201 : vector<16xf32> to vector<16x1xf32>
    %cst_83 = arith.constant 1.562500e-02 : f32
    %203 = vector.broadcast %cst_83 : f32 to vector<16x1xf32>
    %204 = arith.mulf %199, %203 : vector<16x1xf32>
    %cst_84 = arith.constant 1.562500e-02 : f32
    %205 = vector.broadcast %cst_84 : f32 to vector<16x1xf32>
    %206 = arith.mulf %202, %205 : vector<16x1xf32>
    %207 = arith.mulf %204, %204 : vector<16x1xf32>
    %208 = arith.subf %206, %207 : vector<16x1xf32>
    %209 = vector.broadcast %204 : vector<16x1xf32> to vector<16x64xf32>
    %210 = arith.subf %193, %209 : vector<16x64xf32>
    %cst_85 = arith.constant 9.99999974E-6 : f32
    %211 = vector.broadcast %cst_85 : f32 to vector<16x1xf32>
    %212 = arith.addf %208, %211 : vector<16x1xf32>
    %213 = math.rsqrt %212 : vector<16x1xf32>
    %214 = vector.broadcast %213 : vector<16x1xf32> to vector<16x64xf32>
    %215 = arith.mulf %210, %214 : vector<16x64xf32>
    %216 = vector.broadcast %195 : vector<1x64xf32> to vector<16x64xf32>
    %217 = arith.mulf %215, %216 : vector<16x64xf32>
    %218 = vector.broadcast %197 : vector<1x64xf32> to vector<16x64xf32>
    %219 = arith.addf %217, %218 : vector<16x64xf32>
    %220 = arith.truncf %219 : vector<16x64xf32> to vector<16x64xbf16>
    %c1_86 = arith.constant 1 : index
    %c0_87 = arith.constant 0 : index
    %c0_88 = arith.constant 0 : index
    %221 = vector.load %arg6[%c1_86, %c0_87, %c0_88] : memref<2x64x192xbf16, #tpu.memory_space<vmem>>, vector<1x64x192xbf16>
    %222 = vector.shape_cast %221 : vector<1x64x192xbf16> to vector<64x192xbf16>
    %cst_89 = arith.constant dense<0.000000e+00> : vector<16x192xf32>
    %223 = tpu.matmul %220, %222, %cst_89 {dimension_numbers = #tpu.dot_dimension_numbers<[1], [0], [0], [1], [0, 0, 1, 1], [], []>} : vector<16x64xbf16>, vector<64x192xbf16>, vector<16x192xf32> -> vector<16x192xf32>
    %c1_90 = arith.constant 1 : index
    %c0_91 = arith.constant 0 : index
    %c0_92 = arith.constant 0 : index
    %224 = vector.load %arg7[%c1_90, %c0_91, %c0_92] : memref<2x1x192xf32, #tpu.memory_space<vmem>>, vector<1x1x192xf32>
    %225 = vector.shape_cast %224 : vector<1x1x192xf32> to vector<1x192xf32>
    %226 = vector.broadcast %225 : vector<1x192xf32> to vector<16x192xf32>
    %227 = arith.addf %223, %226 : vector<16x192xf32>
    %228 = vector.extract_strided_slice %227 {offsets = [0, 0], sizes = [8, 32], strides = [1, 1]} : vector<16x192xf32> to vector<8x32xf32>
    %cst_93 = arith.constant 0.176776692 : f32
    %229 = vector.broadcast %cst_93 : f32 to vector<8x32xf32>
    %230 = arith.mulf %228, %229 : vector<8x32xf32>
    %231 = vector.extract_strided_slice %227 {offsets = [0, 64], sizes = [8, 32], strides = [1, 1]} : vector<16x192xf32> to vector<8x32xf32>
    %232 = vector.extract_strided_slice %227 {offsets = [0, 128], sizes = [8, 32], strides = [1, 1]} : vector<16x192xf32> to vector<8x32xf32>
    %233 = arith.truncf %230 : vector<8x32xf32> to vector<8x32xbf16>
    %234 = arith.truncf %231 : vector<8x32xf32> to vector<8x32xbf16>
    %cst_94 = arith.constant dense<0.000000e+00> : vector<8x8xf32>
    %235 = tpu.matmul %233, %234, %cst_94 {dimension_numbers = #tpu.dot_dimension_numbers<[1], [1], [0], [0], [0, 0, 1, 0], [], []>} : vector<8x32xbf16>, vector<8x32xbf16>, vector<8x8xf32> -> vector<8x8xf32>
    %236 = arith.addf %235, %8 : vector<8x8xf32>
    %cst_95 = arith.constant dense<0xFF800000> : vector<8xf32>
    %237 = vector.multi_reduction <maximumf>, %236, %cst_95 [1] : vector<8x8xf32> to vector<8xf32>
    %238 = vector.shape_cast %237 : vector<8xf32> to vector<8x1xf32>
    %239 = vector.broadcast %238 : vector<8x1xf32> to vector<8x8xf32>
    %240 = arith.subf %236, %239 : vector<8x8xf32>
    %241 = math.exp %240 : vector<8x8xf32>
    %cst_96 = arith.constant dense<0.000000e+00> : vector<8xf32>
    %242 = vector.multi_reduction <add>, %241, %cst_96 [1] : vector<8x8xf32> to vector<8xf32>
    %243 = vector.shape_cast %242 : vector<8xf32> to vector<8x1xf32>
    %244 = tpu.reciprocal %243 {approx = true} : vector<8x1xf32> -> vector<8x1xf32>
    %245 = vector.broadcast %244 : vector<8x1xf32> to vector<8x8xf32>
    %246 = arith.mulf %241, %245 : vector<8x8xf32>
    %247 = arith.truncf %246 : vector<8x8xf32> to vector<8x8xbf16>
    %248 = arith.truncf %232 : vector<8x32xf32> to vector<8x32xbf16>
    %cst_97 = arith.constant dense<0.000000e+00> : vector<8x32xf32>
    %249 = tpu.matmul %247, %248, %cst_97 {dimension_numbers = #tpu.dot_dimension_numbers<[1], [0], [0], [1], [0, 0, 1, 1], [], []>} : vector<8x8xbf16>, vector<8x32xbf16>, vector<8x32xf32> -> vector<8x32xf32>
    %250 = vector.extract_strided_slice %227 {offsets = [0, 32], sizes = [8, 32], strides = [1, 1]} : vector<16x192xf32> to vector<8x32xf32>
    %cst_98 = arith.constant 0.176776692 : f32
    %251 = vector.broadcast %cst_98 : f32 to vector<8x32xf32>
    %252 = arith.mulf %250, %251 : vector<8x32xf32>
    %253 = vector.extract_strided_slice %227 {offsets = [0, 96], sizes = [8, 32], strides = [1, 1]} : vector<16x192xf32> to vector<8x32xf32>
    %254 = vector.extract_strided_slice %227 {offsets = [0, 160], sizes = [8, 32], strides = [1, 1]} : vector<16x192xf32> to vector<8x32xf32>
    %255 = arith.truncf %252 : vector<8x32xf32> to vector<8x32xbf16>
    %256 = arith.truncf %253 : vector<8x32xf32> to vector<8x32xbf16>
    %cst_99 = arith.constant dense<0.000000e+00> : vector<8x8xf32>
    %257 = tpu.matmul %255, %256, %cst_99 {dimension_numbers = #tpu.dot_dimension_numbers<[1], [1], [0], [0], [0, 0, 1, 0], [], []>} : vector<8x32xbf16>, vector<8x32xbf16>, vector<8x8xf32> -> vector<8x8xf32>
    %258 = arith.addf %257, %8 : vector<8x8xf32>
    %cst_100 = arith.constant dense<0xFF800000> : vector<8xf32>
    %259 = vector.multi_reduction <maximumf>, %258, %cst_100 [1] : vector<8x8xf32> to vector<8xf32>
    %260 = vector.shape_cast %259 : vector<8xf32> to vector<8x1xf32>
    %261 = vector.broadcast %260 : vector<8x1xf32> to vector<8x8xf32>
    %262 = arith.subf %258, %261 : vector<8x8xf32>
    %263 = math.exp %262 : vector<8x8xf32>
    %cst_101 = arith.constant dense<0.000000e+00> : vector<8xf32>
    %264 = vector.multi_reduction <add>, %263, %cst_101 [1] : vector<8x8xf32> to vector<8xf32>
    %265 = vector.shape_cast %264 : vector<8xf32> to vector<8x1xf32>
    %266 = tpu.reciprocal %265 {approx = true} : vector<8x1xf32> -> vector<8x1xf32>
    %267 = vector.broadcast %266 : vector<8x1xf32> to vector<8x8xf32>
    %268 = arith.mulf %263, %267 : vector<8x8xf32>
    %269 = arith.truncf %268 : vector<8x8xf32> to vector<8x8xbf16>
    %270 = arith.truncf %254 : vector<8x32xf32> to vector<8x32xbf16>
    %cst_102 = arith.constant dense<0.000000e+00> : vector<8x32xf32>
    %271 = tpu.matmul %269, %270, %cst_102 {dimension_numbers = #tpu.dot_dimension_numbers<[1], [0], [0], [1], [0, 0, 1, 1], [], []>} : vector<8x8xbf16>, vector<8x32xbf16>, vector<8x32xf32> -> vector<8x32xf32>
    %272 = tpu.concatenate %249, %271 in 1 : vector<8x32xf32>, vector<8x32xf32> -> vector<8x64xf32>
    %273 = vector.extract_strided_slice %227 {offsets = [8, 0], sizes = [8, 32], strides = [1, 1]} : vector<16x192xf32> to vector<8x32xf32>
    %cst_103 = arith.constant 0.176776692 : f32
    %274 = vector.broadcast %cst_103 : f32 to vector<8x32xf32>
    %275 = arith.mulf %273, %274 : vector<8x32xf32>
    %276 = vector.extract_strided_slice %227 {offsets = [8, 64], sizes = [8, 32], strides = [1, 1]} : vector<16x192xf32> to vector<8x32xf32>
    %277 = vector.extract_strided_slice %227 {offsets = [8, 128], sizes = [8, 32], strides = [1, 1]} : vector<16x192xf32> to vector<8x32xf32>
    %278 = arith.truncf %275 : vector<8x32xf32> to vector<8x32xbf16>
    %279 = arith.truncf %276 : vector<8x32xf32> to vector<8x32xbf16>
    %cst_104 = arith.constant dense<0.000000e+00> : vector<8x8xf32>
    %280 = tpu.matmul %278, %279, %cst_104 {dimension_numbers = #tpu.dot_dimension_numbers<[1], [1], [0], [0], [0, 0, 1, 0], [], []>} : vector<8x32xbf16>, vector<8x32xbf16>, vector<8x8xf32> -> vector<8x8xf32>
    %281 = arith.addf %280, %8 : vector<8x8xf32>
    %cst_105 = arith.constant dense<0xFF800000> : vector<8xf32>
    %282 = vector.multi_reduction <maximumf>, %281, %cst_105 [1] : vector<8x8xf32> to vector<8xf32>
    %283 = vector.shape_cast %282 : vector<8xf32> to vector<8x1xf32>
    %284 = vector.broadcast %283 : vector<8x1xf32> to vector<8x8xf32>
    %285 = arith.subf %281, %284 : vector<8x8xf32>
    %286 = math.exp %285 : vector<8x8xf32>
    %cst_106 = arith.constant dense<0.000000e+00> : vector<8xf32>
    %287 = vector.multi_reduction <add>, %286, %cst_106 [1] : vector<8x8xf32> to vector<8xf32>
    %288 = vector.shape_cast %287 : vector<8xf32> to vector<8x1xf32>
    %289 = tpu.reciprocal %288 {approx = true} : vector<8x1xf32> -> vector<8x1xf32>
    %290 = vector.broadcast %289 : vector<8x1xf32> to vector<8x8xf32>
    %291 = arith.mulf %286, %290 : vector<8x8xf32>
    %292 = arith.truncf %291 : vector<8x8xf32> to vector<8x8xbf16>
    %293 = arith.truncf %277 : vector<8x32xf32> to vector<8x32xbf16>
    %cst_107 = arith.constant dense<0.000000e+00> : vector<8x32xf32>
    %294 = tpu.matmul %292, %293, %cst_107 {dimension_numbers = #tpu.dot_dimension_numbers<[1], [0], [0], [1], [0, 0, 1, 1], [], []>} : vector<8x8xbf16>, vector<8x32xbf16>, vector<8x32xf32> -> vector<8x32xf32>
    %295 = vector.extract_strided_slice %227 {offsets = [8, 32], sizes = [8, 32], strides = [1, 1]} : vector<16x192xf32> to vector<8x32xf32>
    %cst_108 = arith.constant 0.176776692 : f32
    %296 = vector.broadcast %cst_108 : f32 to vector<8x32xf32>
    %297 = arith.mulf %295, %296 : vector<8x32xf32>
    %298 = vector.extract_strided_slice %227 {offsets = [8, 96], sizes = [8, 32], strides = [1, 1]} : vector<16x192xf32> to vector<8x32xf32>
    %299 = vector.extract_strided_slice %227 {offsets = [8, 160], sizes = [8, 32], strides = [1, 1]} : vector<16x192xf32> to vector<8x32xf32>
    %300 = arith.truncf %297 : vector<8x32xf32> to vector<8x32xbf16>
    %301 = arith.truncf %298 : vector<8x32xf32> to vector<8x32xbf16>
    %cst_109 = arith.constant dense<0.000000e+00> : vector<8x8xf32>
    %302 = tpu.matmul %300, %301, %cst_109 {dimension_numbers = #tpu.dot_dimension_numbers<[1], [1], [0], [0], [0, 0, 1, 0], [], []>} : vector<8x32xbf16>, vector<8x32xbf16>, vector<8x8xf32> -> vector<8x8xf32>
    %303 = arith.addf %302, %8 : vector<8x8xf32>
    %cst_110 = arith.constant dense<0xFF800000> : vector<8xf32>
    %304 = vector.multi_reduction <maximumf>, %303, %cst_110 [1] : vector<8x8xf32> to vector<8xf32>
    %305 = vector.shape_cast %304 : vector<8xf32> to vector<8x1xf32>
    %306 = vector.broadcast %305 : vector<8x1xf32> to vector<8x8xf32>
    %307 = arith.subf %303, %306 : vector<8x8xf32>
    %308 = math.exp %307 : vector<8x8xf32>
    %cst_111 = arith.constant dense<0.000000e+00> : vector<8xf32>
    %309 = vector.multi_reduction <add>, %308, %cst_111 [1] : vector<8x8xf32> to vector<8xf32>
    %310 = vector.shape_cast %309 : vector<8xf32> to vector<8x1xf32>
    %311 = tpu.reciprocal %310 {approx = true} : vector<8x1xf32> -> vector<8x1xf32>
    %312 = vector.broadcast %311 : vector<8x1xf32> to vector<8x8xf32>
    %313 = arith.mulf %308, %312 : vector<8x8xf32>
    %314 = arith.truncf %313 : vector<8x8xf32> to vector<8x8xbf16>
    %315 = arith.truncf %299 : vector<8x32xf32> to vector<8x32xbf16>
    %cst_112 = arith.constant dense<0.000000e+00> : vector<8x32xf32>
    %316 = tpu.matmul %314, %315, %cst_112 {dimension_numbers = #tpu.dot_dimension_numbers<[1], [0], [0], [1], [0, 0, 1, 1], [], []>} : vector<8x8xbf16>, vector<8x32xbf16>, vector<8x32xf32> -> vector<8x32xf32>
    %317 = tpu.concatenate %294, %316 in 1 : vector<8x32xf32>, vector<8x32xf32> -> vector<8x64xf32>
    %318 = tpu.concatenate %272, %317 in 0 : vector<8x64xf32>, vector<8x64xf32> -> vector<16x64xf32>
    %319 = arith.truncf %318 : vector<16x64xf32> to vector<16x64xbf16>
    %c1_113 = arith.constant 1 : index
    %c0_114 = arith.constant 0 : index
    %c0_115 = arith.constant 0 : index
    %320 = vector.load %arg8[%c1_113, %c0_114, %c0_115] : memref<2x64x64xbf16, #tpu.memory_space<vmem>>, vector<1x64x64xbf16>
    %321 = vector.shape_cast %320 : vector<1x64x64xbf16> to vector<64x64xbf16>
    %cst_116 = arith.constant dense<0.000000e+00> : vector<16x64xf32>
    %322 = tpu.matmul %319, %321, %cst_116 {dimension_numbers = #tpu.dot_dimension_numbers<[1], [0], [0], [1], [0, 0, 1, 1], [], []>} : vector<16x64xbf16>, vector<64x64xbf16>, vector<16x64xf32> -> vector<16x64xf32>
    %323 = arith.addf %193, %322 : vector<16x64xf32>
    %c1_117 = arith.constant 1 : index
    %c0_118 = arith.constant 0 : index
    %c0_119 = arith.constant 0 : index
    %324 = vector.load %arg9[%c1_117, %c0_118, %c0_119] : memref<2x1x64xf32, #tpu.memory_space<vmem>>, vector<1x1x64xf32>
    %325 = vector.shape_cast %324 : vector<1x1x64xf32> to vector<1x64xf32>
    %326 = vector.broadcast %325 : vector<1x64xf32> to vector<16x64xf32>
    %327 = arith.addf %323, %326 : vector<16x64xf32>
    %c1_120 = arith.constant 1 : index
    %c0_121 = arith.constant 0 : index
    %c0_122 = arith.constant 0 : index
    %328 = vector.load %arg10[%c1_120, %c0_121, %c0_122] : memref<2x1x64xf32, #tpu.memory_space<vmem>>, vector<1x1x64xf32>
    %329 = vector.shape_cast %328 : vector<1x1x64xf32> to vector<1x64xf32>
    %c1_123 = arith.constant 1 : index
    %c0_124 = arith.constant 0 : index
    %c0_125 = arith.constant 0 : index
    %330 = vector.load %arg11[%c1_123, %c0_124, %c0_125] : memref<2x1x64xf32, #tpu.memory_space<vmem>>, vector<1x1x64xf32>
    %331 = vector.shape_cast %330 : vector<1x1x64xf32> to vector<1x64xf32>
    %cst_126 = arith.constant dense<0.000000e+00> : vector<16xf32>
    %332 = vector.multi_reduction <add>, %327, %cst_126 [1] : vector<16x64xf32> to vector<16xf32>
    %333 = vector.shape_cast %332 : vector<16xf32> to vector<16x1xf32>
    %334 = arith.mulf %327, %327 : vector<16x64xf32>
    %cst_127 = arith.constant dense<0.000000e+00> : vector<16xf32>
    %335 = vector.multi_reduction <add>, %334, %cst_127 [1] : vector<16x64xf32> to vector<16xf32>
    %336 = vector.shape_cast %335 : vector<16xf32> to vector<16x1xf32>
    %cst_128 = arith.constant 1.562500e-02 : f32
    %337 = vector.broadcast %cst_128 : f32 to vector<16x1xf32>
    %338 = arith.mulf %333, %337 : vector<16x1xf32>
    %cst_129 = arith.constant 1.562500e-02 : f32
    %339 = vector.broadcast %cst_129 : f32 to vector<16x1xf32>
    %340 = arith.mulf %336, %339 : vector<16x1xf32>
    %341 = arith.mulf %338, %338 : vector<16x1xf32>
    %342 = arith.subf %340, %341 : vector<16x1xf32>
    %343 = vector.broadcast %338 : vector<16x1xf32> to vector<16x64xf32>
    %344 = arith.subf %327, %343 : vector<16x64xf32>
    %cst_130 = arith.constant 9.99999974E-6 : f32
    %345 = vector.broadcast %cst_130 : f32 to vector<16x1xf32>
    %346 = arith.addf %342, %345 : vector<16x1xf32>
    %347 = math.rsqrt %346 : vector<16x1xf32>
    %348 = vector.broadcast %347 : vector<16x1xf32> to vector<16x64xf32>
    %349 = arith.mulf %344, %348 : vector<16x64xf32>
    %350 = vector.broadcast %329 : vector<1x64xf32> to vector<16x64xf32>
    %351 = arith.mulf %349, %350 : vector<16x64xf32>
    %352 = vector.broadcast %331 : vector<1x64xf32> to vector<16x64xf32>
    %353 = arith.addf %351, %352 : vector<16x64xf32>
    %354 = arith.truncf %353 : vector<16x64xf32> to vector<16x64xbf16>
    %c1_131 = arith.constant 1 : index
    %c0_132 = arith.constant 0 : index
    %c0_133 = arith.constant 0 : index
    %355 = vector.load %arg12[%c1_131, %c0_132, %c0_133] : memref<2x64x256xbf16, #tpu.memory_space<vmem>>, vector<1x64x256xbf16>
    %356 = vector.shape_cast %355 : vector<1x64x256xbf16> to vector<64x256xbf16>
    %cst_134 = arith.constant dense<0.000000e+00> : vector<16x256xf32>
    %357 = tpu.matmul %354, %356, %cst_134 {dimension_numbers = #tpu.dot_dimension_numbers<[1], [0], [0], [1], [0, 0, 1, 1], [], []>} : vector<16x64xbf16>, vector<64x256xbf16>, vector<16x256xf32> -> vector<16x256xf32>
    %c1_135 = arith.constant 1 : index
    %c0_136 = arith.constant 0 : index
    %c0_137 = arith.constant 0 : index
    %358 = vector.load %arg13[%c1_135, %c0_136, %c0_137] : memref<2x1x256xf32, #tpu.memory_space<vmem>>, vector<1x1x256xf32>
    %359 = vector.shape_cast %358 : vector<1x1x256xf32> to vector<1x256xf32>
    %360 = vector.broadcast %359 : vector<1x256xf32> to vector<16x256xf32>
    %361 = arith.addf %357, %360 : vector<16x256xf32>
    %cst_138 = arith.constant 1.702000e+00 : f32
    %362 = vector.broadcast %cst_138 : f32 to vector<16x256xf32>
    %363 = arith.mulf %362, %361 : vector<16x256xf32>
    %364 = arith.negf %363 : vector<16x256xf32>
    %365 = math.exp %364 : vector<16x256xf32>
    %cst_139 = arith.constant 1.000000e+00 : f32
    %366 = vector.broadcast %cst_139 : f32 to vector<16x256xf32>
    %367 = arith.addf %366, %365 : vector<16x256xf32>
    %368 = arith.divf %366, %367 : vector<16x256xf32>
    %369 = arith.mulf %361, %368 : vector<16x256xf32>
    %370 = arith.truncf %369 : vector<16x256xf32> to vector<16x256xbf16>
    %c1_140 = arith.constant 1 : index
    %c0_141 = arith.constant 0 : index
    %c0_142 = arith.constant 0 : index
    %371 = vector.load %arg14[%c1_140, %c0_141, %c0_142] : memref<2x256x64xbf16, #tpu.memory_space<vmem>>, vector<1x256x64xbf16>
    %372 = vector.shape_cast %371 : vector<1x256x64xbf16> to vector<256x64xbf16>
    %cst_143 = arith.constant dense<0.000000e+00> : vector<16x64xf32>
    %373 = tpu.matmul %370, %372, %cst_143 {dimension_numbers = #tpu.dot_dimension_numbers<[1], [0], [0], [1], [0, 0, 1, 1], [], []>} : vector<16x256xbf16>, vector<256x64xbf16>, vector<16x64xf32> -> vector<16x64xf32>
    %c1_144 = arith.constant 1 : index
    %c0_145 = arith.constant 0 : index
    %c0_146 = arith.constant 0 : index
    %374 = vector.load %arg15[%c1_144, %c0_145, %c0_146] : memref<2x1x64xf32, #tpu.memory_space<vmem>>, vector<1x1x64xf32>
    %375 = vector.shape_cast %374 : vector<1x1x64xf32> to vector<1x64xf32>
    %376 = vector.broadcast %375 : vector<1x64xf32> to vector<16x64xf32>
    %377 = arith.addf %373, %376 : vector<16x64xf32>
    %378 = arith.addf %327, %377 : vector<16x64xf32>
    %c0_147 = arith.constant 0 : index
    %c0_148 = arith.constant 0 : index
    %379 = vector.load %arg20[%c0_147, %c0_148] : memref<16x64xf32, #tpu.memory_space<vmem>>, vector<16x64xf32>
    tpu.vector_store %arg20[%c0_147, %c0_148], %378 {strides = array<i32>} : memref<16x64xf32, #tpu.memory_space<vmem>>, vector<16x64xf32>,
    %c2_i32 = arith.constant 2 : i32
    %380 = arith.muli %arg0, %c2_i32 : i32
    %c0_i32 = arith.constant 0 : i32
    %381 = arith.addi %380, %c0_i32 : i32
    %382 = arith.index_cast %381 : i32 to index
    %383 = memref.load %arg1[%382] : memref<2xi32, #tpu.memory_space<smem>>
    %c0_i32_149 = arith.constant 0 : i32
    %384 = arith.addi %c0_i32_149, %383 : i32
    %385 = arith.index_cast %384 : i32 to index
    %c0_150 = arith.constant 0 : index
    %386 = vector.load %arg20[%385, %c0_150] : memref<16x64xf32, #tpu.memory_space<vmem>>, vector<1x64xf32>
    %c2_i32_151 = arith.constant 2 : i32
    %387 = arith.muli %arg0, %c2_i32_151 : i32
    %c1_i32 = arith.constant 1 : i32
    %388 = arith.addi %387, %c1_i32 : i32
    %389 = arith.index_cast %388 : i32 to index
    %390 = memref.load %arg1[%389] : memref<2xi32, #tpu.memory_space<smem>>
    %c8_i32 = arith.constant 8 : i32
    %391 = arith.addi %c8_i32, %390 : i32
    %392 = arith.index_cast %391 : i32 to index
    %c0_152 = arith.constant 0 : index
    %393 = vector.load %arg20[%392, %c0_152] : memref<16x64xf32, #tpu.memory_space<vmem>>, vector<1x64xf32>
    %394 = tpu.concatenate %386, %393 in 0 : vector<1x64xf32>, vector<1x64xf32> -> vector<2x64xf32>
    %c0_153 = arith.constant 0 : index
    %c0_154 = arith.constant 0 : index
    %395 = vector.load %arg16[%c0_153, %c0_154] : memref<1x64xf32, #tpu.memory_space<vmem>>, vector<1x64xf32>
    %c0_155 = arith.constant 0 : index
    %c0_156 = arith.constant 0 : index
    %396 = vector.load %arg17[%c0_155, %c0_156] : memref<1x64xf32, #tpu.memory_space<vmem>>, vector<1x64xf32>
    %cst_157 = arith.constant dense<0.000000e+00> : vector<2xf32>
    %397 = vector.multi_reduction <add>, %394, %cst_157 [1] : vector<2x64xf32> to vector<2xf32>
    %398 = vector.shape_cast %397 : vector<2xf32> to vector<2x1xf32>
    %399 = arith.mulf %394, %394 : vector<2x64xf32>
    %cst_158 = arith.constant dense<0.000000e+00> : vector<2xf32>
    %400 = vector.multi_reduction <add>, %399, %cst_158 [1] : vector<2x64xf32> to vector<2xf32>
    %401 = vector.shape_cast %400 : vector<2xf32> to vector<2x1xf32>
    %cst_159 = arith.constant 1.562500e-02 : f32
    %402 = vector.broadcast %cst_159 : f32 to vector<2x1xf32>
    %403 = arith.mulf %398, %402 : vector<2x1xf32>
    %cst_160 = arith.constant 1.562500e-02 : f32
    %404 = vector.broadcast %cst_160 : f32 to vector<2x1xf32>
    %405 = arith.mulf %401, %404 : vector<2x1xf32>
    %406 = arith.mulf %403, %403 : vector<2x1xf32>
    %407 = arith.subf %405, %406 : vector<2x1xf32>
    %408 = vector.broadcast %403 : vector<2x1xf32> to vector<2x64xf32>
    %409 = arith.subf %394, %408 : vector<2x64xf32>
    %cst_161 = arith.constant 9.99999974E-6 : f32
    %410 = vector.broadcast %cst_161 : f32 to vector<2x1xf32>
    %411 = arith.addf %407, %410 : vector<2x1xf32>
    %412 = math.rsqrt %411 : vector<2x1xf32>
    %413 = vector.broadcast %412 : vector<2x1xf32> to vector<2x64xf32>
    %414 = arith.mulf %409, %413 : vector<2x64xf32>
    %415 = vector.broadcast %395 : vector<1x64xf32> to vector<2x64xf32>
    %416 = arith.mulf %414, %415 : vector<2x64xf32>
    %417 = vector.broadcast %396 : vector<1x64xf32> to vector<2x64xf32>
    %418 = arith.addf %416, %417 : vector<2x64xf32>
    %419 = arith.truncf %418 : vector<2x64xf32> to vector<2x64xbf16>
    %c0_162 = arith.constant 0 : index
    %c0_163 = arith.constant 0 : index
    %420 = vector.load %arg18[%c0_162, %c0_163] : memref<64x32xbf16, #tpu.memory_space<vmem>>, vector<64x32xbf16>
    %cst_164 = arith.constant dense<0.000000e+00> : vector<2x32xf32>
    %421 = tpu.matmul %419, %420, %cst_164 {dimension_numbers = #tpu.dot_dimension_numbers<[1], [0], [0], [1], [0, 0, 1, 1], [], []>} : vector<2x64xbf16>, vector<64x32xbf16>, vector<2x32xf32> -> vector<2x32xf32>
    %c0_165 = arith.constant 0 : index
    %c0_166 = arith.constant 0 : index
    %422 = vector.load %arg19[%c0_165, %c0_166] : memref<2x32xf32, #tpu.memory_space<vmem>>, vector<2x32xf32>
    tpu.vector_store %arg19[%c0_165, %c0_166], %421 {strides = array<i32>} : memref<2x32xf32, #tpu.memory_space<vmem>>, vector<2x32xf32>,
    return
  }
  func.func @transform_0(%arg0: i32, %arg1: memref<2xi32, #tpu.memory_space<smem>>) -> (i32, i32) {
    %c0_i32 = arith.constant 0 : i32
    %c0_i32_0 = arith.constant 0 : i32
    return %arg0, %c0_i32 : i32, i32
  }
  func.func @transform_1(%arg0: i32, %arg1: memref<2xi32, #tpu.memory_space<smem>>) -> (i32, i32) {
    %c0_i32 = arith.constant 0 : i32
    %c0_i32_0 = arith.constant 0 : i32
    %c0_i32_1 = arith.constant 0 : i32
    return %c0_i32, %c0_i32_0 : i32, i32
  }
  func.func @transform_2(%arg0: i32, %arg1: memref<2xi32, #tpu.memory_space<smem>>) -> (i32, i32, i32) {
    %c0_i32 = arith.constant 0 : i32
    %c0_i32_0 = arith.constant 0 : i32
    %c0_i32_1 = arith.constant 0 : i32
    %c0_i32_2 = arith.constant 0 : i32
    return %c0_i32, %c0_i32_0, %c0_i32_1 : i32, i32, i32
  }
  func.func @transform_3(%arg0: i32, %arg1: memref<2xi32, #tpu.memory_space<smem>>) -> (i32, i32, i32) {
    %c0_i32 = arith.constant 0 : i32
    %c0_i32_0 = arith.constant 0 : i32
    %c0_i32_1 = arith.constant 0 : i32
    %c0_i32_2 = arith.constant 0 : i32
    return %c0_i32, %c0_i32_0, %c0_i32_1 : i32, i32, i32
  }
  func.func @transform_4(%arg0: i32, %arg1: memref<2xi32, #tpu.memory_space<smem>>) -> (i32, i32, i32) {
    %c0_i32 = arith.constant 0 : i32
    %c0_i32_0 = arith.constant 0 : i32
    %c0_i32_1 = arith.constant 0 : i32
    %c0_i32_2 = arith.constant 0 : i32
    return %c0_i32, %c0_i32_0, %c0_i32_1 : i32, i32, i32
  }
  func.func @transform_5(%arg0: i32, %arg1: memref<2xi32, #tpu.memory_space<smem>>) -> (i32, i32, i32) {
    %c0_i32 = arith.constant 0 : i32
    %c0_i32_0 = arith.constant 0 : i32
    %c0_i32_1 = arith.constant 0 : i32
    %c0_i32_2 = arith.constant 0 : i32
    return %c0_i32, %c0_i32_0, %c0_i32_1 : i32, i32, i32
  }
  func.func @transform_6(%arg0: i32, %arg1: memref<2xi32, #tpu.memory_space<smem>>) -> (i32, i32, i32) {
    %c0_i32 = arith.constant 0 : i32
    %c0_i32_0 = arith.constant 0 : i32
    %c0_i32_1 = arith.constant 0 : i32
    %c0_i32_2 = arith.constant 0 : i32
    return %c0_i32, %c0_i32_0, %c0_i32_1 : i32, i32, i32
  }
  func.func @transform_7(%arg0: i32, %arg1: memref<2xi32, #tpu.memory_space<smem>>) -> (i32, i32, i32) {
    %c0_i32 = arith.constant 0 : i32
    %c0_i32_0 = arith.constant 0 : i32
    %c0_i32_1 = arith.constant 0 : i32
    %c0_i32_2 = arith.constant 0 : i32
    return %c0_i32, %c0_i32_0, %c0_i32_1 : i32, i32, i32
  }
  func.func @transform_8(%arg0: i32, %arg1: memref<2xi32, #tpu.memory_space<smem>>) -> (i32, i32, i32) {
    %c0_i32 = arith.constant 0 : i32
    %c0_i32_0 = arith.constant 0 : i32
    %c0_i32_1 = arith.constant 0 : i32
    %c0_i32_2 = arith.constant 0 : i32
    return %c0_i32, %c0_i32_0, %c0_i32_1 : i32, i32, i32
  }
  func.func @transform_9(%arg0: i32, %arg1: memref<2xi32, #tpu.memory_space<smem>>) -> (i32, i32, i32) {
    %c0_i32 = arith.constant 0 : i32
    %c0_i32_0 = arith.constant 0 : i32
    %c0_i32_1 = arith.constant 0 : i32
    %c0_i32_2 = arith.constant 0 : i32
    return %c0_i32, %c0_i32_0, %c0_i32_1 : i32, i32, i32
  }
  func.func @transform_10(%arg0: i32, %arg1: memref<2xi32, #tpu.memory_space<smem>>) -> (i32, i32, i32) {
    %c0_i32 = arith.constant 0 : i32
    %c0_i32_0 = arith.constant 0 : i32
    %c0_i32_1 = arith.constant 0 : i32
    %c0_i32_2 = arith.constant 0 : i32
    return %c0_i32, %c0_i32_0, %c0_i32_1 : i32, i32, i32
  }
  func.func @transform_11(%arg0: i32, %arg1: memref<2xi32, #tpu.memory_space<smem>>) -> (i32, i32, i32) {
    %c0_i32 = arith.constant 0 : i32
    %c0_i32_0 = arith.constant 0 : i32
    %c0_i32_1 = arith.constant 0 : i32
    %c0_i32_2 = arith.constant 0 : i32
    return %c0_i32, %c0_i32_0, %c0_i32_1 : i32, i32, i32
  }
  func.func @transform_12(%arg0: i32, %arg1: memref<2xi32, #tpu.memory_space<smem>>) -> (i32, i32, i32) {
    %c0_i32 = arith.constant 0 : i32
    %c0_i32_0 = arith.constant 0 : i32
    %c0_i32_1 = arith.constant 0 : i32
    %c0_i32_2 = arith.constant 0 : i32
    return %c0_i32, %c0_i32_0, %c0_i32_1 : i32, i32, i32
  }
  func.func @transform_13(%arg0: i32, %arg1: memref<2xi32, #tpu.memory_space<smem>>) -> (i32, i32, i32) {
    %c0_i32 = arith.constant 0 : i32
    %c0_i32_0 = arith.constant 0 : i32
    %c0_i32_1 = arith.constant 0 : i32
    %c0_i32_2 = arith.constant 0 : i32
    return %c0_i32, %c0_i32_0, %c0_i32_1 : i32, i32, i32
  }
  func.func @transform_14(%arg0: i32, %arg1: memref<2xi32, #tpu.memory_space<smem>>) -> (i32, i32) {
    %c0_i32 = arith.constant 0 : i32
    %c0_i32_0 = arith.constant 0 : i32
    %c0_i32_1 = arith.constant 0 : i32
    return %c0_i32, %c0_i32_0 : i32, i32
  }
  func.func @transform_15(%arg0: i32, %arg1: memref<2xi32, #tpu.memory_space<smem>>) -> (i32, i32) {
    %c0_i32 = arith.constant 0 : i32
    %c0_i32_0 = arith.constant 0 : i32
    %c0_i32_1 = arith.constant 0 : i32
    return %c0_i32, %c0_i32_0 : i32, i32
  }
  func.func @transform_16(%arg0: i32, %arg1: memref<2xi32, #tpu.memory_space<smem>>) -> (i32, i32) {
    %c0_i32 = arith.constant 0 : i32
    %c0_i32_0 = arith.constant 0 : i32
    %c0_i32_1 = arith.constant 0 : i32
    return %c0_i32, %c0_i32_0 : i32, i32
  }
  func.func @transform_17(%arg0: i32, %arg1: memref<2xi32, #tpu.memory_space<smem>>) -> (i32, i32) {
    %c0_i32 = arith.constant 0 : i32
    %c0_i32_0 = arith.constant 0 : i32
    return %arg0, %c0_i32 : i32, i32
  }
}

</mosaic_0001>

<llo_original>
// kernel: clip_forward.5
$region0: #{clip_forward.5}
  #allocation0 [shape = 'u32[]', space=smem, size = 0x4, offset = 0x4, fixed_abs, tag = 'smem constant byte address 0x4 - core index']
  #allocation1 [shape = 'u32[144,128]{1,0:T(1,128)}', space=vmem, size = 0x12000, scoped, tag = 'internal scratch']
  #allocation2 [shape = 'f32[1,1]{1,0:T(1,128)S(6)}', space=smem, size = 0x200, scoped, tag = 'scoped memory for clip_forward.5']
  %s0 = inlined_call_operand.vmem [shape: f32[2,32], index: 0, kind: input, shape index: {}]
  %s1 = inlined_call_operand.vmem [shape: f32[2,32], index: 1, kind: input, shape index: {}]
  %s2 = inlined_call_operand.<no memory space> [shape: f32[1,1], index: 2, kind: input, shape index: {}]
  %s3 = inlined_call_operand.vmem [shape: f32[2,2], index: 3, kind: output, shape index: {}]
  %s4 = sld [smem:[#allocation0]]
  $region22: #{clip_forward.5} parent=0
    _
  %s6 = ssub.s32 1, %s4
  %s7 = scalar_select 0, %s6, %s4
  %8 = sst [smem:[#allocation2]] %s2
  // Predicated region
  $region2: #{clip_forward.5} parent=0 // pred_check
    _
  $region3: #{clip_forward.5} parent=0 // pred_check_branch
    %10 = sbr.rel (0) target = $region5
  $region4: #{clip_forward.5} parent=0 // pred_region
    _
  $region5: #{clip_forward.5} parent=0 // pred_fallthru
    _
  // Predicated region
  $region6: #{clip_forward.5} parent=0 // pred_check
    _
  $region7: #{clip_forward.5} parent=0 // pred_check_branch
    %12 = sbr.rel (0) target = $region9
  $region8: #{clip_forward.5} parent=0 // pred_region
    _
  $region9: #{clip_forward.5} parent=0 // pred_fallthru
    _
  // Predicated region
  $region10: #{clip_forward.5} parent=0 // pred_check
    _
  $region11: #{clip_forward.5} parent=0 // pred_check_branch
    %14 = sbr.rel (0) target = $region13
  $region12: #{clip_forward.5} parent=0 // pred_region
    _
  $region13: #{clip_forward.5} parent=0 // pred_fallthru
    _
  %v15 = vld [vmem:[%s0] sm:$0x3]
  %v16 = vld [vmem:[%s1] sm:$0x3]
  %v17 = vmul.f32 %v15, %v15
  %vm18 = vcmask 254976
  %v19 = vsel %vm18, %v17, 0.0
  %20 = vadd.xlane.f32.xlu0 %v19
  %v21 = vpop.xlane.xlu0 %20
  %v22 = vrsqrt.pop %v21
  %v23 = vmul.f32 %v15, %v22
  %v24 = vmul.f32 %v16, %v16
  %v25 = vsel %vm18, %v24, 0.0
  %26 = vadd.xlane.f32.xlu0 %v25
  %v27 = vpop.xlane.xlu0 %26
  %v28 = vrsqrt.pop %v27
  %v29 = vmul.f32 %v16, %v28
  %s30 = sld [smem:[#allocation2]]
  %v31 = vstv %s30
  %v32 = vmul.f32 %v31, 1.442695
  %v33 = vpow.pop %v32
  %s34 = vtos %v33
  %vm35 = vcmask 261120
  %v37 = vsel %vm35, %v23, 0
  %v40 = vsel %vm35, %v29, 0
  %42 = vmatprep.subr.mxu0 0.0
  %43 = vmatpush1.xpose.msra.mxu0 0.0
  %44 = vmatprep.subr.mxu0 0.0
  %45 = vmatpush1.xpose.msra.mxu0 0.0
  %46 = vmatprep.subr.mxu0 0.0
  %47 = vmatpush1.xpose.msra.mxu0 0.0
  %48 = vmatprep.subr.mxu0 0.0
  %49 = vmatpush1.xpose.msra.mxu0 0.0
  %50 = vmatprep.subr.mxu0 0.0
  %51 = vmatpush1.xpose.msra.mxu0 0.0
  %52 = vmatprep.subr.mxu0 0.0
  %53 = vmatpush1.xpose.msra.mxu0 0.0
  %54 = vmatprep.subr.mxu0 0.0
  %55 = vmatpush1.xpose.msra.mxu0 0.0
  %56 = vmatprep.subr.mxu0 0.0
  %57 = vmatpush1.xpose.msra.mxu0 0.0
  %58 = vmatprep.subr.mxu0 0.0
  %59 = vmatpush1.xpose.msra.mxu0 0.0
  %60 = vmatprep.subr.mxu0 0.0
  %61 = vmatpush1.xpose.msra.mxu0 0.0
  %62 = vmatprep.subr.mxu0 0.0
  %63 = vmatpush1.xpose.msra.mxu0 0.0
  %64 = vmatprep.subr.mxu0 0.0
  %65 = vmatpush1.xpose.msra.mxu0 0.0
  %66 = vmatprep.subr.mxu0 0.0
  %67 = vmatpush1.xpose.msra.mxu0 0.0
  %68 = vmatprep.subr.mxu0 0.0
  %69 = vmatpush1.xpose.msra.mxu0 0.0
  %70 = vmatprep.subr.mxu0 0.0
  %71 = vmatpush1.xpose.msra.mxu0 0.0
  %72 = vmatprep.subr.mxu0 0.0
  %73 = vmatpush1.xpose.msra.mxu0 %v40
  %74 = vmatprep.subr.mxu0 0.0
  %75 = vmatpush2.xpose.msra.mxu0 0.0
  %76 = vmatprep.subr.mxu0 0.0
  %77 = vmatpush2.xpose.msra.mxu0 0.0
  %78 = vmatprep.subr.mxu0 0.0
  %79 = vmatpush2.xpose.msra.mxu0 0.0
  %80 = vmatprep.subr.mxu0 0.0
  %81 = vmatpush2.xpose.msra.mxu0 0.0
  %82 = vmatprep.subr.mxu0 0.0
  %83 = vmatpush2.xpose.msra.mxu0 0.0
  %84 = vmatprep.subr.mxu0 0.0
  %85 = vmatpush2.xpose.msra.mxu0 0.0
  %86 = vmatprep.subr.mxu0 0.0
  %87 = vmatpush2.xpose.msra.mxu0 0.0
  %88 = vmatprep.subr.mxu0 0.0
  %89 = vmatpush2.xpose.msra.mxu0 0.0
  %90 = vmatprep.subr.mxu0 0.0
  %91 = vmatpush2.xpose.msra.mxu0 0.0
  %92 = vmatprep.subr.mxu0 0.0
  %93 = vmatpush2.xpose.msra.mxu0 0.0
  %94 = vmatprep.subr.mxu0 0.0
  %95 = vmatpush2.xpose.msra.mxu0 0.0
  %96 = vmatprep.subr.mxu0 0.0
  %97 = vmatpush2.xpose.msra.mxu0 0.0
  %98 = vmatprep.subr.mxu0 0.0
  %99 = vmatpush2.xpose.msra.mxu0 0.0
  %100 = vmatprep.subr.mxu0 0.0
  %101 = vmatpush2.xpose.msra.mxu0 0.0
  %102 = vmatprep.subr.mxu0 0.0
  %103 = vmatpush2.xpose.msra.mxu0 0.0
  %104 = vmatprep.subr.mxu0 0.0
  %105 = vmatpush2.xpose.msra.mxu0 0.0
  %106 = vmatprep.mubr.f32.mxu0 0.0
  %107 = vmatmul.mubr.f32.gmra.mxu0 %v37
  %v108 = vpop.f32.mrf.mxu0
  %v109 = vadd.f32 0.0, %v108
  %v110 = vpop.f32.mrf.mxu0
  %111 = vdwg.mxu0
  %v112 = vstv %s34
  %v113 = vmul.f32 %v112, %v109
  %vm114 = vcmask 9216
  %115 = vst.msk [vmem:[%s3] sm:$0x3] %vm114, %v113
  // Predicated region
  $region14: #{clip_forward.5} parent=0 // pred_check
    _
  $region15: #{clip_forward.5} parent=0 // pred_check_branch
    %117 = sbr.rel (0) target = $region17
  $region16: #{clip_forward.5} parent=0 // pred_region
    _
  $region17: #{clip_forward.5} parent=0 // pred_fallthru
    _
  // Predicated region
  $region18: #{clip_forward.5} parent=0 // pred_check
    _
  $region19: #{clip_forward.5} parent=0 // pred_check_branch
    %119 = sbr.rel (0) target = $region21
  $region20: #{clip_forward.5} parent=0 // pred_region
    _
  $region21: #{clip_forward.5} parent=0 // pred_fallthru
    _

// kernel: clip_forward.3
$region0: #{clip_forward.3}
  #allocation0 [shape = 'u32[]', space=smem, size = 0x4, offset = 0x4, fixed_abs, tag = 'smem constant byte address 0x4 - core index']
  #allocation1 [shape = 'u32[144,128]{1,0:T(1,128)}', space=vmem, size = 0x12000, scoped, tag = 'internal scratch']
  %s0 = inlined_call_operand.vmem [shape: bf16[16,192], index: 0, kind: input, shape index: {}]
  %s1 = inlined_call_operand.vmem [shape: bf16[192,64], index: 1, kind: input, shape index: {}]
  %s2 = inlined_call_operand.vmem [shape: f32[16,64], index: 2, kind: input, shape index: {}]
  %s3 = inlined_call_operand.vmem [shape: f32[1,64], index: 3, kind: input, shape index: {}]
  %s4 = inlined_call_operand.vmem [shape: f32[1,64], index: 4, kind: input, shape index: {}]
  %s5 = inlined_call_operand.vmem [shape: f32[2,1,64], index: 5, kind: input, shape index: {}]
  %s6 = inlined_call_operand.vmem [shape: f32[2,1,64], index: 6, kind: input, shape index: {}]
  %s7 = inlined_call_operand.vmem [shape: bf16[2,64,192], index: 7, kind: input, shape index: {}]
  %s8 = inlined_call_operand.vmem [shape: f32[2,1,192], index: 8, kind: input, shape index: {}]
  %s9 = inlined_call_operand.vmem [shape: bf16[2,64,64], index: 9, kind: input, shape index: {}]
  %s10 = inlined_call_operand.vmem [shape: f32[2,1,64], index: 10, kind: input, shape index: {}]
  %s11 = inlined_call_operand.vmem [shape: f32[2,1,64], index: 11, kind: input, shape index: {}]
  %s12 = inlined_call_operand.vmem [shape: f32[2,1,64], index: 12, kind: input, shape index: {}]
  %s13 = inlined_call_operand.vmem [shape: bf16[2,64,256], index: 13, kind: input, shape index: {}]
  %s14 = inlined_call_operand.vmem [shape: f32[2,1,256], index: 14, kind: input, shape index: {}]
  %s15 = inlined_call_operand.vmem [shape: bf16[2,256,64], index: 15, kind: input, shape index: {}]
  %s16 = inlined_call_operand.vmem [shape: f32[2,1,64], index: 16, kind: input, shape index: {}]
  %s17 = inlined_call_operand.vmem [shape: f32[1,64], index: 17, kind: input, shape index: {}]
  %s18 = inlined_call_operand.vmem [shape: f32[1,64], index: 18, kind: input, shape index: {}]
  %s19 = inlined_call_operand.vmem [shape: bf16[64,32], index: 19, kind: input, shape index: {}]
  %s20 = inlined_call_operand.vmem [shape: f32[2,32], index: 20, kind: output, shape index: {}]
  %s21 = sld [smem:[#allocation0]]
  $region90: #{clip_forward.3} parent=0
    _
  %s23 = ssub.s32 1, %s21
  %s24 = scalar_select 0, %s23, %s21
  // Predicated region
  $region2: #{clip_forward.3} parent=0 // pred_check
    _
  $region3: #{clip_forward.3} parent=0 // pred_check_branch
    %26 = sbr.rel (0) target = $region5
  $region4: #{clip_forward.3} parent=0 // pred_region
    _
  $region5: #{clip_forward.3} parent=0 // pred_fallthru
    _
  // Predicated region
  $region6: #{clip_forward.3} parent=0 // pred_check
    _
  $region7: #{clip_forward.3} parent=0 // pred_check_branch
    %28 = sbr.rel (0) target = $region9
  $region8: #{clip_forward.3} parent=0 // pred_region
    _
  $region9: #{clip_forward.3} parent=0 // pred_fallthru
    _
  // Predicated region
  $region10: #{clip_forward.3} parent=0 // pred_check
    _
  $region11: #{clip_forward.3} parent=0 // pred_check_branch
    %30 = sbr.rel (0) target = $region13
  $region12: #{clip_forward.3} parent=0 // pred_region
    _
  $region13: #{clip_forward.3} parent=0 // pred_fallthru
    _
  // Predicated region
  $region14: #{clip_forward.3} parent=0 // pred_check
    _
  $region15: #{clip_forward.3} parent=0 // pred_check_branch
    %32 = sbr.rel (0) target = $region17
  $region16: #{clip_forward.3} parent=0 // pred_region
    _
  $region17: #{clip_forward.3} parent=0 // pred_fallthru
    _
  // Predicated region
  $region18: #{clip_forward.3} parent=0 // pred_check
    _
  $region19: #{clip_forward.3} parent=0 // pred_check_branch
    %34 = sbr.rel (0) target = $region21
  $region20: #{clip_forward.3} parent=0 // pred_region
    _
  $region21: #{clip_forward.3} parent=0 // pred_fallthru
    _
  // Predicated region
  $region22: #{clip_forward.3} parent=0 // pred_check
    _
  $region23: #{clip_forward.3} parent=0 // pred_check_branch
    %36 = sbr.rel (0) target = $region25
  $region24: #{clip_forward.3} parent=0 // pred_region
    _
  $region25: #{clip_forward.3} parent=0 // pred_fallthru
    _
  // Predicated region
  $region26: #{clip_forward.3} parent=0 // pred_check
    _
  $region27: #{clip_forward.3} parent=0 // pred_check_branch
    %38 = sbr.rel (0) target = $region29
  $region28: #{clip_forward.3} parent=0 // pred_region
    _
  $region29: #{clip_forward.3} parent=0 // pred_fallthru
    _
  // Predicated region
  $region30: #{clip_forward.3} parent=0 // pred_check
    _
  $region31: #{clip_forward.3} parent=0 // pred_check_branch
    %40 = sbr.rel (0) target = $region33
  $region32: #{clip_forward.3} parent=0 // pred_region
    _
  $region33: #{clip_forward.3} parent=0 // pred_fallthru
    _
  // Predicated region
  $region34: #{clip_forward.3} parent=0 // pred_check
    _
  $region35: #{clip_forward.3} parent=0 // pred_check_branch
    %42 = sbr.rel (0) target = $region37
  $region36: #{clip_forward.3} parent=0 // pred_region
    _
  $region37: #{clip_forward.3} parent=0 // pred_fallthru
    _
  // Predicated region
  $region38: #{clip_forward.3} parent=0 // pred_check
    _
  $region39: #{clip_forward.3} parent=0 // pred_check_branch
    %44 = sbr.rel (0) target = $region41
  $region40: #{clip_forward.3} parent=0 // pred_region
    _
  $region41: #{clip_forward.3} parent=0 // pred_fallthru
    _
  // Predicated region
  $region42: #{clip_forward.3} parent=0 // pred_check
    _
  $region43: #{clip_forward.3} parent=0 // pred_check_branch
    %46 = sbr.rel (0) target = $region45
  $region44: #{clip_forward.3} parent=0 // pred_region
    _
  $region45: #{clip_forward.3} parent=0 // pred_fallthru
    _
  // Predicated region
  $region46: #{clip_forward.3} parent=0 // pred_check
    _
  $region47: #{clip_forward.3} parent=0 // pred_check_branch
    %48 = sbr.rel (0) target = $region49
  $region48: #{clip_forward.3} parent=0 // pred_region
    _
  $region49: #{clip_forward.3} parent=0 // pred_fallthru
    _
  // Predicated region
  $region50: #{clip_forward.3} parent=0 // pred_check
    _
  $region51: #{clip_forward.3} parent=0 // pred_check_branch
    %50 = sbr.rel (0) target = $region53
  $region52: #{clip_forward.3} parent=0 // pred_region
    _
  $region53: #{clip_forward.3} parent=0 // pred_fallthru
    _
  // Predicated region
  $region54: #{clip_forward.3} parent=0 // pred_check
    _
  $region55: #{clip_forward.3} parent=0 // pred_check_branch
    %52 = sbr.rel (0) target = $region57
  $region56: #{clip_forward.3} parent=0 // pred_region
    _
  $region57: #{clip_forward.3} parent=0 // pred_fallthru
    _
  // Predicated region
  $region58: #{clip_forward.3} parent=0 // pred_check
    _
  $region59: #{clip_forward.3} parent=0 // pred_check_branch
    %54 = sbr.rel (0) target = $region61
  $region60: #{clip_forward.3} parent=0 // pred_region
    _
  $region61: #{clip_forward.3} parent=0 // pred_fallthru
    _
  // Predicated region
  $region62: #{clip_forward.3} parent=0 // pred_check
    _
  $region63: #{clip_forward.3} parent=0 // pred_check_branch
    %56 = sbr.rel (0) target = $region65
  $region64: #{clip_forward.3} parent=0 // pred_region
    _
  $region65: #{clip_forward.3} parent=0 // pred_fallthru
    _
  // Predicated region
  $region66: #{clip_forward.3} parent=0 // pred_check
    _
  $region67: #{clip_forward.3} parent=0 // pred_check_branch
    %58 = sbr.rel (0) target = $region69
  $region68: #{clip_forward.3} parent=0 // pred_region
    _
  $region69: #{clip_forward.3} parent=0 // pred_fallthru
    _
  // Predicated region
  $region70: #{clip_forward.3} parent=0 // pred_check
    _
  $region71: #{clip_forward.3} parent=0 // pred_check_branch
    %60 = sbr.rel (0) target = $region73
  $region72: #{clip_forward.3} parent=0 // pred_region
    _
  $region73: #{clip_forward.3} parent=0 // pred_fallthru
    _
  // Predicated region
  $region74: #{clip_forward.3} parent=0 // pred_check
    _
  $region75: #{clip_forward.3} parent=0 // pred_check_branch
    %62 = sbr.rel (0) target = $region77
  $region76: #{clip_forward.3} parent=0 // pred_region
    _
  $region77: #{clip_forward.3} parent=0 // pred_fallthru
    _
  // Predicated region
  $region78: #{clip_forward.3} parent=0 // pred_check
    _
  $region79: #{clip_forward.3} parent=0 // pred_check_branch
    %64 = sbr.rel (0) target = $region81
  $region80: #{clip_forward.3} parent=0 // pred_region
    _
  $region81: #{clip_forward.3} parent=0 // pred_fallthru
    _
  %v66 = vld [vmem:[%s0] sm:$0xff]
  %v67 = vld [vmem:[%s0 + $0x8] sm:$0xff]
  %v68 = vld [vmem:[%s1] sm:$0xf]
  %v69 = vld [vmem:[%s1 + $0x4] sm:$0xf]
  %v70 = vld [vmem:[%s1 + $0x8] sm:$0xf]
  %v71 = vld [vmem:[%s1 + $0xc] sm:$0xf]
  %v72 = vld [vmem:[%s1 + $0x10] sm:$0xf]
  %v73 = vld [vmem:[%s1 + $0x14] sm:$0xf]
  %v74 = vld [vmem:[%s1 + $0x18] sm:$0xf]
  %v75 = vld [vmem:[%s1 + $0x1c] sm:$0xf]
  %v76 = vld [vmem:[%s1 + $0x20] sm:$0xf]
  %v77 = vld [vmem:[%s1 + $0x24] sm:$0xf]
  %v78 = vld [vmem:[%s1 + $0x28] sm:$0xf]
  %v79 = vld [vmem:[%s1 + $0x2c] sm:$0xf]
  %v80 = vld [vmem:[%s1 + $0x30] sm:$0xf]
  %v81 = vld [vmem:[%s1 + $0x34] sm:$0xf]
  %v82 = vld [vmem:[%s1 + $0x38] sm:$0xf]
  %v83 = vld [vmem:[%s1 + $0x3c] sm:$0xf]
  %v84 = vld [vmem:[%s1 + $0x40] sm:$0xf]
  %v85 = vld [vmem:[%s1 + $0x44] sm:$0xf]
  %v86 = vld [vmem:[%s1 + $0x48] sm:$0xf]
  %v87 = vld [vmem:[%s1 + $0x4c] sm:$0xf]
  %v88 = vld [vmem:[%s1 + $0x50] sm:$0xf]
  %v89 = vld [vmem:[%s1 + $0x54] sm:$0xf]
  %v90 = vld [vmem:[%s1 + $0x58] sm:$0xf]
  %v91 = vld [vmem:[%s1 + $0x5c] sm:$0xf]
  %v92 = vld [vmem:[%s2] sm:$0xff]
  %v93 = vld [vmem:[%s2 + $0x8] sm:$0xff]
  %v96 = vunpack.c.l.b16 %v66
  %v97 = vunpack.c.h.b16 %v66
  %v98 = vunpack.c.l.b16 %v67
  %v99 = vunpack.c.h.b16 %v67
  %v100 = vpack.c.b16 %v98, %v96
  %v101 = vpack.c.b16 %v99, %v97
  %v127 = vunpack.c.l.b16 %v68
  %v128 = vunpack.c.l.b16 %v69
  %v129 = vunpack.c.l.b16 %v70
  %v130 = vunpack.c.l.b16 %v71
  %v131 = vunpack.c.l.b16 %v72
  %v132 = vunpack.c.l.b16 %v73
  %v133 = vunpack.c.l.b16 %v74
  %v134 = vunpack.c.l.b16 %v75
  %v135 = vunpack.c.l.b16 %v76
  %v136 = vunpack.c.l.b16 %v77
  %v137 = vunpack.c.l.b16 %v78
  %v138 = vunpack.c.l.b16 %v79
  %v139 = vunpack.c.l.b16 %v80
  %v140 = vunpack.c.l.b16 %v81
  %v141 = vunpack.c.l.b16 %v82
  %v142 = vunpack.c.l.b16 %v83
  %v143 = vunpack.c.l.b16 %v84
  %v144 = vunpack.c.l.b16 %v85
  %v145 = vunpack.c.l.b16 %v86
  %v146 = vunpack.c.l.b16 %v87
  %v147 = vunpack.c.l.b16 %v88
  %v148 = vunpack.c.l.b16 %v89
  %v149 = vunpack.c.l.b16 %v90
  %v150 = vunpack.c.l.b16 %v91
  %v151 = vpack.c.b16 %v128, %v127
  %v152 = vpack.c.b16 %v130, %v129
  %v153 = vpack.c.b16 %v132, %v131
  %v154 = vpack.c.b16 %v134, %v133
  %v155 = vpack.c.b16 %v136, %v135
  %v156 = vpack.c.b16 %v138, %v137
  %v157 = vpack.c.b16 %v140, %v139
  %v158 = vpack.c.b16 %v142, %v141
  %v159 = vpack.c.b16 %v144, %v143
  %v160 = vpack.c.b16 %v146, %v145
  %v161 = vpack.c.b16 %v148, %v147
  %v162 = vpack.c.b16 %v150, %v149
  %vm175 = vcmask 523264
  %v177 = vsel %vm175, %v101, 0
  %179 = vmatprep.subr.bf16.mxu0 0
  %180 = vmatpush1.bf16.msra.mxu0 %v158
  %181 = vmatprep.subr.bf16.mxu0 0
  %182 = vmatpush1.bf16.msra.mxu0 %v157
  %183 = vmatprep.subr.bf16.mxu0 0
  %184 = vmatpush1.bf16.msra.mxu0 %v156
  %185 = vmatprep.subr.bf16.mxu0 0
  %186 = vmatpush1.bf16.msra.mxu0 %v155
  %187 = vmatprep.subr.bf16.mxu0 0
  %188 = vmatpush1.bf16.msra.mxu0 %v154
  %189 = vmatprep.subr.bf16.mxu0 0
  %190 = vmatpush1.bf16.msra.mxu0 %v153
  %191 = vmatprep.subr.bf16.mxu0 0
  %192 = vmatpush1.bf16.msra.mxu0 %v152
  %193 = vmatprep.subr.bf16.mxu0 0
  %194 = vmatpush1.bf16.msra.mxu0 %v151
  %195 = vmatprep.subr.bf16.mxu0 0
  %196 = vmatpush2.bf16.msra.mxu0 0
  %197 = vmatprep.subr.bf16.mxu0 0
  %198 = vmatpush2.bf16.msra.mxu0 0
  %199 = vmatprep.subr.bf16.mxu0 0
  %200 = vmatpush2.bf16.msra.mxu0 0
  %201 = vmatprep.subr.bf16.mxu0 0
  %202 = vmatpush2.bf16.msra.mxu0 0
  %203 = vmatprep.subr.bf16.mxu0 0
  %204 = vmatpush2.bf16.msra.mxu0 %v162
  %205 = vmatprep.subr.bf16.mxu0 0
  %206 = vmatpush2.bf16.msra.mxu0 %v161
  %207 = vmatprep.subr.bf16.mxu0 0
  %208 = vmatpush2.bf16.msra.mxu0 %v160
  %209 = vmatprep.subr.bf16.mxu0 0
  %210 = vmatpush2.bf16.msra.mxu0 %v159
  %211 = vmatprep.mubr.bf16.mxu0 %v177
  %212 = vmatmul.mubr.bf16.gmra.mxu0 %v100
  %v213 = vpop.f32.mrf.mxu0
  %v214 = vadd.f32 %v92, %v213
  %v215 = vpop.f32.mrf.mxu0
  %v216 = vpop.f32.mrf.mxu0
  %v217 = vadd.f32 %v93, %v216
  %v218 = vpop.f32.mrf.mxu0
  %219 = vdwg.mxu0
  %v220 = vld [vmem:[%s3] sm:$0x1]
  %v221 = vld [vmem:[%s4] sm:$0x1]
  %v222 = vsel %vm175, %v214, 0.0
  %223 = vadd.xlane.f32.xlu0 %v222
  %v224 = vpop.xlane.xlu0 %223
  %v225 = vsel %vm175, %v217, 0.0
  %226 = vadd.xlane.f32.xlu0 %v225
  %v227 = vpop.xlane.xlu0 %226
  %v228 = vmul.f32 %v214, %v214
  %v229 = vmul.f32 %v217, %v217
  %v230 = vsel %vm175, %v228, 0.0
  %231 = vadd.xlane.f32.xlu0 %v230
  %v232 = vpop.xlane.xlu0 %231
  %v233 = vsel %vm175, %v229, 0.0
  %234 = vadd.xlane.f32.xlu0 %v233
  %v235 = vpop.xlane.xlu0 %234
  %v236 = vmul.f32 %v224, 0.015625
  %v237 = vmul.f32 %v227, 0.015625
  %v238 = vmul.f32 %v232, 0.015625
  %v239 = vmul.f32 %v235, 0.015625
  %v240 = vmul.f32 %v236, %v236
  %v241 = vmul.f32 %v237, %v237
  %v242 = vsub.f32 %v238, %v240
  %v243 = vsub.f32 %v239, %v241
  %v244 = vsub.f32 %v214, %v236
  %v245 = vsub.f32 %v217, %v237
  %v246 = vadd.f32 %v242, 1e-05
  %v247 = vadd.f32 %v243, 1e-05
  %v248 = vrsqrt.pop %v246
  %v249 = vrsqrt.pop %v247
  %v250 = vmul.f32 %v244, %v248
  %v251 = vmul.f32 %v245, %v249
  %v253 = vlaneseq
  %v254 = vshrl.u32 %v253, 7
  %v255 = vsub.s32 0, %v254
  %v256 = vrot.slane %v220, %v255
  %v258 = vmul.f32 %v250, %v256
  %v259 = vmul.f32 %v251, %v256
  %v261 = vlaneseq
  %v262 = vshrl.u32 %v261, 7
  %v263 = vsub.s32 0, %v262
  %v264 = vrot.slane %v221, %v263
  %v266 = vadd.f32 %v258, %v264
  %v267 = vadd.f32 %v259, %v264
  %v268 = vlaneseq
  %v269 = vand.u32 %v268, 127
  %vm270 = vcmp.ge.s32.totalorder %v269, 5
  %v271 = vsel %vm270, -1e+30, 0.0
  %v272 = vld [vmem:[%s5] sm:$0x1]
  %v273 = vld [vmem:[%s6] sm:$0x1]
  %v274 = vsel %vm175, %v266, 0.0
  %275 = vadd.xlane.f32.xlu0 %v274
  %v276 = vpop.xlane.xlu0 %275
  %v277 = vsel %vm175, %v267, 0.0
  %278 = vadd.xlane.f32.xlu0 %v277
  %v279 = vpop.xlane.xlu0 %278
  %v280 = vmul.f32 %v266, %v266
  %v281 = vmul.f32 %v267, %v267
  %v282 = vsel %vm175, %v280, 0.0
  %283 = vadd.xlane.f32.xlu0 %v282
  %v284 = vpop.xlane.xlu0 %283
  %v285 = vsel %vm175, %v281, 0.0
  %286 = vadd.xlane.f32.xlu0 %v285
  %v287 = vpop.xlane.xlu0 %286
  %v288 = vmul.f32 %v276, 0.015625
  %v289 = vmul.f32 %v279, 0.015625
  %v290 = vmul.f32 %v284, 0.015625
  %v291 = vmul.f32 %v287, 0.015625
  %v292 = vmul.f32 %v288, %v288
  %v293 = vmul.f32 %v289, %v289
  %v294 = vsub.f32 %v290, %v292
  %v295 = vsub.f32 %v291, %v293
  %v296 = vsub.f32 %v266, %v288
  %v297 = vsub.f32 %v267, %v289
  %v298 = vadd.f32 %v294, 1e-05
  %v299 = vadd.f32 %v295, 1e-05
  %v300 = vrsqrt.pop %v298
  %v301 = vrsqrt.pop %v299
  %v302 = vmul.f32 %v296, %v300
  %v303 = vmul.f32 %v297, %v301
  %v305 = vlaneseq
  %v306 = vshrl.u32 %v305, 7
  %v307 = vsub.s32 0, %v306
  %v308 = vrot.slane %v272, %v307
  %v310 = vmul.f32 %v302, %v308
  %v311 = vmul.f32 %v303, %v308
  %v313 = vlaneseq
  %v314 = vshrl.u32 %v313, 7
  %v315 = vsub.s32 0, %v314
  %v316 = vrot.slane %v273, %v315
  %v318 = vadd.f32 %v310, %v316
  %v319 = vadd.f32 %v311, %v316
  %v320 = vpack.c.bf16 %v319, %v318
  %v321 = vld [vmem:[%s7] sm:$0xff]
  %v322 = vld [vmem:[%s7 + $0x8] sm:$0xff]
  %v323 = vld [vmem:[%s7 + $0x10] sm:$0xff]
  %v324 = vld [vmem:[%s7 + $0x18] sm:$0xff]
  %v325 = vld [vmem:[%s7 + $0x20] sm:$0xff]
  %v326 = vld [vmem:[%s7 + $0x28] sm:$0xff]
  %v327 = vld [vmem:[%s7 + $0x30] sm:$0xff]
  %v328 = vld [vmem:[%s7 + $0x38] sm:$0xff]
  %v329 = vld [vmem:[%s8] sm:$0x3]
  %v331 = vlaneseq
  %v332 = vshrl.u32 %v331, 7
  %v333 = vsub.s32 0, %v332
  %v334 = vrot.slane %v329, %v333
  %v335 = vlaneseq
  %v336 = vshrl.u32 %v335, 7
  %v337 = vsub.s32 1, %v336
  %v338 = vrot.slane %v329, %v337
  %v349 = vunpack.c.l.b16 %v321
  %v350 = vunpack.c.h.b16 %v321
  %v351 = vunpack.c.l.b16 %v322
  %v352 = vunpack.c.h.b16 %v322
  %v353 = vunpack.c.l.b16 %v323
  %v354 = vunpack.c.h.b16 %v323
  %v355 = vunpack.c.l.b16 %v324
  %v356 = vunpack.c.h.b16 %v324
  %v357 = vunpack.c.l.b16 %v325
  %v358 = vunpack.c.h.b16 %v325
  %v359 = vunpack.c.l.b16 %v326
  %v360 = vunpack.c.h.b16 %v326
  %v361 = vunpack.c.l.b16 %v327
  %v362 = vunpack.c.h.b16 %v327
  %v363 = vunpack.c.l.b16 %v328
  %v364 = vunpack.c.h.b16 %v328
  %v365 = vpack.c.b16 %v351, %v349
  %v366 = vpack.c.b16 %v352, %v350
  %v367 = vpack.c.b16 %v355, %v353
  %v368 = vpack.c.b16 %v356, %v354
  %v369 = vpack.c.b16 %v359, %v357
  %v370 = vpack.c.b16 %v360, %v358
  %v371 = vpack.c.b16 %v363, %v361
  %v372 = vpack.c.b16 %v364, %v362
  %v382 = vsel %vm175, %v320, 0
  %384 = vmatprep.subr.bf16.mxu0 0
  %385 = vmatpush1.bf16.msra.mxu0 0
  %386 = vmatprep.subr.bf16.mxu0 0
  %387 = vmatpush1.bf16.msra.mxu0 0
  %388 = vmatprep.subr.bf16.mxu0 0
  %389 = vmatpush1.bf16.msra.mxu0 0
  %390 = vmatprep.subr.bf16.mxu0 0
  %391 = vmatpush1.bf16.msra.mxu0 0
  %392 = vmatprep.subr.bf16.mxu0 %v372
  %393 = vmatpush1.bf16.msra.mxu0 %v371
  %394 = vmatprep.subr.bf16.mxu0 %v370
  %395 = vmatpush1.bf16.msra.mxu0 %v369
  %396 = vmatprep.subr.bf16.mxu0 %v368
  %397 = vmatpush1.bf16.msra.mxu0 %v367
  %398 = vmatprep.subr.bf16.mxu0 %v366
  %399 = vmatpush1.bf16.msra.mxu0 %v365
  %400 = vmatprep.subr.bf16.mxu0 0
  %401 = vmatpush2.bf16.msra.mxu0 0
  %402 = vmatprep.subr.bf16.mxu0 0
  %403 = vmatpush2.bf16.msra.mxu0 0
  %404 = vmatprep.subr.bf16.mxu0 0
  %405 = vmatpush2.bf16.msra.mxu0 0
  %406 = vmatprep.subr.bf16.mxu0 0
  %407 = vmatpush2.bf16.msra.mxu0 0
  %408 = vmatprep.subr.bf16.mxu0 0
  %409 = vmatpush2.bf16.msra.mxu0 0
  %410 = vmatprep.subr.bf16.mxu0 0
  %411 = vmatpush2.bf16.msra.mxu0 0
  %412 = vmatprep.subr.bf16.mxu0 0
  %413 = vmatpush2.bf16.msra.mxu0 0
  %414 = vmatprep.subr.bf16.mxu0 0
  %415 = vmatpush2.bf16.msra.mxu0 0
  %416 = vmatprep.mubr.bf16.mxu0 0
  %417 = vmatmul.mubr.bf16.gmra.mxu0 %v382
  %v418 = vpop.f32.mrf.mxu0
  %v419 = vadd.f32 %v334, %v418
  %v420 = vpop.f32.mrf.mxu0
  %v421 = vadd.f32 %v338, %v420
  %v422 = vpop.f32.mrf.mxu0
  %v423 = vadd.f32 %v334, %v422
  %v424 = vpop.f32.mrf.mxu0
  %v425 = vadd.f32 %v338, %v424
  %426 = vdwg.mxu0
  %v427 = vmul.f32 %v419, 0.125
  %v428 = vpack.c.bf16 %v427, %v427
  %v429 = vpack.c.bf16 %v419, %v419
  %431 = vrot.lane.b32.xlu0 %v429, 64
  %v432 = vpop.permute.xlu0 %431
  %v434 = vsel %vm175, %v428, 0
  %v437 = vsel %vm175, %v432, 0
  %439 = vmatprep.subr.bf16.mxu0 0
  %440 = vmatpush1.bf16.xpose.msra.mxu0 0
  %441 = vmatprep.subr.bf16.mxu0 0
  %442 = vmatpush1.bf16.xpose.msra.mxu0 0
  %443 = vmatprep.subr.bf16.mxu0 0
  %444 = vmatpush1.bf16.xpose.msra.mxu0 0
  %445 = vmatprep.subr.bf16.mxu0 0
  %446 = vmatpush1.bf16.xpose.msra.mxu0 0
  %447 = vmatprep.subr.bf16.mxu0 0
  %448 = vmatpush1.bf16.xpose.msra.mxu0 0
  %449 = vmatprep.subr.bf16.mxu0 0
  %450 = vmatpush1.bf16.xpose.msra.mxu0 0
  %451 = vmatprep.subr.bf16.mxu0 0
  %452 = vmatpush1.bf16.xpose.msra.mxu0 0
  %453 = vmatprep.subr.bf16.mxu0 0
  %454 = vmatpush1.bf16.xpose.msra.mxu0 %v437
  %455 = vmatprep.subr.bf16.mxu0 0
  %456 = vmatpush2.bf16.xpose.msra.mxu0 0
  %457 = vmatprep.subr.bf16.mxu0 0
  %458 = vmatpush2.bf16.xpose.msra.mxu0 0
  %459 = vmatprep.subr.bf16.mxu0 0
  %460 = vmatpush2.bf16.xpose.msra.mxu0 0
  %461 = vmatprep.subr.bf16.mxu0 0
  %462 = vmatpush2.bf16.xpose.msra.mxu0 0
  %463 = vmatprep.subr.bf16.mxu0 0
  %464 = vmatpush2.bf16.xpose.msra.mxu0 0
  %465 = vmatprep.subr.bf16.mxu0 0
  %466 = vmatpush2.bf16.xpose.msra.mxu0 0
  %467 = vmatprep.subr.bf16.mxu0 0
  %468 = vmatpush2.bf16.xpose.msra.mxu0 0
  %469 = vmatprep.subr.bf16.mxu0 0
  %470 = vmatpush2.bf16.xpose.msra.mxu0 0
  %471 = vmatprep.mubr.bf16.mxu0 0
  %472 = vmatmul.mubr.bf16.gmra.mxu0 %v434
  %v473 = vpop.f32.mrf.mxu0
  %v474 = vadd.f32 %v271, %v473
  %v475 = vpop.f32.mrf.mxu0
  %v476 = vpop.f32.mrf.mxu0
  %v477 = vpop.f32.mrf.mxu0
  %478 = vdwg.mxu0
  %vm479 = vcmask 64512
  %v480 = vsel %vm479, %v474, -inf
  %481 = vmax.xlane.f32.xlu0 %v480
  %v482 = vpop.xlane.xlu0 %481
  %v483 = vsub.f32 %v474, %v482
  %v484 = vmul.f32 %v483, 1.442695
  %v485 = vpow.pop %v484
  %v486 = vsel %vm479, %v485, 0.0
  %487 = vadd.xlane.f32.xlu0 %v486
  %v488 = vpop.xlane.xlu0 %487
  %v489 = vrcp.pop %v488
  %v490 = vmul.f32 %v485, %v489
  %v491 = vpack.c.bf16 %v490, %v490
  %v492 = vpack.c.bf16 %v421, %v421
  %v494 = vsel %vm479, %v491, 0
  %vm496 = vcmask 1043456
  %v498 = vsel %vm496, %v492, 0
  %500 = vmatprep.subr.bf16.mxu0 0
  %501 = vmatpush1.bf16.msra.mxu0 0
  %502 = vmatprep.subr.bf16.mxu0 0
  %503 = vmatpush1.bf16.msra.mxu0 0
  %504 = vmatprep.subr.bf16.mxu0 0
  %505 = vmatpush1.bf16.msra.mxu0 0
  %506 = vmatprep.subr.bf16.mxu0 0
  %507 = vmatpush1.bf16.msra.mxu0 0
  %508 = vmatprep.subr.bf16.mxu0 0
  %509 = vmatpush1.bf16.msra.mxu0 0
  %510 = vmatprep.subr.bf16.mxu0 0
  %511 = vmatpush1.bf16.msra.mxu0 0
  %512 = vmatprep.subr.bf16.mxu0 0
  %513 = vmatpush1.bf16.msra.mxu0 0
  %514 = vmatprep.subr.bf16.mxu0 0
  %515 = vmatpush1.bf16.msra.mxu0 %v498
  %516 = vmatprep.subr.bf16.mxu0 0
  %517 = vmatpush2.bf16.msra.mxu0 0
  %518 = vmatprep.subr.bf16.mxu0 0
  %519 = vmatpush2.bf16.msra.mxu0 0
  %520 = vmatprep.subr.bf16.mxu0 0
  %521 = vmatpush2.bf16.msra.mxu0 0
  %522 = vmatprep.subr.bf16.mxu0 0
  %523 = vmatpush2.bf16.msra.mxu0 0
  %524 = vmatprep.subr.bf16.mxu0 0
  %525 = vmatpush2.bf16.msra.mxu0 0
  %526 = vmatprep.subr.bf16.mxu0 0
  %527 = vmatpush2.bf16.msra.mxu0 0
  %528 = vmatprep.subr.bf16.mxu0 0
  %529 = vmatpush2.bf16.msra.mxu0 0
  %530 = vmatprep.subr.bf16.mxu0 0
  %531 = vmatpush2.bf16.msra.mxu0 0
  %532 = vmatprep.mubr.bf16.mxu0 0
  %533 = vmatmul.mubr.bf16.gmra.mxu0 %v494
  %v534 = vpop.f32.mrf.mxu0
  %v535 = vadd.f32 0.0, %v534
  %v536 = vpop.f32.mrf.mxu0
  %v537 = vpop.f32.mrf.mxu0
  %v538 = vpop.f32.mrf.mxu0
  %539 = vdwg.mxu0
  %v540 = vmul.f32 %v423, 0.125
  %v541 = vpack.c.bf16 %v540, %v540
  %v542 = vpack.c.bf16 %v423, %v423
  %544 = vrot.lane.b32.xlu0 %v542, 64
  %v545 = vpop.permute.xlu0 %544
  %v547 = vsel %vm175, %v541, 0
  %v550 = vsel %vm175, %v545, 0
  %552 = vmatprep.subr.bf16.mxu0 0
  %553 = vmatpush1.bf16.xpose.msra.mxu0 0
  %554 = vmatprep.subr.bf16.mxu0 0
  %555 = vmatpush1.bf16.xpose.msra.mxu0 0
  %556 = vmatprep.subr.bf16.mxu0 0
  %557 = vmatpush1.bf16.xpose.msra.mxu0 0
  %558 = vmatprep.subr.bf16.mxu0 0
  %559 = vmatpush1.bf16.xpose.msra.mxu0 0
  %560 = vmatprep.subr.bf16.mxu0 0
  %561 = vmatpush1.bf16.xpose.msra.mxu0 0
  %562 = vmatprep.subr.bf16.mxu0 0
  %563 = vmatpush1.bf16.xpose.msra.mxu0 0
  %564 = vmatprep.subr.bf16.mxu0 0
  %565 = vmatpush1.bf16.xpose.msra.mxu0 0
  %566 = vmatprep.subr.bf16.mxu0 0
  %567 = vmatpush1.bf16.xpose.msra.mxu0 %v550
  %568 = vmatprep.subr.bf16.mxu0 0
  %569 = vmatpush2.bf16.xpose.msra.mxu0 0
  %570 = vmatprep.subr.bf16.mxu0 0
  %571 = vmatpush2.bf16.xpose.msra.mxu0 0
  %572 = vmatprep.subr.bf16.mxu0 0
  %573 = vmatpush2.bf16.xpose.msra.mxu0 0
  %574 = vmatprep.subr.bf16.mxu0 0
  %575 = vmatpush2.bf16.xpose.msra.mxu0 0
  %576 = vmatprep.subr.bf16.mxu0 0
  %577 = vmatpush2.bf16.xpose.msra.mxu0 0
  %578 = vmatprep.subr.bf16.mxu0 0
  %579 = vmatpush2.bf16.xpose.msra.mxu0 0
  %580 = vmatprep.subr.bf16.mxu0 0
  %581 = vmatpush2.bf16.xpose.msra.mxu0 0
  %582 = vmatprep.subr.bf16.mxu0 0
  %583 = vmatpush2.bf16.xpose.msra.mxu0 0
  %584 = vmatprep.mubr.bf16.mxu0 0
  %585 = vmatmul.mubr.bf16.gmra.mxu0 %v547
  %v586 = vpop.f32.mrf.mxu0
  %v587 = vadd.f32 %v271, %v586
  %v588 = vpop.f32.mrf.mxu0
  %v589 = vpop.f32.mrf.mxu0
  %v590 = vpop.f32.mrf.mxu0
  %591 = vdwg.mxu0
  %v592 = vsel %vm479, %v587, -inf
  %593 = vmax.xlane.f32.xlu0 %v592
  %v594 = vpop.xlane.xlu0 %593
  %v595 = vsub.f32 %v587, %v594
  %v596 = vmul.f32 %v595, 1.442695
  %v597 = vpow.pop %v596
  %v598 = vsel %vm479, %v597, 0.0
  %599 = vadd.xlane.f32.xlu0 %v598
  %v600 = vpop.xlane.xlu0 %599
  %v601 = vrcp.pop %v600
  %v602 = vmul.f32 %v597, %v601
  %v603 = vpack.c.bf16 %v602, %v602
  %v604 = vpack.c.bf16 %v425, %v425
  %v606 = vsel %vm479, %v603, 0
  %v609 = vsel %vm496, %v604, 0
  %611 = vmatprep.subr.bf16.mxu0 0
  %612 = vmatpush1.bf16.msra.mxu0 0
  %613 = vmatprep.subr.bf16.mxu0 0
  %614 = vmatpush1.bf16.msra.mxu0 0
  %615 = vmatprep.subr.bf16.mxu0 0
  %616 = vmatpush1.bf16.msra.mxu0 0
  %617 = vmatprep.subr.bf16.mxu0 0
  %618 = vmatpush1.bf16.msra.mxu0 0
  %619 = vmatprep.subr.bf16.mxu0 0
  %620 = vmatpush1.bf16.msra.mxu0 0
  %621 = vmatprep.subr.bf16.mxu0 0
  %622 = vmatpush1.bf16.msra.mxu0 0
  %623 = vmatprep.subr.bf16.mxu0 0
  %624 = vmatpush1.bf16.msra.mxu0 0
  %625 = vmatprep.subr.bf16.mxu0 0
  %626 = vmatpush1.bf16.msra.mxu0 %v609
  %627 = vmatprep.subr.bf16.mxu0 0
  %628 = vmatpush2.bf16.msra.mxu0 0
  %629 = vmatprep.subr.bf16.mxu0 0
  %630 = vmatpush2.bf16.msra.mxu0 0
  %631 = vmatprep.subr.bf16.mxu0 0
  %632 = vmatpush2.bf16.msra.mxu0 0
  %633 = vmatprep.subr.bf16.mxu0 0
  %634 = vmatpush2.bf16.msra.mxu0 0
  %635 = vmatprep.subr.bf16.mxu0 0
  %636 = vmatpush2.bf16.msra.mxu0 0
  %637 = vmatprep.subr.bf16.mxu0 0
  %638 = vmatpush2.bf16.msra.mxu0 0
  %639 = vmatprep.subr.bf16.mxu0 0
  %640 = vmatpush2.bf16.msra.mxu0 0
  %641 = vmatprep.subr.bf16.mxu0 0
  %642 = vmatpush2.bf16.msra.mxu0 0
  %643 = vmatprep.mubr.bf16.mxu0 0
  %644 = vmatmul.mubr.bf16.gmra.mxu0 %v606
  %v645 = vpop.f32.mrf.mxu0
  %v646 = vadd.f32 0.0, %v645
  %v647 = vpop.f32.mrf.mxu0
  %v648 = vpop.f32.mrf.mxu0
  %v649 = vpop.f32.mrf.mxu0
  %650 = vdwg.mxu0
  %v651 = vpack.c.bf16 %v646, %v535
  %v652 = vld [vmem:[%s9] sm:$0xf]
  %v653 = vld [vmem:[%s9 + $0x4] sm:$0xf]
  %v654 = vld [vmem:[%s9 + $0x8] sm:$0xf]
  %v655 = vld [vmem:[%s9 + $0xc] sm:$0xf]
  %v656 = vld [vmem:[%s9 + $0x10] sm:$0xf]
  %v657 = vld [vmem:[%s9 + $0x14] sm:$0xf]
  %v658 = vld [vmem:[%s9 + $0x18] sm:$0xf]
  %v659 = vld [vmem:[%s9 + $0x1c] sm:$0xf]
  %v668 = vunpack.c.l.b16 %v652
  %v669 = vunpack.c.l.b16 %v653
  %v670 = vunpack.c.l.b16 %v654
  %v671 = vunpack.c.l.b16 %v655
  %v672 = vunpack.c.l.b16 %v656
  %v673 = vunpack.c.l.b16 %v657
  %v674 = vunpack.c.l.b16 %v658
  %v675 = vunpack.c.l.b16 %v659
  %v676 = vpack.c.b16 %v669, %v668
  %v677 = vpack.c.b16 %v671, %v670
  %v678 = vpack.c.b16 %v673, %v672
  %v679 = vpack.c.b16 %v675, %v674
  %v685 = vsel %vm175, %v651, 0
  %687 = vmatprep.subr.bf16.mxu0 0
  %688 = vmatpush1.bf16.msra.mxu0 0
  %689 = vmatprep.subr.bf16.mxu0 0
  %690 = vmatpush1.bf16.msra.mxu0 0
  %691 = vmatprep.subr.bf16.mxu0 0
  %692 = vmatpush1.bf16.msra.mxu0 0
  %693 = vmatprep.subr.bf16.mxu0 0
  %694 = vmatpush1.bf16.msra.mxu0 0
  %695 = vmatprep.subr.bf16.mxu0 0
  %696 = vmatpush1.bf16.msra.mxu0 %v679
  %697 = vmatprep.subr.bf16.mxu0 0
  %698 = vmatpush1.bf16.msra.mxu0 %v678
  %699 = vmatprep.subr.bf16.mxu0 0
  %700 = vmatpush1.bf16.msra.mxu0 %v677
  %701 = vmatprep.subr.bf16.mxu0 0
  %702 = vmatpush1.bf16.msra.mxu0 %v676
  %703 = vmatprep.subr.bf16.mxu0 0
  %704 = vmatpush2.bf16.msra.mxu0 0
  %705 = vmatprep.subr.bf16.mxu0 0
  %706 = vmatpush2.bf16.msra.mxu0 0
  %707 = vmatprep.subr.bf16.mxu0 0
  %708 = vmatpush2.bf16.msra.mxu0 0
  %709 = vmatprep.subr.bf16.mxu0 0
  %710 = vmatpush2.bf16.msra.mxu0 0
  %711 = vmatprep.subr.bf16.mxu0 0
  %712 = vmatpush2.bf16.msra.mxu0 0
  %713 = vmatprep.subr.bf16.mxu0 0
  %714 = vmatpush2.bf16.msra.mxu0 0
  %715 = vmatprep.subr.bf16.mxu0 0
  %716 = vmatpush2.bf16.msra.mxu0 0
  %717 = vmatprep.subr.bf16.mxu0 0
  %718 = vmatpush2.bf16.msra.mxu0 0
  %719 = vmatprep.mubr.bf16.mxu0 0
  %720 = vmatmul.mubr.bf16.gmra.mxu0 %v685
  %v721 = vpop.f32.mrf.mxu0
  %v722 = vadd.f32 0.0, %v721
  %v723 = vpop.f32.mrf.mxu0
  %v724 = vpop.f32.mrf.mxu0
  %v725 = vadd.f32 0.0, %v724
  %v726 = vpop.f32.mrf.mxu0
  %727 = vdwg.mxu0
  %v728 = vadd.f32 %v266, %v722
  %v729 = vadd.f32 %v267, %v725
  %v730 = vld [vmem:[%s10] sm:$0x1]
  %v732 = vlaneseq
  %v733 = vshrl.u32 %v732, 7
  %v734 = vsub.s32 0, %v733
  %v735 = vrot.slane %v730, %v734
  %v737 = vadd.f32 %v728, %v735
  %v738 = vadd.f32 %v729, %v735
  %v739 = vld [vmem:[%s11] sm:$0x1]
  %v740 = vld [vmem:[%s12] sm:$0x1]
  %v741 = vsel %vm175, %v737, 0.0
  %742 = vadd.xlane.f32.xlu0 %v741
  %v743 = vpop.xlane.xlu0 %742
  %v744 = vsel %vm175, %v738, 0.0
  %745 = vadd.xlane.f32.xlu0 %v744
  %v746 = vpop.xlane.xlu0 %745
  %v747 = vmul.f32 %v737, %v737
  %v748 = vmul.f32 %v738, %v738
  %v749 = vsel %vm175, %v747, 0.0
  %750 = vadd.xlane.f32.xlu0 %v749
  %v751 = vpop.xlane.xlu0 %750
  %v752 = vsel %vm175, %v748, 0.0
  %753 = vadd.xlane.f32.xlu0 %v752
  %v754 = vpop.xlane.xlu0 %753
  %v755 = vmul.f32 %v743, 0.015625
  %v756 = vmul.f32 %v746, 0.015625
  %v757 = vmul.f32 %v751, 0.015625
  %v758 = vmul.f32 %v754, 0.015625
  %v759 = vmul.f32 %v755, %v755
  %v760 = vmul.f32 %v756, %v756
  %v761 = vsub.f32 %v757, %v759
  %v762 = vsub.f32 %v758, %v760
  %v763 = vsub.f32 %v737, %v755
  %v764 = vsub.f32 %v738, %v756
  %v765 = vadd.f32 %v761, 1e-05
  %v766 = vadd.f32 %v762, 1e-05
  %v767 = vrsqrt.pop %v765
  %v768 = vrsqrt.pop %v766
  %v769 = vmul.f32 %v763, %v767
  %v770 = vmul.f32 %v764, %v768
  %v772 = vlaneseq
  %v773 = vshrl.u32 %v772, 7
  %v774 = vsub.s32 0, %v773
  %v775 = vrot.slane %v739, %v774
  %v777 = vmul.f32 %v769, %v775
  %v778 = vmul.f32 %v770, %v775
  %v780 = vlaneseq
  %v781 = vshrl.u32 %v780, 7
  %v782 = vsub.s32 0, %v781
  %v783 = vrot.slane %v740, %v782
  %v785 = vadd.f32 %v777, %v783
  %v786 = vadd.f32 %v778, %v783
  %v787 = vpack.c.bf16 %v786, %v785
  %v788 = vld [vmem:[%s13] sm:$0xff]
  %v789 = vld [vmem:[%s13 + $0x8] sm:$0xff]
  %v790 = vld [vmem:[%s13 + $0x10] sm:$0xff]
  %v791 = vld [vmem:[%s13 + $0x18] sm:$0xff]
  %v792 = vld [vmem:[%s13 + $0x20] sm:$0xff]
  %v793 = vld [vmem:[%s13 + $0x28] sm:$0xff]
  %v794 = vld [vmem:[%s13 + $0x30] sm:$0xff]
  %v795 = vld [vmem:[%s13 + $0x38] sm:$0xff]
  %v796 = vld [vmem:[%s14] sm:$0x3]
  %v798 = vlaneseq
  %v799 = vshrl.u32 %v798, 7
  %v800 = vsub.s32 0, %v799
  %v801 = vrot.slane %v796, %v800
  %v802 = vlaneseq
  %v803 = vshrl.u32 %v802, 7
  %v804 = vsub.s32 1, %v803
  %v805 = vrot.slane %v796, %v804
  %v816 = vunpack.c.l.b16 %v788
  %v817 = vunpack.c.h.b16 %v788
  %v818 = vunpack.c.l.b16 %v789
  %v819 = vunpack.c.h.b16 %v789
  %v820 = vunpack.c.l.b16 %v790
  %v821 = vunpack.c.h.b16 %v790
  %v822 = vunpack.c.l.b16 %v791
  %v823 = vunpack.c.h.b16 %v791
  %v824 = vunpack.c.l.b16 %v792
  %v825 = vunpack.c.h.b16 %v792
  %v826 = vunpack.c.l.b16 %v793
  %v827 = vunpack.c.h.b16 %v793
  %v828 = vunpack.c.l.b16 %v794
  %v829 = vunpack.c.h.b16 %v794
  %v830 = vunpack.c.l.b16 %v795
  %v831 = vunpack.c.h.b16 %v795
  %v832 = vpack.c.b16 %v818, %v816
  %v833 = vpack.c.b16 %v819, %v817
  %v834 = vpack.c.b16 %v822, %v820
  %v835 = vpack.c.b16 %v823, %v821
  %v836 = vpack.c.b16 %v826, %v824
  %v837 = vpack.c.b16 %v827, %v825
  %v838 = vpack.c.b16 %v830, %v828
  %v839 = vpack.c.b16 %v831, %v829
  %v849 = vsel %vm175, %v787, 0
  %851 = vmatprep.subr.bf16.mxu0 0
  %852 = vmatpush1.bf16.msra.mxu0 0
  %853 = vmatprep.subr.bf16.mxu0 0
  %854 = vmatpush1.bf16.msra.mxu0 0
  %855 = vmatprep.subr.bf16.mxu0 0
  %856 = vmatpush1.bf16.msra.mxu0 0
  %857 = vmatprep.subr.bf16.mxu0 0
  %858 = vmatpush1.bf16.msra.mxu0 0
  %859 = vmatprep.subr.bf16.mxu0 %v839
  %860 = vmatpush1.bf16.msra.mxu0 %v838
  %861 = vmatprep.subr.bf16.mxu0 %v837
  %862 = vmatpush1.bf16.msra.mxu0 %v836
  %863 = vmatprep.subr.bf16.mxu0 %v835
  %864 = vmatpush1.bf16.msra.mxu0 %v834
  %865 = vmatprep.subr.bf16.mxu0 %v833
  %866 = vmatpush1.bf16.msra.mxu0 %v832
  %867 = vmatprep.subr.bf16.mxu0 0
  %868 = vmatpush2.bf16.msra.mxu0 0
  %869 = vmatprep.subr.bf16.mxu0 0
  %870 = vmatpush2.bf16.msra.mxu0 0
  %871 = vmatprep.subr.bf16.mxu0 0
  %872 = vmatpush2.bf16.msra.mxu0 0
  %873 = vmatprep.subr.bf16.mxu0 0
  %874 = vmatpush2.bf16.msra.mxu0 0
  %875 = vmatprep.subr.bf16.mxu0 0
  %876 = vmatpush2.bf16.msra.mxu0 0
  %877 = vmatprep.subr.bf16.mxu0 0
  %878 = vmatpush2.bf16.msra.mxu0 0
  %879 = vmatprep.subr.bf16.mxu0 0
  %880 = vmatpush2.bf16.msra.mxu0 0
  %881 = vmatprep.subr.bf16.mxu0 0
  %882 = vmatpush2.bf16.msra.mxu0 0
  %883 = vmatprep.mubr.bf16.mxu0 0
  %884 = vmatmul.mubr.bf16.gmra.mxu0 %v849
  %v885 = vpop.f32.mrf.mxu0
  %v886 = vadd.f32 %v801, %v885
  %v887 = vpop.f32.mrf.mxu0
  %v888 = vadd.f32 %v805, %v887
  %v889 = vpop.f32.mrf.mxu0
  %v890 = vadd.f32 %v801, %v889
  %v891 = vpop.f32.mrf.mxu0
  %v892 = vadd.f32 %v805, %v891
  %893 = vdwg.mxu0
  %v894 = vmul.f32 %v886, 1.702
  %v895 = vmul.f32 %v888, 1.702
  %v896 = vmul.f32 %v890, 1.702
  %v897 = vmul.f32 %v892, 1.702
  %v898 = vxor.u32 %v894, 2147483648
  %v899 = vxor.u32 %v895, 2147483648
  %v900 = vxor.u32 %v896, 2147483648
  %v901 = vxor.u32 %v897, 2147483648
  %v902 = vmul.f32 %v898, 1.442695
  %v903 = vpow.pop %v902
  %v904 = vmul.f32 %v899, 1.442695
  %v905 = vpow.pop %v904
  %v906 = vmul.f32 %v900, 1.442695
  %v907 = vpow.pop %v906
  %v908 = vmul.f32 %v901, 1.442695
  %v909 = vpow.pop %v908
  %v910 = vadd.f32 %v903, 1.0
  %v911 = vadd.f32 %v905, 1.0
  %v912 = vadd.f32 %v907, 1.0
  %v913 = vadd.f32 %v909, 1.0
  %v914 = vrcp.pop %v910
  %v915 = vmul.f32 1.0, %v914
  %v916 = vrcp.pop %v911
  %v917 = vmul.f32 1.0, %v916
  %v918 = vrcp.pop %v912
  %v919 = vmul.f32 1.0, %v918
  %v920 = vrcp.pop %v913
  %v921 = vmul.f32 1.0, %v920
  %v922 = vmul.f32 %v886, %v915
  %v923 = vmul.f32 %v888, %v917
  %v924 = vmul.f32 %v890, %v919
  %v925 = vmul.f32 %v892, %v921
  %v926 = vpack.c.bf16 %v924, %v922
  %v927 = vpack.c.bf16 %v925, %v923
  %v928 = vld [vmem:[%s15] sm:$0xf]
  %v929 = vld [vmem:[%s15 + $0x4] sm:$0xf]
  %v930 = vld [vmem:[%s15 + $0x8] sm:$0xf]
  %v931 = vld [vmem:[%s15 + $0xc] sm:$0xf]
  %v932 = vld [vmem:[%s15 + $0x10] sm:$0xf]
  %v933 = vld [vmem:[%s15 + $0x14] sm:$0xf]
  %v934 = vld [vmem:[%s15 + $0x18] sm:$0xf]
  %v935 = vld [vmem:[%s15 + $0x1c] sm:$0xf]
  %v936 = vld [vmem:[%s15 + $0x20] sm:$0xf]
  %v937 = vld [vmem:[%s15 + $0x24] sm:$0xf]
  %v938 = vld [vmem:[%s15 + $0x28] sm:$0xf]
  %v939 = vld [vmem:[%s15 + $0x2c] sm:$0xf]
  %v940 = vld [vmem:[%s15 + $0x30] sm:$0xf]
  %v941 = vld [vmem:[%s15 + $0x34] sm:$0xf]
  %v942 = vld [vmem:[%s15 + $0x38] sm:$0xf]
  %v943 = vld [vmem:[%s15 + $0x3c] sm:$0xf]
  %v944 = vld [vmem:[%s15 + $0x40] sm:$0xf]
  %v945 = vld [vmem:[%s15 + $0x44] sm:$0xf]
  %v946 = vld [vmem:[%s15 + $0x48] sm:$0xf]
  %v947 = vld [vmem:[%s15 + $0x4c] sm:$0xf]
  %v948 = vld [vmem:[%s15 + $0x50] sm:$0xf]
  %v949 = vld [vmem:[%s15 + $0x54] sm:$0xf]
  %v950 = vld [vmem:[%s15 + $0x58] sm:$0xf]
  %v951 = vld [vmem:[%s15 + $0x5c] sm:$0xf]
  %v952 = vld [vmem:[%s15 + $0x60] sm:$0xf]
  %v953 = vld [vmem:[%s15 + $0x64] sm:$0xf]
  %v954 = vld [vmem:[%s15 + $0x68] sm:$0xf]
  %v955 = vld [vmem:[%s15 + $0x6c] sm:$0xf]
  %v956 = vld [vmem:[%s15 + $0x70] sm:$0xf]
  %v957 = vld [vmem:[%s15 + $0x74] sm:$0xf]
  %v958 = vld [vmem:[%s15 + $0x78] sm:$0xf]
  %v959 = vld [vmem:[%s15 + $0x7c] sm:$0xf]
  %v960 = vld [vmem:[%s16] sm:$0x1]
  %v962 = vlaneseq
  %v963 = vshrl.u32 %v962, 7
  %v964 = vsub.s32 0, %v963
  %v965 = vrot.slane %v960, %v964
  %v999 = vunpack.c.l.b16 %v928
  %v1000 = vunpack.c.l.b16 %v929
  %v1001 = vunpack.c.l.b16 %v930
  %v1002 = vunpack.c.l.b16 %v931
  %v1003 = vunpack.c.l.b16 %v932
  %v1004 = vunpack.c.l.b16 %v933
  %v1005 = vunpack.c.l.b16 %v934
  %v1006 = vunpack.c.l.b16 %v935
  %v1007 = vunpack.c.l.b16 %v936
  %v1008 = vunpack.c.l.b16 %v937
  %v1009 = vunpack.c.l.b16 %v938
  %v1010 = vunpack.c.l.b16 %v939
  %v1011 = vunpack.c.l.b16 %v940
  %v1012 = vunpack.c.l.b16 %v941
  %v1013 = vunpack.c.l.b16 %v942
  %v1014 = vunpack.c.l.b16 %v943
  %v1015 = vunpack.c.l.b16 %v944
  %v1016 = vunpack.c.l.b16 %v945
  %v1017 = vunpack.c.l.b16 %v946
  %v1018 = vunpack.c.l.b16 %v947
  %v1019 = vunpack.c.l.b16 %v948
  %v1020 = vunpack.c.l.b16 %v949
  %v1021 = vunpack.c.l.b16 %v950
  %v1022 = vunpack.c.l.b16 %v951
  %v1023 = vunpack.c.l.b16 %v952
  %v1024 = vunpack.c.l.b16 %v953
  %v1025 = vunpack.c.l.b16 %v954
  %v1026 = vunpack.c.l.b16 %v955
  %v1027 = vunpack.c.l.b16 %v956
  %v1028 = vunpack.c.l.b16 %v957
  %v1029 = vunpack.c.l.b16 %v958
  %v1030 = vunpack.c.l.b16 %v959
  %v1031 = vpack.c.b16 %v1000, %v999
  %v1032 = vpack.c.b16 %v1002, %v1001
  %v1033 = vpack.c.b16 %v1004, %v1003
  %v1034 = vpack.c.b16 %v1006, %v1005
  %v1035 = vpack.c.b16 %v1008, %v1007
  %v1036 = vpack.c.b16 %v1010, %v1009
  %v1037 = vpack.c.b16 %v1012, %v1011
  %v1038 = vpack.c.b16 %v1014, %v1013
  %v1039 = vpack.c.b16 %v1016, %v1015
  %v1040 = vpack.c.b16 %v1018, %v1017
  %v1041 = vpack.c.b16 %v1020, %v1019
  %v1042 = vpack.c.b16 %v1022, %v1021
  %v1043 = vpack.c.b16 %v1024, %v1023
  %v1044 = vpack.c.b16 %v1026, %v1025
  %v1045 = vpack.c.b16 %v1028, %v1027
  %v1046 = vpack.c.b16 %v1030, %v1029
  %1063 = vmatprep.subr.bf16.mxu0 0
  %1064 = vmatpush1.bf16.msra.mxu0 %v1038
  %1065 = vmatprep.subr.bf16.mxu0 0
  %1066 = vmatpush1.bf16.msra.mxu0 %v1037
  %1067 = vmatprep.subr.bf16.mxu0 0
  %1068 = vmatpush1.bf16.msra.mxu0 %v1036
  %1069 = vmatprep.subr.bf16.mxu0 0
  %1070 = vmatpush1.bf16.msra.mxu0 %v1035
  %1071 = vmatprep.subr.bf16.mxu0 0
  %1072 = vmatpush1.bf16.msra.mxu0 %v1034
  %1073 = vmatprep.subr.bf16.mxu0 0
  %1074 = vmatpush1.bf16.msra.mxu0 %v1033
  %1075 = vmatprep.subr.bf16.mxu0 0
  %1076 = vmatpush1.bf16.msra.mxu0 %v1032
  %1077 = vmatprep.subr.bf16.mxu0 0
  %1078 = vmatpush1.bf16.msra.mxu0 %v1031
  %1079 = vmatprep.subr.bf16.mxu0 0
  %1080 = vmatpush2.bf16.msra.mxu0 %v1046
  %1081 = vmatprep.subr.bf16.mxu0 0
  %1082 = vmatpush2.bf16.msra.mxu0 %v1045
  %1083 = vmatprep.subr.bf16.mxu0 0
  %1084 = vmatpush2.bf16.msra.mxu0 %v1044
  %1085 = vmatprep.subr.bf16.mxu0 0
  %1086 = vmatpush2.bf16.msra.mxu0 %v1043
  %1087 = vmatprep.subr.bf16.mxu0 0
  %1088 = vmatpush2.bf16.msra.mxu0 %v1042
  %1089 = vmatprep.subr.bf16.mxu0 0
  %1090 = vmatpush2.bf16.msra.mxu0 %v1041
  %1091 = vmatprep.subr.bf16.mxu0 0
  %1092 = vmatpush2.bf16.msra.mxu0 %v1040
  %1093 = vmatprep.subr.bf16.mxu0 0
  %1094 = vmatpush2.bf16.msra.mxu0 %v1039
  %1095 = vmatprep.mubr.bf16.mxu0 %v927
  %1096 = vmatmul.mubr.bf16.gmra.mxu0 %v926
  %v1097 = vpop.f32.mrf.mxu0
  %v1098 = vadd.f32 %v965, %v1097
  %v1099 = vpop.f32.mrf.mxu0
  %v1100 = vpop.f32.mrf.mxu0
  %v1101 = vadd.f32 %v965, %v1100
  %v1102 = vpop.f32.mrf.mxu0
  %1103 = vdwg.mxu0
  %v1104 = vadd.f32 %v737, %v1098
  %v1105 = vadd.f32 %v738, %v1101
  %s1106 = scalar_lea.vmem %s5, 1
  %v1107 = vld [vmem:[%s1106] sm:$0x1]
  %s1108 = scalar_lea.vmem %s6, 1
  %v1109 = vld [vmem:[%s1108] sm:$0x1]
  %v1110 = vsel %vm175, %v1104, 0.0
  %1111 = vadd.xlane.f32.xlu0 %v1110
  %v1112 = vpop.xlane.xlu0 %1111
  %v1113 = vsel %vm175, %v1105, 0.0
  %1114 = vadd.xlane.f32.xlu0 %v1113
  %v1115 = vpop.xlane.xlu0 %1114
  %v1116 = vmul.f32 %v1104, %v1104
  %v1117 = vmul.f32 %v1105, %v1105
  %v1118 = vsel %vm175, %v1116, 0.0
  %1119 = vadd.xlane.f32.xlu0 %v1118
  %v1120 = vpop.xlane.xlu0 %1119
  %v1121 = vsel %vm175, %v1117, 0.0
  %1122 = vadd.xlane.f32.xlu0 %v1121
  %v1123 = vpop.xlane.xlu0 %1122
  %v1124 = vmul.f32 %v1112, 0.015625
  %v1125 = vmul.f32 %v1115, 0.015625
  %v1126 = vmul.f32 %v1120, 0.015625
  %v1127 = vmul.f32 %v1123, 0.015625
  %v1128 = vmul.f32 %v1124, %v1124
  %v1129 = vmul.f32 %v1125, %v1125
  %v1130 = vsub.f32 %v1126, %v1128
  %v1131 = vsub.f32 %v1127, %v1129
  %v1132 = vsub.f32 %v1104, %v1124
  %v1133 = vsub.f32 %v1105, %v1125
  %v1134 = vadd.f32 %v1130, 1e-05
  %v1135 = vadd.f32 %v1131, 1e-05
  %v1136 = vrsqrt.pop %v1134
  %v1137 = vrsqrt.pop %v1135
  %v1138 = vmul.f32 %v1132, %v1136
  %v1139 = vmul.f32 %v1133, %v1137
  %v1141 = vlaneseq
  %v1142 = vshrl.u32 %v1141, 7
  %v1143 = vsub.s32 0, %v1142
  %v1144 = vrot.slane %v1107, %v1143
  %v1146 = vmul.f32 %v1138, %v1144
  %v1147 = vmul.f32 %v1139, %v1144
  %v1149 = vlaneseq
  %v1150 = vshrl.u32 %v1149, 7
  %v1151 = vsub.s32 0, %v1150
  %v1152 = vrot.slane %v1109, %v1151
  %v1154 = vadd.f32 %v1146, %v1152
  %v1155 = vadd.f32 %v1147, %v1152
  %v1156 = vpack.c.bf16 %v1155, %v1154
  %s1157 = scalar_lea.vmem %s7, 64
  %v1158 = vld [vmem:[%s1157] sm:$0xff]
  %v1159 = vld [vmem:[%s1157 + $0x8] sm:$0xff]
  %v1160 = vld [vmem:[%s1157 + $0x10] sm:$0xff]
  %v1161 = vld [vmem:[%s1157 + $0x18] sm:$0xff]
  %v1162 = vld [vmem:[%s1157 + $0x20] sm:$0xff]
  %v1163 = vld [vmem:[%s1157 + $0x28] sm:$0xff]
  %v1164 = vld [vmem:[%s1157 + $0x30] sm:$0xff]
  %v1165 = vld [vmem:[%s1157 + $0x38] sm:$0xff]
  %s1166 = scalar_lea.vmem %s8, 2
  %v1167 = vld [vmem:[%s1166] sm:$0x3]
  %v1169 = vlaneseq
  %v1170 = vshrl.u32 %v1169, 7
  %v1171 = vsub.s32 0, %v1170
  %v1172 = vrot.slane %v1167, %v1171
  %v1173 = vlaneseq
  %v1174 = vshrl.u32 %v1173, 7
  %v1175 = vsub.s32 1, %v1174
  %v1176 = vrot.slane %v1167, %v1175
  %v1187 = vunpack.c.l.b16 %v1158
  %v1188 = vunpack.c.h.b16 %v1158
  %v1189 = vunpack.c.l.b16 %v1159
  %v1190 = vunpack.c.h.b16 %v1159
  %v1191 = vunpack.c.l.b16 %v1160
  %v1192 = vunpack.c.h.b16 %v1160
  %v1193 = vunpack.c.l.b16 %v1161
  %v1194 = vunpack.c.h.b16 %v1161
  %v1195 = vunpack.c.l.b16 %v1162
  %v1196 = vunpack.c.h.b16 %v1162
  %v1197 = vunpack.c.l.b16 %v1163
  %v1198 = vunpack.c.h.b16 %v1163
  %v1199 = vunpack.c.l.b16 %v1164
  %v1200 = vunpack.c.h.b16 %v1164
  %v1201 = vunpack.c.l.b16 %v1165
  %v1202 = vunpack.c.h.b16 %v1165
  %v1203 = vpack.c.b16 %v1189, %v1187
  %v1204 = vpack.c.b16 %v1190, %v1188
  %v1205 = vpack.c.b16 %v1193, %v1191
  %v1206 = vpack.c.b16 %v1194, %v1192
  %v1207 = vpack.c.b16 %v1197, %v1195
  %v1208 = vpack.c.b16 %v1198, %v1196
  %v1209 = vpack.c.b16 %v1201, %v1199
  %v1210 = vpack.c.b16 %v1202, %v1200
  %v1220 = vsel %vm175, %v1156, 0
  %1222 = vmatprep.subr.bf16.mxu0 0
  %1223 = vmatpush1.bf16.msra.mxu0 0
  %1224 = vmatprep.subr.bf16.mxu0 0
  %1225 = vmatpush1.bf16.msra.mxu0 0
  %1226 = vmatprep.subr.bf16.mxu0 0
  %1227 = vmatpush1.bf16.msra.mxu0 0
  %1228 = vmatprep.subr.bf16.mxu0 0
  %1229 = vmatpush1.bf16.msra.mxu0 0
  %1230 = vmatprep.subr.bf16.mxu0 %v1210
  %1231 = vmatpush1.bf16.msra.mxu0 %v1209
  %1232 = vmatprep.subr.bf16.mxu0 %v1208
  %1233 = vmatpush1.bf16.msra.mxu0 %v1207
  %1234 = vmatprep.subr.bf16.mxu0 %v1206
  %1235 = vmatpush1.bf16.msra.mxu0 %v1205
  %1236 = vmatprep.subr.bf16.mxu0 %v1204
  %1237 = vmatpush1.bf16.msra.mxu0 %v1203
  %1238 = vmatprep.subr.bf16.mxu0 0
  %1239 = vmatpush2.bf16.msra.mxu0 0
  %1240 = vmatprep.subr.bf16.mxu0 0
  %1241 = vmatpush2.bf16.msra.mxu0 0
  %1242 = vmatprep.subr.bf16.mxu0 0
  %1243 = vmatpush2.bf16.msra.mxu0 0
  %1244 = vmatprep.subr.bf16.mxu0 0
  %1245 = vmatpush2.bf16.msra.mxu0 0
  %1246 = vmatprep.subr.bf16.mxu0 0
  %1247 = vmatpush2.bf16.msra.mxu0 0
  %1248 = vmatprep.subr.bf16.mxu0 0
  %1249 = vmatpush2.bf16.msra.mxu0 0
  %1250 = vmatprep.subr.bf16.mxu0 0
  %1251 = vmatpush2.bf16.msra.mxu0 0
  %1252 = vmatprep.subr.bf16.mxu0 0
  %1253 = vmatpush2.bf16.msra.mxu0 0
  %1254 = vmatprep.mubr.bf16.mxu0 0
  %1255 = vmatmul.mubr.bf16.gmra.mxu0 %v1220
  %v1256 = vpop.f32.mrf.mxu0
  %v1257 = vadd.f32 %v1172, %v1256
  %v1258 = vpop.f32.mrf.mxu0
  %v1259 = vadd.f32 %v1176, %v1258
  %v1260 = vpop.f32.mrf.mxu0
  %v1261 = vadd.f32 %v1172, %v1260
  %v1262 = vpop.f32.mrf.mxu0
  %v1263 = vadd.f32 %v1176, %v1262
  %1264 = vdwg.mxu0
  %v1265 = vmul.f32 %v1257, 0.125
  %v1266 = vpack.c.bf16 %v1265, %v1265
  %v1267 = vpack.c.bf16 %v1257, %v1257
  %1269 = vrot.lane.b32.xlu0 %v1267, 64
  %v1270 = vpop.permute.xlu0 %1269
  %v1272 = vsel %vm175, %v1266, 0
  %v1275 = vsel %vm175, %v1270, 0
  %1277 = vmatprep.subr.bf16.mxu0 0
  %1278 = vmatpush1.bf16.xpose.msra.mxu0 0
  %1279 = vmatprep.subr.bf16.mxu0 0
  %1280 = vmatpush1.bf16.xpose.msra.mxu0 0
  %1281 = vmatprep.subr.bf16.mxu0 0
  %1282 = vmatpush1.bf16.xpose.msra.mxu0 0
  %1283 = vmatprep.subr.bf16.mxu0 0
  %1284 = vmatpush1.bf16.xpose.msra.mxu0 0
  %1285 = vmatprep.subr.bf16.mxu0 0
  %1286 = vmatpush1.bf16.xpose.msra.mxu0 0
  %1287 = vmatprep.subr.bf16.mxu0 0
  %1288 = vmatpush1.bf16.xpose.msra.mxu0 0
  %1289 = vmatprep.subr.bf16.mxu0 0
  %1290 = vmatpush1.bf16.xpose.msra.mxu0 0
  %1291 = vmatprep.subr.bf16.mxu0 0
  %1292 = vmatpush1.bf16.xpose.msra.mxu0 %v1275
  %1293 = vmatprep.subr.bf16.mxu0 0
  %1294 = vmatpush2.bf16.xpose.msra.mxu0 0
  %1295 = vmatprep.subr.bf16.mxu0 0
  %1296 = vmatpush2.bf16.xpose.msra.mxu0 0
  %1297 = vmatprep.subr.bf16.mxu0 0
  %1298 = vmatpush2.bf16.xpose.msra.mxu0 0
  %1299 = vmatprep.subr.bf16.mxu0 0
  %1300 = vmatpush2.bf16.xpose.msra.mxu0 0
  %1301 = vmatprep.subr.bf16.mxu0 0
  %1302 = vmatpush2.bf16.xpose.msra.mxu0 0
  %1303 = vmatprep.subr.bf16.mxu0 0
  %1304 = vmatpush2.bf16.xpose.msra.mxu0 0
  %1305 = vmatprep.subr.bf16.mxu0 0
  %1306 = vmatpush2.bf16.xpose.msra.mxu0 0
  %1307 = vmatprep.subr.bf16.mxu0 0
  %1308 = vmatpush2.bf16.xpose.msra.mxu0 0
  %1309 = vmatprep.mubr.bf16.mxu0 0
  %1310 = vmatmul.mubr.bf16.gmra.mxu0 %v1272
  %v1311 = vpop.f32.mrf.mxu0
  %v1312 = vadd.f32 %v271, %v1311
  %v1313 = vpop.f32.mrf.mxu0
  %v1314 = vpop.f32.mrf.mxu0
  %v1315 = vpop.f32.mrf.mxu0
  %1316 = vdwg.mxu0
  %v1317 = vsel %vm479, %v1312, -inf
  %1318 = vmax.xlane.f32.xlu0 %v1317
  %v1319 = vpop.xlane.xlu0 %1318
  %v1320 = vsub.f32 %v1312, %v1319
  %v1321 = vmul.f32 %v1320, 1.442695
  %v1322 = vpow.pop %v1321
  %v1323 = vsel %vm479, %v1322, 0.0
  %1324 = vadd.xlane.f32.xlu0 %v1323
  %v1325 = vpop.xlane.xlu0 %1324
  %v1326 = vrcp.pop %v1325
  %v1327 = vmul.f32 %v1322, %v1326
  %v1328 = vpack.c.bf16 %v1327, %v1327
  %v1329 = vpack.c.bf16 %v1259, %v1259
  %v1331 = vsel %vm479, %v1328, 0
  %v1334 = vsel %vm496, %v1329, 0
  %1336 = vmatprep.subr.bf16.mxu0 0
  %1337 = vmatpush1.bf16.msra.mxu0 0
  %1338 = vmatprep.subr.bf16.mxu0 0
  %1339 = vmatpush1.bf16.msra.mxu0 0
  %1340 = vmatprep.subr.bf16.mxu0 0
  %1341 = vmatpush1.bf16.msra.mxu0 0
  %1342 = vmatprep.subr.bf16.mxu0 0
  %1343 = vmatpush1.bf16.msra.mxu0 0
  %1344 = vmatprep.subr.bf16.mxu0 0
  %1345 = vmatpush1.bf16.msra.mxu0 0
  %1346 = vmatprep.subr.bf16.mxu0 0
  %1347 = vmatpush1.bf16.msra.mxu0 0
  %1348 = vmatprep.subr.bf16.mxu0 0
  %1349 = vmatpush1.bf16.msra.mxu0 0
  %1350 = vmatprep.subr.bf16.mxu0 0
  %1351 = vmatpush1.bf16.msra.mxu0 %v1334
  %1352 = vmatprep.subr.bf16.mxu0 0
  %1353 = vmatpush2.bf16.msra.mxu0 0
  %1354 = vmatprep.subr.bf16.mxu0 0
  %1355 = vmatpush2.bf16.msra.mxu0 0
  %1356 = vmatprep.subr.bf16.mxu0 0
  %1357 = vmatpush2.bf16.msra.mxu0 0
  %1358 = vmatprep.subr.bf16.mxu0 0
  %1359 = vmatpush2.bf16.msra.mxu0 0
  %1360 = vmatprep.subr.bf16.mxu0 0
  %1361 = vmatpush2.bf16.msra.mxu0 0
  %1362 = vmatprep.subr.bf16.mxu0 0
  %1363 = vmatpush2.bf16.msra.mxu0 0
  %1364 = vmatprep.subr.bf16.mxu0 0
  %1365 = vmatpush2.bf16.msra.mxu0 0
  %1366 = vmatprep.subr.bf16.mxu0 0
  %1367 = vmatpush2.bf16.msra.mxu0 0
  %1368 = vmatprep.mubr.bf16.mxu0 0
  %1369 = vmatmul.mubr.bf16.gmra.mxu0 %v1331
  %v1370 = vpop.f32.mrf.mxu0
  %v1371 = vadd.f32 0.0, %v1370
  %v1372 = vpop.f32.mrf.mxu0
  %v1373 = vpop.f32.mrf.mxu0
  %v1374 = vpop.f32.mrf.mxu0
  %1375 = vdwg.mxu0
  %v1376 = vmul.f32 %v1261, 0.125
  %v1377 = vpack.c.bf16 %v1376, %v1376
  %v1378 = vpack.c.bf16 %v1261, %v1261
  %1380 = vrot.lane.b32.xlu0 %v1378, 64
  %v1381 = vpop.permute.xlu0 %1380
  %v1383 = vsel %vm175, %v1377, 0
  %v1386 = vsel %vm175, %v1381, 0
  %1388 = vmatprep.subr.bf16.mxu0 0
  %1389 = vmatpush1.bf16.xpose.msra.mxu0 0
  %1390 = vmatprep.subr.bf16.mxu0 0
  %1391 = vmatpush1.bf16.xpose.msra.mxu0 0
  %1392 = vmatprep.subr.bf16.mxu0 0
  %1393 = vmatpush1.bf16.xpose.msra.mxu0 0
  %1394 = vmatprep.subr.bf16.mxu0 0
  %1395 = vmatpush1.bf16.xpose.msra.mxu0 0
  %1396 = vmatprep.subr.bf16.mxu0 0
  %1397 = vmatpush1.bf16.xpose.msra.mxu0 0
  %1398 = vmatprep.subr.bf16.mxu0 0
  %1399 = vmatpush1.bf16.xpose.msra.mxu0 0
  %1400 = vmatprep.subr.bf16.mxu0 0
  %1401 = vmatpush1.bf16.xpose.msra.mxu0 0
  %1402 = vmatprep.subr.bf16.mxu0 0
  %1403 = vmatpush1.bf16.xpose.msra.mxu0 %v1386
  %1404 = vmatprep.subr.bf16.mxu0 0
  %1405 = vmatpush2.bf16.xpose.msra.mxu0 0
  %1406 = vmatprep.subr.bf16.mxu0 0
  %1407 = vmatpush2.bf16.xpose.msra.mxu0 0
  %1408 = vmatprep.subr.bf16.mxu0 0
  %1409 = vmatpush2.bf16.xpose.msra.mxu0 0
  %1410 = vmatprep.subr.bf16.mxu0 0
  %1411 = vmatpush2.bf16.xpose.msra.mxu0 0
  %1412 = vmatprep.subr.bf16.mxu0 0
  %1413 = vmatpush2.bf16.xpose.msra.mxu0 0
  %1414 = vmatprep.subr.bf16.mxu0 0
  %1415 = vmatpush2.bf16.xpose.msra.mxu0 0
  %1416 = vmatprep.subr.bf16.mxu0 0
  %1417 = vmatpush2.bf16.xpose.msra.mxu0 0
  %1418 = vmatprep.subr.bf16.mxu0 0
  %1419 = vmatpush2.bf16.xpose.msra.mxu0 0
  %1420 = vmatprep.mubr.bf16.mxu0 0
  %1421 = vmatmul.mubr.bf16.gmra.mxu0 %v1383
  %v1422 = vpop.f32.mrf.mxu0
  %v1423 = vadd.f32 %v271, %v1422
  %v1424 = vpop.f32.mrf.mxu0
  %v1425 = vpop.f32.mrf.mxu0
  %v1426 = vpop.f32.mrf.mxu0
  %1427 = vdwg.mxu0
  %v1428 = vsel %vm479, %v1423, -inf
  %1429 = vmax.xlane.f32.xlu0 %v1428
  %v1430 = vpop.xlane.xlu0 %1429
  %v1431 = vsub.f32 %v1423, %v1430
  %v1432 = vmul.f32 %v1431, 1.442695
  %v1433 = vpow.pop %v1432
  %v1434 = vsel %vm479, %v1433, 0.0
  %1435 = vadd.xlane.f32.xlu0 %v1434
  %v1436 = vpop.xlane.xlu0 %1435
  %v1437 = vrcp.pop %v1436
  %v1438 = vmul.f32 %v1433, %v1437
  %v1439 = vpack.c.bf16 %v1438, %v1438
  %v1440 = vpack.c.bf16 %v1263, %v1263
  %v1442 = vsel %vm479, %v1439, 0
  %v1445 = vsel %vm496, %v1440, 0
  %1447 = vmatprep.subr.bf16.mxu0 0
  %1448 = vmatpush1.bf16.msra.mxu0 0
  %1449 = vmatprep.subr.bf16.mxu0 0
  %1450 = vmatpush1.bf16.msra.mxu0 0
  %1451 = vmatprep.subr.bf16.mxu0 0
  %1452 = vmatpush1.bf16.msra.mxu0 0
  %1453 = vmatprep.subr.bf16.mxu0 0
  %1454 = vmatpush1.bf16.msra.mxu0 0
  %1455 = vmatprep.subr.bf16.mxu0 0
  %1456 = vmatpush1.bf16.msra.mxu0 0
  %1457 = vmatprep.subr.bf16.mxu0 0
  %1458 = vmatpush1.bf16.msra.mxu0 0
  %1459 = vmatprep.subr.bf16.mxu0 0
  %1460 = vmatpush1.bf16.msra.mxu0 0
  %1461 = vmatprep.subr.bf16.mxu0 0
  %1462 = vmatpush1.bf16.msra.mxu0 %v1445
  %1463 = vmatprep.subr.bf16.mxu0 0
  %1464 = vmatpush2.bf16.msra.mxu0 0
  %1465 = vmatprep.subr.bf16.mxu0 0
  %1466 = vmatpush2.bf16.msra.mxu0 0
  %1467 = vmatprep.subr.bf16.mxu0 0
  %1468 = vmatpush2.bf16.msra.mxu0 0
  %1469 = vmatprep.subr.bf16.mxu0 0
  %1470 = vmatpush2.bf16.msra.mxu0 0
  %1471 = vmatprep.subr.bf16.mxu0 0
  %1472 = vmatpush2.bf16.msra.mxu0 0
  %1473 = vmatprep.subr.bf16.mxu0 0
  %1474 = vmatpush2.bf16.msra.mxu0 0
  %1475 = vmatprep.subr.bf16.mxu0 0
  %1476 = vmatpush2.bf16.msra.mxu0 0
  %1477 = vmatprep.subr.bf16.mxu0 0
  %1478 = vmatpush2.bf16.msra.mxu0 0
  %1479 = vmatprep.mubr.bf16.mxu0 0
  %1480 = vmatmul.mubr.bf16.gmra.mxu0 %v1442
  %v1481 = vpop.f32.mrf.mxu0
  %v1482 = vadd.f32 0.0, %v1481
  %v1483 = vpop.f32.mrf.mxu0
  %v1484 = vpop.f32.mrf.mxu0
  %v1485 = vpop.f32.mrf.mxu0
  %1486 = vdwg.mxu0
  %v1487 = vpack.c.bf16 %v1482, %v1371
  %s1488 = scalar_lea.vmem %s9, 32
  %v1489 = vld [vmem:[%s1488] sm:$0xf]
  %v1490 = vld [vmem:[%s1488 + $0x4] sm:$0xf]
  %v1491 = vld [vmem:[%s1488 + $0x8] sm:$0xf]
  %v1492 = vld [vmem:[%s1488 + $0xc] sm:$0xf]
  %v1493 = vld [vmem:[%s1488 + $0x10] sm:$0xf]
  %v1494 = vld [vmem:[%s1488 + $0x14] sm:$0xf]
  %v1495 = vld [vmem:[%s1488 + $0x18] sm:$0xf]
  %v1496 = vld [vmem:[%s1488 + $0x1c] sm:$0xf]
  %v1505 = vunpack.c.l.b16 %v1489
  %v1506 = vunpack.c.l.b16 %v1490
  %v1507 = vunpack.c.l.b16 %v1491
  %v1508 = vunpack.c.l.b16 %v1492
  %v1509 = vunpack.c.l.b16 %v1493
  %v1510 = vunpack.c.l.b16 %v1494
  %v1511 = vunpack.c.l.b16 %v1495
  %v1512 = vunpack.c.l.b16 %v1496
  %v1513 = vpack.c.b16 %v1506, %v1505
  %v1514 = vpack.c.b16 %v1508, %v1507
  %v1515 = vpack.c.b16 %v1510, %v1509
  %v1516 = vpack.c.b16 %v1512, %v1511
  %v1522 = vsel %vm175, %v1487, 0
  %1524 = vmatprep.subr.bf16.mxu0 0
  %1525 = vmatpush1.bf16.msra.mxu0 0
  %1526 = vmatprep.subr.bf16.mxu0 0
  %1527 = vmatpush1.bf16.msra.mxu0 0
  %1528 = vmatprep.subr.bf16.mxu0 0
  %1529 = vmatpush1.bf16.msra.mxu0 0
  %1530 = vmatprep.subr.bf16.mxu0 0
  %1531 = vmatpush1.bf16.msra.mxu0 0
  %1532 = vmatprep.subr.bf16.mxu0 0
  %1533 = vmatpush1.bf16.msra.mxu0 %v1516
  %1534 = vmatprep.subr.bf16.mxu0 0
  %1535 = vmatpush1.bf16.msra.mxu0 %v1515
  %1536 = vmatprep.subr.bf16.mxu0 0
  %1537 = vmatpush1.bf16.msra.mxu0 %v1514
  %1538 = vmatprep.subr.bf16.mxu0 0
  %1539 = vmatpush1.bf16.msra.mxu0 %v1513
  %1540 = vmatprep.subr.bf16.mxu0 0
  %1541 = vmatpush2.bf16.msra.mxu0 0
  %1542 = vmatprep.subr.bf16.mxu0 0
  %1543 = vmatpush2.bf16.msra.mxu0 0
  %1544 = vmatprep.subr.bf16.mxu0 0
  %1545 = vmatpush2.bf16.msra.mxu0 0
  %1546 = vmatprep.subr.bf16.mxu0 0
  %1547 = vmatpush2.bf16.msra.mxu0 0
  %1548 = vmatprep.subr.bf16.mxu0 0
  %1549 = vmatpush2.bf16.msra.mxu0 0
  %1550 = vmatprep.subr.bf16.mxu0 0
  %1551 = vmatpush2.bf16.msra.mxu0 0
  %1552 = vmatprep.subr.bf16.mxu0 0
  %1553 = vmatpush2.bf16.msra.mxu0 0
  %1554 = vmatprep.subr.bf16.mxu0 0
  %1555 = vmatpush2.bf16.msra.mxu0 0
  %1556 = vmatprep.mubr.bf16.mxu0 0
  %1557 = vmatmul.mubr.bf16.gmra.mxu0 %v1522
  %v1558 = vpop.f32.mrf.mxu0
  %v1559 = vadd.f32 0.0, %v1558
  %v1560 = vpop.f32.mrf.mxu0
  %v1561 = vpop.f32.mrf.mxu0
  %v1562 = vadd.f32 0.0, %v1561
  %v1563 = vpop.f32.mrf.mxu0
  %1564 = vdwg.mxu0
  %v1565 = vadd.f32 %v1104, %v1559
  %v1566 = vadd.f32 %v1105, %v1562
  %s1567 = scalar_lea.vmem %s10, 1
  %v1568 = vld [vmem:[%s1567] sm:$0x1]
  %v1570 = vlaneseq
  %v1571 = vshrl.u32 %v1570, 7
  %v1572 = vsub.s32 0, %v1571
  %v1573 = vrot.slane %v1568, %v1572
  %v1575 = vadd.f32 %v1565, %v1573
  %v1576 = vadd.f32 %v1566, %v1573
  %s1577 = scalar_lea.vmem %s11, 1
  %v1578 = vld [vmem:[%s1577] sm:$0x1]
  %s1579 = scalar_lea.vmem %s12, 1
  %v1580 = vld [vmem:[%s1579] sm:$0x1]
  %v1581 = vsel %vm175, %v1575, 0.0
  %1582 = vadd.xlane.f32.xlu0 %v1581
  %v1583 = vpop.xlane.xlu0 %1582
  %v1584 = vsel %vm175, %v1576, 0.0
  %1585 = vadd.xlane.f32.xlu0 %v1584
  %v1586 = vpop.xlane.xlu0 %1585
  %v1587 = vmul.f32 %v1575, %v1575
  %v1588 = vmul.f32 %v1576, %v1576
  %v1589 = vsel %vm175, %v1587, 0.0
  %1590 = vadd.xlane.f32.xlu0 %v1589
  %v1591 = vpop.xlane.xlu0 %1590
  %v1592 = vsel %vm175, %v1588, 0.0
  %1593 = vadd.xlane.f32.xlu0 %v1592
  %v1594 = vpop.xlane.xlu0 %1593
  %v1595 = vmul.f32 %v1583, 0.015625
  %v1596 = vmul.f32 %v1586, 0.015625
  %v1597 = vmul.f32 %v1591, 0.015625
  %v1598 = vmul.f32 %v1594, 0.015625
  %v1599 = vmul.f32 %v1595, %v1595
  %v1600 = vmul.f32 %v1596, %v1596
  %v1601 = vsub.f32 %v1597, %v1599
  %v1602 = vsub.f32 %v1598, %v1600
  %v1603 = vsub.f32 %v1575, %v1595
  %v1604 = vsub.f32 %v1576, %v1596
  %v1605 = vadd.f32 %v1601, 1e-05
  %v1606 = vadd.f32 %v1602, 1e-05
  %v1607 = vrsqrt.pop %v1605
  %v1608 = vrsqrt.pop %v1606
  %v1609 = vmul.f32 %v1603, %v1607
  %v1610 = vmul.f32 %v1604, %v1608
  %v1612 = vlaneseq
  %v1613 = vshrl.u32 %v1612, 7
  %v1614 = vsub.s32 0, %v1613
  %v1615 = vrot.slane %v1578, %v1614
  %v1617 = vmul.f32 %v1609, %v1615
  %v1618 = vmul.f32 %v1610, %v1615
  %v1620 = vlaneseq
  %v1621 = vshrl.u32 %v1620, 7
  %v1622 = vsub.s32 0, %v1621
  %v1623 = vrot.slane %v1580, %v1622
  %v1625 = vadd.f32 %v1617, %v1623
  %v1626 = vadd.f32 %v1618, %v1623
  %v1627 = vpack.c.bf16 %v1626, %v1625
  %s1628 = scalar_lea.vmem %s13, 64
  %v1629 = vld [vmem:[%s1628] sm:$0xff]
  %v1630 = vld [vmem:[%s1628 + $0x8] sm:$0xff]
  %v1631 = vld [vmem:[%s1628 + $0x10] sm:$0xff]
  %v1632 = vld [vmem:[%s1628 + $0x18] sm:$0xff]
  %v1633 = vld [vmem:[%s1628 + $0x20] sm:$0xff]
  %v1634 = vld [vmem:[%s1628 + $0x28] sm:$0xff]
  %v1635 = vld [vmem:[%s1628 + $0x30] sm:$0xff]
  %v1636 = vld [vmem:[%s1628 + $0x38] sm:$0xff]
  %s1637 = scalar_lea.vmem %s14, 2
  %v1638 = vld [vmem:[%s1637] sm:$0x3]
  %v1640 = vlaneseq
  %v1641 = vshrl.u32 %v1640, 7
  %v1642 = vsub.s32 0, %v1641
  %v1643 = vrot.slane %v1638, %v1642
  %v1644 = vlaneseq
  %v1645 = vshrl.u32 %v1644, 7
  %v1646 = vsub.s32 1, %v1645
  %v1647 = vrot.slane %v1638, %v1646
  %v1658 = vunpack.c.l.b16 %v1629
  %v1659 = vunpack.c.h.b16 %v1629
  %v1660 = vunpack.c.l.b16 %v1630
  %v1661 = vunpack.c.h.b16 %v1630
  %v1662 = vunpack.c.l.b16 %v1631
  %v1663 = vunpack.c.h.b16 %v1631
  %v1664 = vunpack.c.l.b16 %v1632
  %v1665 = vunpack.c.h.b16 %v1632
  %v1666 = vunpack.c.l.b16 %v1633
  %v1667 = vunpack.c.h.b16 %v1633
  %v1668 = vunpack.c.l.b16 %v1634
  %v1669 = vunpack.c.h.b16 %v1634
  %v1670 = vunpack.c.l.b16 %v1635
  %v1671 = vunpack.c.h.b16 %v1635
  %v1672 = vunpack.c.l.b16 %v1636
  %v1673 = vunpack.c.h.b16 %v1636
  %v1674 = vpack.c.b16 %v1660, %v1658
  %v1675 = vpack.c.b16 %v1661, %v1659
  %v1676 = vpack.c.b16 %v1664, %v1662
  %v1677 = vpack.c.b16 %v1665, %v1663
  %v1678 = vpack.c.b16 %v1668, %v1666
  %v1679 = vpack.c.b16 %v1669, %v1667
  %v1680 = vpack.c.b16 %v1672, %v1670
  %v1681 = vpack.c.b16 %v1673, %v1671
  %v1691 = vsel %vm175, %v1627, 0
  %1693 = vmatprep.subr.bf16.mxu0 0
  %1694 = vmatpush1.bf16.msra.mxu0 0
  %1695 = vmatprep.subr.bf16.mxu0 0
  %1696 = vmatpush1.bf16.msra.mxu0 0
  %1697 = vmatprep.subr.bf16.mxu0 0
  %1698 = vmatpush1.bf16.msra.mxu0 0
  %1699 = vmatprep.subr.bf16.mxu0 0
  %1700 = vmatpush1.bf16.msra.mxu0 0
  %1701 = vmatprep.subr.bf16.mxu0 %v1681
  %1702 = vmatpush1.bf16.msra.mxu0 %v1680
  %1703 = vmatprep.subr.bf16.mxu0 %v1679
  %1704 = vmatpush1.bf16.msra.mxu0 %v1678
  %1705 = vmatprep.subr.bf16.mxu0 %v1677
  %1706 = vmatpush1.bf16.msra.mxu0 %v1676
  %1707 = vmatprep.subr.bf16.mxu0 %v1675
  %1708 = vmatpush1.bf16.msra.mxu0 %v1674
  %1709 = vmatprep.subr.bf16.mxu0 0
  %1710 = vmatpush2.bf16.msra.mxu0 0
  %1711 = vmatprep.subr.bf16.mxu0 0
  %1712 = vmatpush2.bf16.msra.mxu0 0
  %1713 = vmatprep.subr.bf16.mxu0 0
  %1714 = vmatpush2.bf16.msra.mxu0 0
  %1715 = vmatprep.subr.bf16.mxu0 0
  %1716 = vmatpush2.bf16.msra.mxu0 0
  %1717 = vmatprep.subr.bf16.mxu0 0
  %1718 = vmatpush2.bf16.msra.mxu0 0
  %1719 = vmatprep.subr.bf16.mxu0 0
  %1720 = vmatpush2.bf16.msra.mxu0 0
  %1721 = vmatprep.subr.bf16.mxu0 0
  %1722 = vmatpush2.bf16.msra.mxu0 0
  %1723 = vmatprep.subr.bf16.mxu0 0
  %1724 = vmatpush2.bf16.msra.mxu0 0
  %1725 = vmatprep.mubr.bf16.mxu0 0
  %1726 = vmatmul.mubr.bf16.gmra.mxu0 %v1691
  %v1727 = vpop.f32.mrf.mxu0
  %v1728 = vadd.f32 %v1643, %v1727
  %v1729 = vpop.f32.mrf.mxu0
  %v1730 = vadd.f32 %v1647, %v1729
  %v1731 = vpop.f32.mrf.mxu0
  %v1732 = vadd.f32 %v1643, %v1731
  %v1733 = vpop.f32.mrf.mxu0
  %v1734 = vadd.f32 %v1647, %v1733
  %1735 = vdwg.mxu0
  %v1736 = vmul.f32 %v1728, 1.702
  %v1737 = vmul.f32 %v1730, 1.702
  %v1738 = vmul.f32 %v1732, 1.702
  %v1739 = vmul.f32 %v1734, 1.702
  %v1740 = vxor.u32 %v1736, 2147483648
  %v1741 = vxor.u32 %v1737, 2147483648
  %v1742 = vxor.u32 %v1738, 2147483648
  %v1743 = vxor.u32 %v1739, 2147483648
  %v1744 = vmul.f32 %v1740, 1.442695
  %v1745 = vpow.pop %v1744
  %v1746 = vmul.f32 %v1741, 1.442695
  %v1747 = vpow.pop %v1746
  %v1748 = vmul.f32 %v1742, 1.442695
  %v1749 = vpow.pop %v1748
  %v1750 = vmul.f32 %v1743, 1.442695
  %v1751 = vpow.pop %v1750
  %v1752 = vadd.f32 %v1745, 1.0
  %v1753 = vadd.f32 %v1747, 1.0
  %v1754 = vadd.f32 %v1749, 1.0
  %v1755 = vadd.f32 %v1751, 1.0
  %v1756 = vrcp.pop %v1752
  %v1757 = vmul.f32 1.0, %v1756
  %v1758 = vrcp.pop %v1753
  %v1759 = vmul.f32 1.0, %v1758
  %v1760 = vrcp.pop %v1754
  %v1761 = vmul.f32 1.0, %v1760
  %v1762 = vrcp.pop %v1755
  %v1763 = vmul.f32 1.0, %v1762
  %v1764 = vmul.f32 %v1728, %v1757
  %v1765 = vmul.f32 %v1730, %v1759
  %v1766 = vmul.f32 %v1732, %v1761
  %v1767 = vmul.f32 %v1734, %v1763
  %v1768 = vpack.c.bf16 %v1766, %v1764
  %v1769 = vpack.c.bf16 %v1767, %v1765
  %s1770 = scalar_lea.vmem %s15, 128
  %v1771 = vld [vmem:[%s1770] sm:$0xf]
  %v1772 = vld [vmem:[%s1770 + $0x4] sm:$0xf]
  %v1773 = vld [vmem:[%s1770 + $0x8] sm:$0xf]
  %v1774 = vld [vmem:[%s1770 + $0xc] sm:$0xf]
  %v1775 = vld [vmem:[%s1770 + $0x10] sm:$0xf]
  %v1776 = vld [vmem:[%s1770 + $0x14] sm:$0xf]
  %v1777 = vld [vmem:[%s1770 + $0x18] sm:$0xf]
  %v1778 = vld [vmem:[%s1770 + $0x1c] sm:$0xf]
  %v1779 = vld [vmem:[%s1770 + $0x20] sm:$0xf]
  %v1780 = vld [vmem:[%s1770 + $0x24] sm:$0xf]
  %v1781 = vld [vmem:[%s1770 + $0x28] sm:$0xf]
  %v1782 = vld [vmem:[%s1770 + $0x2c] sm:$0xf]
  %v1783 = vld [vmem:[%s1770 + $0x30] sm:$0xf]
  %v1784 = vld [vmem:[%s1770 + $0x34] sm:$0xf]
  %v1785 = vld [vmem:[%s1770 + $0x38] sm:$0xf]
  %v1786 = vld [vmem:[%s1770 + $0x3c] sm:$0xf]
  %v1787 = vld [vmem:[%s1770 + $0x40] sm:$0xf]
  %v1788 = vld [vmem:[%s1770 + $0x44] sm:$0xf]
  %v1789 = vld [vmem:[%s1770 + $0x48] sm:$0xf]
  %v1790 = vld [vmem:[%s1770 + $0x4c] sm:$0xf]
  %v1791 = vld [vmem:[%s1770 + $0x50] sm:$0xf]
  %v1792 = vld [vmem:[%s1770 + $0x54] sm:$0xf]
  %v1793 = vld [vmem:[%s1770 + $0x58] sm:$0xf]
  %v1794 = vld [vmem:[%s1770 + $0x5c] sm:$0xf]
  %v1795 = vld [vmem:[%s1770 + $0x60] sm:$0xf]
  %v1796 = vld [vmem:[%s1770 + $0x64] sm:$0xf]
  %v1797 = vld [vmem:[%s1770 + $0x68] sm:$0xf]
  %v1798 = vld [vmem:[%s1770 + $0x6c] sm:$0xf]
  %v1799 = vld [vmem:[%s1770 + $0x70] sm:$0xf]
  %v1800 = vld [vmem:[%s1770 + $0x74] sm:$0xf]
  %v1801 = vld [vmem:[%s1770 + $0x78] sm:$0xf]
  %v1802 = vld [vmem:[%s1770 + $0x7c] sm:$0xf]
  %s1803 = scalar_lea.vmem %s16, 1
  %v1804 = vld [vmem:[%s1803] sm:$0x1]
  %v1806 = vlaneseq
  %v1807 = vshrl.u32 %v1806, 7
  %v1808 = vsub.s32 0, %v1807
  %v1809 = vrot.slane %v1804, %v1808
  %v1843 = vunpack.c.l.b16 %v1771
  %v1844 = vunpack.c.l.b16 %v1772
  %v1845 = vunpack.c.l.b16 %v1773
  %v1846 = vunpack.c.l.b16 %v1774
  %v1847 = vunpack.c.l.b16 %v1775
  %v1848 = vunpack.c.l.b16 %v1776
  %v1849 = vunpack.c.l.b16 %v1777
  %v1850 = vunpack.c.l.b16 %v1778
  %v1851 = vunpack.c.l.b16 %v1779
  %v1852 = vunpack.c.l.b16 %v1780
  %v1853 = vunpack.c.l.b16 %v1781
  %v1854 = vunpack.c.l.b16 %v1782
  %v1855 = vunpack.c.l.b16 %v1783
  %v1856 = vunpack.c.l.b16 %v1784
  %v1857 = vunpack.c.l.b16 %v1785
  %v1858 = vunpack.c.l.b16 %v1786
  %v1859 = vunpack.c.l.b16 %v1787
  %v1860 = vunpack.c.l.b16 %v1788
  %v1861 = vunpack.c.l.b16 %v1789
  %v1862 = vunpack.c.l.b16 %v1790
  %v1863 = vunpack.c.l.b16 %v1791
  %v1864 = vunpack.c.l.b16 %v1792
  %v1865 = vunpack.c.l.b16 %v1793
  %v1866 = vunpack.c.l.b16 %v1794
  %v1867 = vunpack.c.l.b16 %v1795
  %v1868 = vunpack.c.l.b16 %v1796
  %v1869 = vunpack.c.l.b16 %v1797
  %v1870 = vunpack.c.l.b16 %v1798
  %v1871 = vunpack.c.l.b16 %v1799
  %v1872 = vunpack.c.l.b16 %v1800
  %v1873 = vunpack.c.l.b16 %v1801
  %v1874 = vunpack.c.l.b16 %v1802
  %v1875 = vpack.c.b16 %v1844, %v1843
  %v1876 = vpack.c.b16 %v1846, %v1845
  %v1877 = vpack.c.b16 %v1848, %v1847
  %v1878 = vpack.c.b16 %v1850, %v1849
  %v1879 = vpack.c.b16 %v1852, %v1851
  %v1880 = vpack.c.b16 %v1854, %v1853
  %v1881 = vpack.c.b16 %v1856, %v1855
  %v1882 = vpack.c.b16 %v1858, %v1857
  %v1883 = vpack.c.b16 %v1860, %v1859
  %v1884 = vpack.c.b16 %v1862, %v1861
  %v1885 = vpack.c.b16 %v1864, %v1863
  %v1886 = vpack.c.b16 %v1866, %v1865
  %v1887 = vpack.c.b16 %v1868, %v1867
  %v1888 = vpack.c.b16 %v1870, %v1869
  %v1889 = vpack.c.b16 %v1872, %v1871
  %v1890 = vpack.c.b16 %v1874, %v1873
  %1907 = vmatprep.subr.bf16.mxu0 0
  %1908 = vmatpush1.bf16.msra.mxu0 %v1882
  %1909 = vmatprep.subr.bf16.mxu0 0
  %1910 = vmatpush1.bf16.msra.mxu0 %v1881
  %1911 = vmatprep.subr.bf16.mxu0 0
  %1912 = vmatpush1.bf16.msra.mxu0 %v1880
  %1913 = vmatprep.subr.bf16.mxu0 0
  %1914 = vmatpush1.bf16.msra.mxu0 %v1879
  %1915 = vmatprep.subr.bf16.mxu0 0
  %1916 = vmatpush1.bf16.msra.mxu0 %v1878
  %1917 = vmatprep.subr.bf16.mxu0 0
  %1918 = vmatpush1.bf16.msra.mxu0 %v1877
  %1919 = vmatprep.subr.bf16.mxu0 0
  %1920 = vmatpush1.bf16.msra.mxu0 %v1876
  %1921 = vmatprep.subr.bf16.mxu0 0
  %1922 = vmatpush1.bf16.msra.mxu0 %v1875
  %1923 = vmatprep.subr.bf16.mxu0 0
  %1924 = vmatpush2.bf16.msra.mxu0 %v1890
  %1925 = vmatprep.subr.bf16.mxu0 0
  %1926 = vmatpush2.bf16.msra.mxu0 %v1889
  %1927 = vmatprep.subr.bf16.mxu0 0
  %1928 = vmatpush2.bf16.msra.mxu0 %v1888
  %1929 = vmatprep.subr.bf16.mxu0 0
  %1930 = vmatpush2.bf16.msra.mxu0 %v1887
  %1931 = vmatprep.subr.bf16.mxu0 0
  %1932 = vmatpush2.bf16.msra.mxu0 %v1886
  %1933 = vmatprep.subr.bf16.mxu0 0
  %1934 = vmatpush2.bf16.msra.mxu0 %v1885
  %1935 = vmatprep.subr.bf16.mxu0 0
  %1936 = vmatpush2.bf16.msra.mxu0 %v1884
  %1937 = vmatprep.subr.bf16.mxu0 0
  %1938 = vmatpush2.bf16.msra.mxu0 %v1883
  %1939 = vmatprep.mubr.bf16.mxu0 %v1769
  %1940 = vmatmul.mubr.bf16.gmra.mxu0 %v1768
  %v1941 = vpop.f32.mrf.mxu0
  %v1942 = vadd.f32 %v1809, %v1941
  %v1943 = vpop.f32.mrf.mxu0
  %v1944 = vpop.f32.mrf.mxu0
  %v1945 = vadd.f32 %v1809, %v1944
  %v1946 = vpop.f32.mrf.mxu0
  %1947 = vdwg.mxu0
  %v1948 = vadd.f32 %v1575, %v1942
  %v1949 = vadd.f32 %v1576, %v1945
  %v1951 = vrot.slane %v1949, 7
  %vm1953 = vcmask 1040384
  %v1954 = vsel %vm1953, %v1948, %v1951
  %v1955 = vld [vmem:[%s17] sm:$0x1]
  %v1956 = vld [vmem:[%s18] sm:$0x1]
  %vm1957 = vcmask 517120
  %v1958 = vsel %vm1957, %v1954, 0.0
  %1959 = vadd.xlane.f32.xlu0 %v1958
  %v1960 = vpop.xlane.xlu0 %1959
  %v1961 = vmul.f32 %v1954, %v1954
  %v1962 = vsel %vm1957, %v1961, 0.0
  %1963 = vadd.xlane.f32.xlu0 %v1962
  %v1964 = vpop.xlane.xlu0 %1963
  %v1965 = vmul.f32 %v1960, 0.015625
  %v1966 = vmul.f32 %v1964, 0.015625
  %v1967 = vmul.f32 %v1965, %v1965
  %v1968 = vsub.f32 %v1966, %v1967
  %v1969 = vsub.f32 %v1954, %v1965
  %v1970 = vadd.f32 %v1968, 1e-05
  %v1971 = vrsqrt.pop %v1970
  %v1972 = vmul.f32 %v1969, %v1971
  %v1974 = vlaneseq
  %v1975 = vshrl.u32 %v1974, 7
  %v1976 = vsub.s32 0, %v1975
  %v1977 = vrot.slane %v1955, %v1976
  %v1979 = vmul.f32 %v1972, %v1977
  %v1981 = vlaneseq
  %v1982 = vshrl.u32 %v1981, 7
  %v1983 = vsub.s32 0, %v1982
  %v1984 = vrot.slane %v1956, %v1983
  %v1986 = vadd.f32 %v1979, %v1984
  %v1987 = vpack.c.bf16 %v1986, %v1986
  %v1988 = vld [vmem:[%s19] sm:$0xf]
  %v1989 = vld [vmem:[%s19 + $0x4] sm:$0xf]
  %v1990 = vld [vmem:[%s19 + $0x8] sm:$0xf]
  %v1991 = vld [vmem:[%s19 + $0xc] sm:$0xf]
  %v1992 = vld [vmem:[%s19 + $0x10] sm:$0xf]
  %v1993 = vld [vmem:[%s19 + $0x14] sm:$0xf]
  %v1994 = vld [vmem:[%s19 + $0x18] sm:$0xf]
  %v1995 = vld [vmem:[%s19 + $0x1c] sm:$0xf]
  %v2004 = vunpack.c.l.b16 %v1988
  %v2005 = vunpack.c.l.b16 %v1989
  %v2006 = vunpack.c.l.b16 %v1990
  %v2007 = vunpack.c.l.b16 %v1991
  %v2008 = vunpack.c.l.b16 %v1992
  %v2009 = vunpack.c.l.b16 %v1993
  %v2010 = vunpack.c.l.b16 %v1994
  %v2011 = vunpack.c.l.b16 %v1995
  %v2012 = vpack.c.b16 %v2005, %v2004
  %v2013 = vpack.c.b16 %v2007, %v2006
  %v2014 = vpack.c.b16 %v2009, %v2008
  %v2015 = vpack.c.b16 %v2011, %v2010
  %v2021 = vsel %vm175, %v1987, 0
  %2023 = vmatprep.subr.bf16.mxu0 0
  %2024 = vmatpush1.bf16.msra.mxu0 0
  %2025 = vmatprep.subr.bf16.mxu0 0
  %2026 = vmatpush1.bf16.msra.mxu0 0
  %2027 = vmatprep.subr.bf16.mxu0 0
  %2028 = vmatpush1.bf16.msra.mxu0 0
  %2029 = vmatprep.subr.bf16.mxu0 0
  %2030 = vmatpush1.bf16.msra.mxu0 0
  %2031 = vmatprep.subr.bf16.mxu0 0
  %2032 = vmatpush1.bf16.msra.mxu0 %v2015
  %2033 = vmatprep.subr.bf16.mxu0 0
  %2034 = vmatpush1.bf16.msra.mxu0 %v2014
  %2035 = vmatprep.subr.bf16.mxu0 0
  %2036 = vmatpush1.bf16.msra.mxu0 %v2013
  %2037 = vmatprep.subr.bf16.mxu0 0
  %2038 = vmatpush1.bf16.msra.mxu0 %v2012
  %2039 = vmatprep.subr.bf16.mxu0 0
  %2040 = vmatpush2.bf16.msra.mxu0 0
  %2041 = vmatprep.subr.bf16.mxu0 0
  %2042 = vmatpush2.bf16.msra.mxu0 0
  %2043 = vmatprep.subr.bf16.mxu0 0
  %2044 = vmatpush2.bf16.msra.mxu0 0
  %2045 = vmatprep.subr.bf16.mxu0 0
  %2046 = vmatpush2.bf16.msra.mxu0 0
  %2047 = vmatprep.subr.bf16.mxu0 0
  %2048 = vmatpush2.bf16.msra.mxu0 0
  %2049 = vmatprep.subr.bf16.mxu0 0
  %2050 = vmatpush2.bf16.msra.mxu0 0
  %2051 = vmatprep.subr.bf16.mxu0 0
  %2052 = vmatpush2.bf16.msra.mxu0 0
  %2053 = vmatprep.subr.bf16.mxu0 0
  %2054 = vmatpush2.bf16.msra.mxu0 0
  %2055 = vmatprep.mubr.bf16.mxu0 0
  %2056 = vmatmul.mubr.bf16.gmra.mxu0 %v2021
  %v2057 = vpop.f32.mrf.mxu0
  %v2058 = vadd.f32 0.0, %v2057
  %v2059 = vpop.f32.mrf.mxu0
  %v2060 = vpop.f32.mrf.mxu0
  %v2061 = vpop.f32.mrf.mxu0
  %2062 = vdwg.mxu0
  %vm2063 = vcmask 254976
  %2064 = vst.msk [vmem:[%s20] sm:$0x3] %vm2063, %v2058
  // Predicated region
  $region82: #{clip_forward.3} parent=0 // pred_check
    _
  $region83: #{clip_forward.3} parent=0 // pred_check_branch
    %2066 = sbr.rel (0) target = $region85
  $region84: #{clip_forward.3} parent=0 // pred_region
    _
  $region85: #{clip_forward.3} parent=0 // pred_fallthru
    _
  // Predicated region
  $region86: #{clip_forward.3} parent=0 // pred_check
    _
  $region87: #{clip_forward.3} parent=0 // pred_check_branch
    %2068 = sbr.rel (0) target = $region89
  $region88: #{clip_forward.3} parent=0 // pred_region
    _
  $region89: #{clip_forward.3} parent=0 // pred_fallthru
    _

// kernel: clip_forward.4
$region0: #{clip_forward.4}
  #allocation0 [shape = 'u32[]', space=smem, size = 0x4, offset = 0x4, fixed_abs, tag = 'smem constant byte address 0x4 - core index']
  #allocation1 [shape = 'u32[144,128]{1,0:T(1,128)}', space=vmem, size = 0x12000, scoped, tag = 'internal scratch']
  #allocation2 [shape = 'f32[16,64]{1,0:T(8,128)}', space=vmem, size = 0x2000, scoped, tag = 'scratch operand']
  #allocation3 [shape = 's32[1]{0}', space=sflag, size = 0x4, scoped, tag = 'scoped memory for clip_forward.4']
  #allocation4 [shape = 'u8[512]{0}', space=smem, size = 0x200, scoped, tag = 'prefetched SMEM operand 0']
  %s0 = inlined_call_operand.vmem [shape: s32[2], index: 0, kind: input, shape index: {}]
  %s1 = inlined_call_operand.vmem [shape: f32[16,64], index: 1, kind: input, shape index: {}]
  %s2 = inlined_call_operand.vmem [shape: f32[16,64], index: 2, kind: input, shape index: {}]
  %s3 = inlined_call_operand.vmem [shape: f32[2,1,64], index: 3, kind: input, shape index: {}]
  %s4 = inlined_call_operand.vmem [shape: f32[2,1,64], index: 4, kind: input, shape index: {}]
  %s5 = inlined_call_operand.vmem [shape: bf16[2,64,192], index: 5, kind: input, shape index: {}]
  %s6 = inlined_call_operand.vmem [shape: f32[2,1,192], index: 6, kind: input, shape index: {}]
  %s7 = inlined_call_operand.vmem [shape: bf16[2,64,64], index: 7, kind: input, shape index: {}]
  %s8 = inlined_call_operand.vmem [shape: f32[2,1,64], index: 8, kind: input, shape index: {}]
  %s9 = inlined_call_operand.vmem [shape: f32[2,1,64], index: 9, kind: input, shape index: {}]
  %s10 = inlined_call_operand.vmem [shape: f32[2,1,64], index: 10, kind: input, shape index: {}]
  %s11 = inlined_call_operand.vmem [shape: bf16[2,64,256], index: 11, kind: input, shape index: {}]
  %s12 = inlined_call_operand.vmem [shape: f32[2,1,256], index: 12, kind: input, shape index: {}]
  %s13 = inlined_call_operand.vmem [shape: bf16[2,256,64], index: 13, kind: input, shape index: {}]
  %s14 = inlined_call_operand.vmem [shape: f32[2,1,64], index: 14, kind: input, shape index: {}]
  %s15 = inlined_call_operand.vmem [shape: f32[1,64], index: 15, kind: input, shape index: {}]
  %s16 = inlined_call_operand.vmem [shape: f32[1,64], index: 16, kind: input, shape index: {}]
  %s17 = inlined_call_operand.vmem [shape: bf16[64,32], index: 17, kind: input, shape index: {}]
  %s18 = inlined_call_operand.vmem [shape: f32[2,32], index: 18, kind: output, shape index: {}]
  %s19 = sld [smem:[#allocation0]]
  $region78: #{clip_forward.4} parent=0
    _
  %s21 = ssub.s32 1, %s19
  %s22 = scalar_select 0, %s21, %s19
  %s23 = sshll.u32 %s0, 4
  %s24 = int_to_ptr.vmem [resolvable:$true] %s23
  %26 = dma.vmem_to_smem %s24, 16, [#allocation4], [#allocation3]
  %27 = dma.done [#allocation3], 16
  %28 = sfence
  // Predicated region
  $region2: #{clip_forward.4} parent=0 // pred_check
    _
  $region3: #{clip_forward.4} parent=0 // pred_check_branch
    %30 = sbr.rel (0) target = $region5
  $region4: #{clip_forward.4} parent=0 // pred_region
    _
  $region5: #{clip_forward.4} parent=0 // pred_fallthru
    _
  // Predicated region
  $region6: #{clip_forward.4} parent=0 // pred_check
    _
  $region7: #{clip_forward.4} parent=0 // pred_check_branch
    %32 = sbr.rel (0) target = $region9
  $region8: #{clip_forward.4} parent=0 // pred_region
    _
  $region9: #{clip_forward.4} parent=0 // pred_fallthru
    _
  // Predicated region
  $region10: #{clip_forward.4} parent=0 // pred_check
    _
  $region11: #{clip_forward.4} parent=0 // pred_check_branch
    %34 = sbr.rel (0) target = $region13
  $region12: #{clip_forward.4} parent=0 // pred_region
    _
  $region13: #{clip_forward.4} parent=0 // pred_fallthru
    _
  // Predicated region
  $region14: #{clip_forward.4} parent=0 // pred_check
    _
  $region15: #{clip_forward.4} parent=0 // pred_check_branch
    %36 = sbr.rel (0) target = $region17
  $region16: #{clip_forward.4} parent=0 // pred_region
    _
  $region17: #{clip_forward.4} parent=0 // pred_fallthru
    _
  // Predicated region
  $region18: #{clip_forward.4} parent=0 // pred_check
    _
  $region19: #{clip_forward.4} parent=0 // pred_check_branch
    %38 = sbr.rel (0) target = $region21
  $region20: #{clip_forward.4} parent=0 // pred_region
    _
  $region21: #{clip_forward.4} parent=0 // pred_fallthru
    _
  // Predicated region
  $region22: #{clip_forward.4} parent=0 // pred_check
    _
  $region23: #{clip_forward.4} parent=0 // pred_check_branch
    %40 = sbr.rel (0) target = $region25
  $region24: #{clip_forward.4} parent=0 // pred_region
    _
  $region25: #{clip_forward.4} parent=0 // pred_fallthru
    _
  // Predicated region
  $region26: #{clip_forward.4} parent=0 // pred_check
    _
  $region27: #{clip_forward.4} parent=0 // pred_check_branch
    %42 = sbr.rel (0) target = $region29
  $region28: #{clip_forward.4} parent=0 // pred_region
    _
  $region29: #{clip_forward.4} parent=0 // pred_fallthru
    _
  // Predicated region
  $region30: #{clip_forward.4} parent=0 // pred_check
    _
  $region31: #{clip_forward.4} parent=0 // pred_check_branch
    %44 = sbr.rel (0) target = $region33
  $region32: #{clip_forward.4} parent=0 // pred_region
    _
  $region33: #{clip_forward.4} parent=0 // pred_fallthru
    _
  // Predicated region
  $region34: #{clip_forward.4} parent=0 // pred_check
    _
  $region35: #{clip_forward.4} parent=0 // pred_check_branch
    %46 = sbr.rel (0) target = $region37
  $region36: #{clip_forward.4} parent=0 // pred_region
    _
  $region37: #{clip_forward.4} parent=0 // pred_fallthru
    _
  // Predicated region
  $region38: #{clip_forward.4} parent=0 // pred_check
    _
  $region39: #{clip_forward.4} parent=0 // pred_check_branch
    %48 = sbr.rel (0) target = $region41
  $region40: #{clip_forward.4} parent=0 // pred_region
    _
  $region41: #{clip_forward.4} parent=0 // pred_fallthru
    _
  // Predicated region
  $region42: #{clip_forward.4} parent=0 // pred_check
    _
  $region43: #{clip_forward.4} parent=0 // pred_check_branch
    %50 = sbr.rel (0) target = $region45
  $region44: #{clip_forward.4} parent=0 // pred_region
    _
  $region45: #{clip_forward.4} parent=0 // pred_fallthru
    _
  // Predicated region
  $region46: #{clip_forward.4} parent=0 // pred_check
    _
  $region47: #{clip_forward.4} parent=0 // pred_check_branch
    %52 = sbr.rel (0) target = $region49
  $region48: #{clip_forward.4} parent=0 // pred_region
    _
  $region49: #{clip_forward.4} parent=0 // pred_fallthru
    _
  // Predicated region
  $region50: #{clip_forward.4} parent=0 // pred_check
    _
  $region51: #{clip_forward.4} parent=0 // pred_check_branch
    %54 = sbr.rel (0) target = $region53
  $region52: #{clip_forward.4} parent=0 // pred_region
    _
  $region53: #{clip_forward.4} parent=0 // pred_fallthru
    _
  // Predicated region
  $region54: #{clip_forward.4} parent=0 // pred_check
    _
  $region55: #{clip_forward.4} parent=0 // pred_check_branch
    %56 = sbr.rel (0) target = $region57
  $region56: #{clip_forward.4} parent=0 // pred_region
    _
  $region57: #{clip_forward.4} parent=0 // pred_fallthru
    _
  // Predicated region
  $region58: #{clip_forward.4} parent=0 // pred_check
    _
  $region59: #{clip_forward.4} parent=0 // pred_check_branch
    %58 = sbr.rel (0) target = $region61
  $region60: #{clip_forward.4} parent=0 // pred_region
    _
  $region61: #{clip_forward.4} parent=0 // pred_fallthru
    _
  // Predicated region
  $region62: #{clip_forward.4} parent=0 // pred_check
    _
  $region63: #{clip_forward.4} parent=0 // pred_check_branch
    %60 = sbr.rel (0) target = $region65
  $region64: #{clip_forward.4} parent=0 // pred_region
    _
  $region65: #{clip_forward.4} parent=0 // pred_fallthru
    _
  // Predicated region
  $region66: #{clip_forward.4} parent=0 // pred_check
    _
  $region67: #{clip_forward.4} parent=0 // pred_check_branch
    %62 = sbr.rel (0) target = $region69
  $region68: #{clip_forward.4} parent=0 // pred_region
    _
  $region69: #{clip_forward.4} parent=0 // pred_fallthru
    _
  %v64 = vld [vmem:[%s1] sm:$0xff]
  %v65 = vld [vmem:[%s1 + $0x8] sm:$0xff]
  %v66 = vld [vmem:[%s2] sm:$0xff]
  %v67 = vld [vmem:[%s2 + $0x8] sm:$0xff]
  %v68 = vadd.f32 %v64, %v66
  %v69 = vadd.f32 %v65, %v67
  %v70 = vlaneseq
  %v71 = vshrl.u32 %v70, 7
  %v72 = vlaneseq
  %v73 = vand.u32 %v72, 127
  %vm74 = vcmp.gt.s32.totalorder %v73, %v71
  %v75 = vsel %vm74, -1e+30, 0.0
  %v76 = vld [vmem:[%s3] sm:$0x1]
  %v77 = vld [vmem:[%s4] sm:$0x1]
  %vm78 = vcmask 523264
  %v79 = vsel %vm78, %v68, 0.0
  %80 = vadd.xlane.f32.xlu0 %v79
  %v81 = vpop.xlane.xlu0 %80
  %v82 = vsel %vm78, %v69, 0.0
  %83 = vadd.xlane.f32.xlu0 %v82
  %v84 = vpop.xlane.xlu0 %83
  %v85 = vmul.f32 %v68, %v68
  %v86 = vmul.f32 %v69, %v69
  %v87 = vsel %vm78, %v85, 0.0
  %88 = vadd.xlane.f32.xlu0 %v87
  %v89 = vpop.xlane.xlu0 %88
  %v90 = vsel %vm78, %v86, 0.0
  %91 = vadd.xlane.f32.xlu0 %v90
  %v92 = vpop.xlane.xlu0 %91
  %v93 = vmul.f32 %v81, 0.015625
  %v94 = vmul.f32 %v84, 0.015625
  %v95 = vmul.f32 %v89, 0.015625
  %v96 = vmul.f32 %v92, 0.015625
  %v97 = vmul.f32 %v93, %v93
  %v98 = vmul.f32 %v94, %v94
  %v99 = vsub.f32 %v95, %v97
  %v100 = vsub.f32 %v96, %v98
  %v101 = vsub.f32 %v68, %v93
  %v102 = vsub.f32 %v69, %v94
  %v103 = vadd.f32 %v99, 1e-05
  %v104 = vadd.f32 %v100, 1e-05
  %v105 = vrsqrt.pop %v103
  %v106 = vrsqrt.pop %v104
  %v107 = vmul.f32 %v101, %v105
  %v108 = vmul.f32 %v102, %v106
  %v110 = vlaneseq
  %v111 = vshrl.u32 %v110, 7
  %v112 = vsub.s32 0, %v111
  %v113 = vrot.slane %v76, %v112
  %v115 = vmul.f32 %v107, %v113
  %v116 = vmul.f32 %v108, %v113
  %v118 = vlaneseq
  %v119 = vshrl.u32 %v118, 7
  %v120 = vsub.s32 0, %v119
  %v121 = vrot.slane %v77, %v120
  %v123 = vadd.f32 %v115, %v121
  %v124 = vadd.f32 %v116, %v121
  %v125 = vpack.c.bf16 %v124, %v123
  %v126 = vld [vmem:[%s5] sm:$0xff]
  %v127 = vld [vmem:[%s5 + $0x8] sm:$0xff]
  %v128 = vld [vmem:[%s5 + $0x10] sm:$0xff]
  %v129 = vld [vmem:[%s5 + $0x18] sm:$0xff]
  %v130 = vld [vmem:[%s5 + $0x20] sm:$0xff]
  %v131 = vld [vmem:[%s5 + $0x28] sm:$0xff]
  %v132 = vld [vmem:[%s5 + $0x30] sm:$0xff]
  %v133 = vld [vmem:[%s5 + $0x38] sm:$0xff]
  %v134 = vld [vmem:[%s6] sm:$0x3]
  %v136 = vlaneseq
  %v137 = vshrl.u32 %v136, 7
  %v138 = vsub.s32 0, %v137
  %v139 = vrot.slane %v134, %v138
  %v140 = vlaneseq
  %v141 = vshrl.u32 %v140, 7
  %v142 = vsub.s32 1, %v141
  %v143 = vrot.slane %v134, %v142
  %v154 = vunpack.c.l.b16 %v126
  %v155 = vunpack.c.h.b16 %v126
  %v156 = vunpack.c.l.b16 %v127
  %v157 = vunpack.c.h.b16 %v127
  %v158 = vunpack.c.l.b16 %v128
  %v159 = vunpack.c.h.b16 %v128
  %v160 = vunpack.c.l.b16 %v129
  %v161 = vunpack.c.h.b16 %v129
  %v162 = vunpack.c.l.b16 %v130
  %v163 = vunpack.c.h.b16 %v130
  %v164 = vunpack.c.l.b16 %v131
  %v165 = vunpack.c.h.b16 %v131
  %v166 = vunpack.c.l.b16 %v132
  %v167 = vunpack.c.h.b16 %v132
  %v168 = vunpack.c.l.b16 %v133
  %v169 = vunpack.c.h.b16 %v133
  %v170 = vpack.c.b16 %v156, %v154
  %v171 = vpack.c.b16 %v157, %v155
  %v172 = vpack.c.b16 %v160, %v158
  %v173 = vpack.c.b16 %v161, %v159
  %v174 = vpack.c.b16 %v164, %v162
  %v175 = vpack.c.b16 %v165, %v163
  %v176 = vpack.c.b16 %v168, %v166
  %v177 = vpack.c.b16 %v169, %v167
  %v187 = vsel %vm78, %v125, 0
  %189 = vmatprep.subr.bf16.mxu0 0
  %190 = vmatpush1.bf16.msra.mxu0 0
  %191 = vmatprep.subr.bf16.mxu0 0
  %192 = vmatpush1.bf16.msra.mxu0 0
  %193 = vmatprep.subr.bf16.mxu0 0
  %194 = vmatpush1.bf16.msra.mxu0 0
  %195 = vmatprep.subr.bf16.mxu0 0
  %196 = vmatpush1.bf16.msra.mxu0 0
  %197 = vmatprep.subr.bf16.mxu0 %v177
  %198 = vmatpush1.bf16.msra.mxu0 %v176
  %199 = vmatprep.subr.bf16.mxu0 %v175
  %200 = vmatpush1.bf16.msra.mxu0 %v174
  %201 = vmatprep.subr.bf16.mxu0 %v173
  %202 = vmatpush1.bf16.msra.mxu0 %v172
  %203 = vmatprep.subr.bf16.mxu0 %v171
  %204 = vmatpush1.bf16.msra.mxu0 %v170
  %205 = vmatprep.subr.bf16.mxu0 0
  %206 = vmatpush2.bf16.msra.mxu0 0
  %207 = vmatprep.subr.bf16.mxu0 0
  %208 = vmatpush2.bf16.msra.mxu0 0
  %209 = vmatprep.subr.bf16.mxu0 0
  %210 = vmatpush2.bf16.msra.mxu0 0
  %211 = vmatprep.subr.bf16.mxu0 0
  %212 = vmatpush2.bf16.msra.mxu0 0
  %213 = vmatprep.subr.bf16.mxu0 0
  %214 = vmatpush2.bf16.msra.mxu0 0
  %215 = vmatprep.subr.bf16.mxu0 0
  %216 = vmatpush2.bf16.msra.mxu0 0
  %217 = vmatprep.subr.bf16.mxu0 0
  %218 = vmatpush2.bf16.msra.mxu0 0
  %219 = vmatprep.subr.bf16.mxu0 0
  %220 = vmatpush2.bf16.msra.mxu0 0
  %221 = vmatprep.mubr.bf16.mxu0 0
  %222 = vmatmul.mubr.bf16.gmra.mxu0 %v187
  %v223 = vpop.f32.mrf.mxu0
  %v224 = vadd.f32 %v139, %v223
  %v225 = vpop.f32.mrf.mxu0
  %v226 = vadd.f32 %v143, %v225
  %v227 = vpop.f32.mrf.mxu0
  %v228 = vadd.f32 %v139, %v227
  %v229 = vpop.f32.mrf.mxu0
  %v230 = vadd.f32 %v143, %v229
  %231 = vdwg.mxu0
  %v232 = vmul.f32 %v224, 0.17677669
  %v233 = vpack.c.bf16 %v232, %v232
  %v234 = vpack.c.bf16 %v224, %v224
  %236 = vrot.lane.b32.xlu0 %v234, 64
  %v237 = vpop.permute.xlu0 %236
  %vm238 = vcmask 261120
  %v240 = vsel %vm238, %v233, 0
  %v243 = vsel %vm238, %v237, 0
  %245 = vmatprep.subr.bf16.mxu0 0
  %246 = vmatpush1.bf16.xpose.msra.mxu0 0
  %247 = vmatprep.subr.bf16.mxu0 0
  %248 = vmatpush1.bf16.xpose.msra.mxu0 0
  %249 = vmatprep.subr.bf16.mxu0 0
  %250 = vmatpush1.bf16.xpose.msra.mxu0 0
  %251 = vmatprep.subr.bf16.mxu0 0
  %252 = vmatpush1.bf16.xpose.msra.mxu0 0
  %253 = vmatprep.subr.bf16.mxu0 0
  %254 = vmatpush1.bf16.xpose.msra.mxu0 0
  %255 = vmatprep.subr.bf16.mxu0 0
  %256 = vmatpush1.bf16.xpose.msra.mxu0 0
  %257 = vmatprep.subr.bf16.mxu0 0
  %258 = vmatpush1.bf16.xpose.msra.mxu0 0
  %259 = vmatprep.subr.bf16.mxu0 0
  %260 = vmatpush1.bf16.xpose.msra.mxu0 %v243
  %261 = vmatprep.subr.bf16.mxu0 0
  %262 = vmatpush2.bf16.xpose.msra.mxu0 0
  %263 = vmatprep.subr.bf16.mxu0 0
  %264 = vmatpush2.bf16.xpose.msra.mxu0 0
  %265 = vmatprep.subr.bf16.mxu0 0
  %266 = vmatpush2.bf16.xpose.msra.mxu0 0
  %267 = vmatprep.subr.bf16.mxu0 0
  %268 = vmatpush2.bf16.xpose.msra.mxu0 0
  %269 = vmatprep.subr.bf16.mxu0 0
  %270 = vmatpush2.bf16.xpose.msra.mxu0 0
  %271 = vmatprep.subr.bf16.mxu0 0
  %272 = vmatpush2.bf16.xpose.msra.mxu0 0
  %273 = vmatprep.subr.bf16.mxu0 0
  %274 = vmatpush2.bf16.xpose.msra.mxu0 0
  %275 = vmatprep.subr.bf16.mxu0 0
  %276 = vmatpush2.bf16.xpose.msra.mxu0 0
  %277 = vmatprep.mubr.bf16.mxu0 0
  %278 = vmatmul.mubr.bf16.gmra.mxu0 %v240
  %v279 = vpop.f32.mrf.mxu0
  %v280 = vadd.f32 %v75, %v279
  %v281 = vpop.f32.mrf.mxu0
  %v282 = vpop.f32.mrf.mxu0
  %v283 = vpop.f32.mrf.mxu0
  %284 = vdwg.mxu0
  %vm285 = vcmask 64512
  %v286 = vsel %vm285, %v280, -inf
  %287 = vmax.xlane.f32.xlu0 %v286
  %v288 = vpop.xlane.xlu0 %287
  %v289 = vsub.f32 %v280, %v288
  %v290 = vmul.f32 %v289, 1.442695
  %v291 = vpow.pop %v290
  %v292 = vsel %vm285, %v291, 0.0
  %293 = vadd.xlane.f32.xlu0 %v292
  %v294 = vpop.xlane.xlu0 %293
  %v295 = vrcp.pop %v294
  %v296 = vmul.f32 %v291, %v295
  %v297 = vpack.c.bf16 %v296, %v296
  %v298 = vpack.c.bf16 %v226, %v226
  %v300 = vsel %vm285, %v297, 0
  %vm302 = vcmask 1043456
  %v304 = vsel %vm302, %v298, 0
  %306 = vmatprep.subr.bf16.mxu0 0
  %307 = vmatpush1.bf16.msra.mxu0 0
  %308 = vmatprep.subr.bf16.mxu0 0
  %309 = vmatpush1.bf16.msra.mxu0 0
  %310 = vmatprep.subr.bf16.mxu0 0
  %311 = vmatpush1.bf16.msra.mxu0 0
  %312 = vmatprep.subr.bf16.mxu0 0
  %313 = vmatpush1.bf16.msra.mxu0 0
  %314 = vmatprep.subr.bf16.mxu0 0
  %315 = vmatpush1.bf16.msra.mxu0 0
  %316 = vmatprep.subr.bf16.mxu0 0
  %317 = vmatpush1.bf16.msra.mxu0 0
  %318 = vmatprep.subr.bf16.mxu0 0
  %319 = vmatpush1.bf16.msra.mxu0 0
  %320 = vmatprep.subr.bf16.mxu0 0
  %321 = vmatpush1.bf16.msra.mxu0 %v304
  %322 = vmatprep.subr.bf16.mxu0 0
  %323 = vmatpush2.bf16.msra.mxu0 0
  %324 = vmatprep.subr.bf16.mxu0 0
  %325 = vmatpush2.bf16.msra.mxu0 0
  %326 = vmatprep.subr.bf16.mxu0 0
  %327 = vmatpush2.bf16.msra.mxu0 0
  %328 = vmatprep.subr.bf16.mxu0 0
  %329 = vmatpush2.bf16.msra.mxu0 0
  %330 = vmatprep.subr.bf16.mxu0 0
  %331 = vmatpush2.bf16.msra.mxu0 0
  %332 = vmatprep.subr.bf16.mxu0 0
  %333 = vmatpush2.bf16.msra.mxu0 0
  %334 = vmatprep.subr.bf16.mxu0 0
  %335 = vmatpush2.bf16.msra.mxu0 0
  %336 = vmatprep.subr.bf16.mxu0 0
  %337 = vmatpush2.bf16.msra.mxu0 0
  %338 = vmatprep.mubr.bf16.mxu0 0
  %339 = vmatmul.mubr.bf16.gmra.mxu0 %v300
  %v340 = vpop.f32.mrf.mxu0
  %v341 = vadd.f32 0.0, %v340
  %v342 = vpop.f32.mrf.mxu0
  %v343 = vpop.f32.mrf.mxu0
  %v344 = vpop.f32.mrf.mxu0
  %345 = vdwg.mxu0
  %347 = vrot.lane.b32.xlu0 %v233, 96
  %v348 = vpop.permute.xlu0 %347
  %349 = vrot.lane.b32.xlu0 %v234, 32
  %v350 = vpop.permute.xlu0 %349
  %v352 = vsel %vm238, %v348, 0
  %v355 = vsel %vm238, %v350, 0
  %357 = vmatprep.subr.bf16.mxu0 0
  %358 = vmatpush1.bf16.xpose.msra.mxu0 0
  %359 = vmatprep.subr.bf16.mxu0 0
  %360 = vmatpush1.bf16.xpose.msra.mxu0 0
  %361 = vmatprep.subr.bf16.mxu0 0
  %362 = vmatpush1.bf16.xpose.msra.mxu0 0
  %363 = vmatprep.subr.bf16.mxu0 0
  %364 = vmatpush1.bf16.xpose.msra.mxu0 0
  %365 = vmatprep.subr.bf16.mxu0 0
  %366 = vmatpush1.bf16.xpose.msra.mxu0 0
  %367 = vmatprep.subr.bf16.mxu0 0
  %368 = vmatpush1.bf16.xpose.msra.mxu0 0
  %369 = vmatprep.subr.bf16.mxu0 0
  %370 = vmatpush1.bf16.xpose.msra.mxu0 0
  %371 = vmatprep.subr.bf16.mxu0 0
  %372 = vmatpush1.bf16.xpose.msra.mxu0 %v355
  %373 = vmatprep.subr.bf16.mxu0 0
  %374 = vmatpush2.bf16.xpose.msra.mxu0 0
  %375 = vmatprep.subr.bf16.mxu0 0
  %376 = vmatpush2.bf16.xpose.msra.mxu0 0
  %377 = vmatprep.subr.bf16.mxu0 0
  %378 = vmatpush2.bf16.xpose.msra.mxu0 0
  %379 = vmatprep.subr.bf16.mxu0 0
  %380 = vmatpush2.bf16.xpose.msra.mxu0 0
  %381 = vmatprep.subr.bf16.mxu0 0
  %382 = vmatpush2.bf16.xpose.msra.mxu0 0
  %383 = vmatprep.subr.bf16.mxu0 0
  %384 = vmatpush2.bf16.xpose.msra.mxu0 0
  %385 = vmatprep.subr.bf16.mxu0 0
  %386 = vmatpush2.bf16.xpose.msra.mxu0 0
  %387 = vmatprep.subr.bf16.mxu0 0
  %388 = vmatpush2.bf16.xpose.msra.mxu0 0
  %389 = vmatprep.mubr.bf16.mxu0 0
  %390 = vmatmul.mubr.bf16.gmra.mxu0 %v352
  %v391 = vpop.f32.mrf.mxu0
  %v392 = vadd.f32 %v75, %v391
  %v393 = vpop.f32.mrf.mxu0
  %v394 = vpop.f32.mrf.mxu0
  %v395 = vpop.f32.mrf.mxu0
  %396 = vdwg.mxu0
  %v397 = vsel %vm285, %v392, -inf
  %398 = vmax.xlane.f32.xlu0 %v397
  %v399 = vpop.xlane.xlu0 %398
  %v400 = vsub.f32 %v392, %v399
  %v401 = vmul.f32 %v400, 1.442695
  %v402 = vpow.pop %v401
  %v403 = vsel %vm285, %v402, 0.0
  %404 = vadd.xlane.f32.xlu0 %v403
  %v405 = vpop.xlane.xlu0 %404
  %v406 = vrcp.pop %v405
  %v407 = vmul.f32 %v402, %v406
  %v408 = vpack.c.bf16 %v407, %v407
  %410 = vrot.lane.b32.xlu0 %v298, 96
  %v411 = vpop.permute.xlu0 %410
  %v413 = vsel %vm285, %v408, 0
  %v416 = vsel %vm302, %v411, 0
  %418 = vmatprep.subr.bf16.mxu0 0
  %419 = vmatpush1.bf16.msra.mxu0 0
  %420 = vmatprep.subr.bf16.mxu0 0
  %421 = vmatpush1.bf16.msra.mxu0 0
  %422 = vmatprep.subr.bf16.mxu0 0
  %423 = vmatpush1.bf16.msra.mxu0 0
  %424 = vmatprep.subr.bf16.mxu0 0
  %425 = vmatpush1.bf16.msra.mxu0 0
  %426 = vmatprep.subr.bf16.mxu0 0
  %427 = vmatpush1.bf16.msra.mxu0 0
  %428 = vmatprep.subr.bf16.mxu0 0
  %429 = vmatpush1.bf16.msra.mxu0 0
  %430 = vmatprep.subr.bf16.mxu0 0
  %431 = vmatpush1.bf16.msra.mxu0 0
  %432 = vmatprep.subr.bf16.mxu0 0
  %433 = vmatpush1.bf16.msra.mxu0 %v416
  %434 = vmatprep.subr.bf16.mxu0 0
  %435 = vmatpush2.bf16.msra.mxu0 0
  %436 = vmatprep.subr.bf16.mxu0 0
  %437 = vmatpush2.bf16.msra.mxu0 0
  %438 = vmatprep.subr.bf16.mxu0 0
  %439 = vmatpush2.bf16.msra.mxu0 0
  %440 = vmatprep.subr.bf16.mxu0 0
  %441 = vmatpush2.bf16.msra.mxu0 0
  %442 = vmatprep.subr.bf16.mxu0 0
  %443 = vmatpush2.bf16.msra.mxu0 0
  %444 = vmatprep.subr.bf16.mxu0 0
  %445 = vmatpush2.bf16.msra.mxu0 0
  %446 = vmatprep.subr.bf16.mxu0 0
  %447 = vmatpush2.bf16.msra.mxu0 0
  %448 = vmatprep.subr.bf16.mxu0 0
  %449 = vmatpush2.bf16.msra.mxu0 0
  %450 = vmatprep.mubr.bf16.mxu0 0
  %451 = vmatmul.mubr.bf16.gmra.mxu0 %v413
  %v452 = vpop.f32.mrf.mxu0
  %v453 = vadd.f32 0.0, %v452
  %v454 = vpop.f32.mrf.mxu0
  %v455 = vpop.f32.mrf.mxu0
  %v456 = vpop.f32.mrf.mxu0
  %457 = vdwg.mxu0
  %459 = vrot.lane.b32.xlu0 %v453, 32
  %v460 = vpop.permute.xlu0 %459
  %v462 = vsel %vm238, %v341, %v460
  %v463 = vmul.f32 %v228, 0.17677669
  %v464 = vpack.c.bf16 %v463, %v463
  %v465 = vpack.c.bf16 %v228, %v228
  %467 = vrot.lane.b32.xlu0 %v465, 64
  %v468 = vpop.permute.xlu0 %467
  %v470 = vsel %vm238, %v464, 0
  %v473 = vsel %vm238, %v468, 0
  %475 = vmatprep.subr.bf16.mxu0 0
  %476 = vmatpush1.bf16.xpose.msra.mxu0 0
  %477 = vmatprep.subr.bf16.mxu0 0
  %478 = vmatpush1.bf16.xpose.msra.mxu0 0
  %479 = vmatprep.subr.bf16.mxu0 0
  %480 = vmatpush1.bf16.xpose.msra.mxu0 0
  %481 = vmatprep.subr.bf16.mxu0 0
  %482 = vmatpush1.bf16.xpose.msra.mxu0 0
  %483 = vmatprep.subr.bf16.mxu0 0
  %484 = vmatpush1.bf16.xpose.msra.mxu0 0
  %485 = vmatprep.subr.bf16.mxu0 0
  %486 = vmatpush1.bf16.xpose.msra.mxu0 0
  %487 = vmatprep.subr.bf16.mxu0 0
  %488 = vmatpush1.bf16.xpose.msra.mxu0 0
  %489 = vmatprep.subr.bf16.mxu0 0
  %490 = vmatpush1.bf16.xpose.msra.mxu0 %v473
  %491 = vmatprep.subr.bf16.mxu0 0
  %492 = vmatpush2.bf16.xpose.msra.mxu0 0
  %493 = vmatprep.subr.bf16.mxu0 0
  %494 = vmatpush2.bf16.xpose.msra.mxu0 0
  %495 = vmatprep.subr.bf16.mxu0 0
  %496 = vmatpush2.bf16.xpose.msra.mxu0 0
  %497 = vmatprep.subr.bf16.mxu0 0
  %498 = vmatpush2.bf16.xpose.msra.mxu0 0
  %499 = vmatprep.subr.bf16.mxu0 0
  %500 = vmatpush2.bf16.xpose.msra.mxu0 0
  %501 = vmatprep.subr.bf16.mxu0 0
  %502 = vmatpush2.bf16.xpose.msra.mxu0 0
  %503 = vmatprep.subr.bf16.mxu0 0
  %504 = vmatpush2.bf16.xpose.msra.mxu0 0
  %505 = vmatprep.subr.bf16.mxu0 0
  %506 = vmatpush2.bf16.xpose.msra.mxu0 0
  %507 = vmatprep.mubr.bf16.mxu0 0
  %508 = vmatmul.mubr.bf16.gmra.mxu0 %v470
  %v509 = vpop.f32.mrf.mxu0
  %v510 = vadd.f32 %v75, %v509
  %v511 = vpop.f32.mrf.mxu0
  %v512 = vpop.f32.mrf.mxu0
  %v513 = vpop.f32.mrf.mxu0
  %514 = vdwg.mxu0
  %v515 = vsel %vm285, %v510, -inf
  %516 = vmax.xlane.f32.xlu0 %v515
  %v517 = vpop.xlane.xlu0 %516
  %v518 = vsub.f32 %v510, %v517
  %v519 = vmul.f32 %v518, 1.442695
  %v520 = vpow.pop %v519
  %v521 = vsel %vm285, %v520, 0.0
  %522 = vadd.xlane.f32.xlu0 %v521
  %v523 = vpop.xlane.xlu0 %522
  %v524 = vrcp.pop %v523
  %v525 = vmul.f32 %v520, %v524
  %v526 = vpack.c.bf16 %v525, %v525
  %v527 = vpack.c.bf16 %v230, %v230
  %v529 = vsel %vm285, %v526, 0
  %v532 = vsel %vm302, %v527, 0
  %534 = vmatprep.subr.bf16.mxu0 0
  %535 = vmatpush1.bf16.msra.mxu0 0
  %536 = vmatprep.subr.bf16.mxu0 0
  %537 = vmatpush1.bf16.msra.mxu0 0
  %538 = vmatprep.subr.bf16.mxu0 0
  %539 = vmatpush1.bf16.msra.mxu0 0
  %540 = vmatprep.subr.bf16.mxu0 0
  %541 = vmatpush1.bf16.msra.mxu0 0
  %542 = vmatprep.subr.bf16.mxu0 0
  %543 = vmatpush1.bf16.msra.mxu0 0
  %544 = vmatprep.subr.bf16.mxu0 0
  %545 = vmatpush1.bf16.msra.mxu0 0
  %546 = vmatprep.subr.bf16.mxu0 0
  %547 = vmatpush1.bf16.msra.mxu0 0
  %548 = vmatprep.subr.bf16.mxu0 0
  %549 = vmatpush1.bf16.msra.mxu0 %v532
  %550 = vmatprep.subr.bf16.mxu0 0
  %551 = vmatpush2.bf16.msra.mxu0 0
  %552 = vmatprep.subr.bf16.mxu0 0
  %553 = vmatpush2.bf16.msra.mxu0 0
  %554 = vmatprep.subr.bf16.mxu0 0
  %555 = vmatpush2.bf16.msra.mxu0 0
  %556 = vmatprep.subr.bf16.mxu0 0
  %557 = vmatpush2.bf16.msra.mxu0 0
  %558 = vmatprep.subr.bf16.mxu0 0
  %559 = vmatpush2.bf16.msra.mxu0 0
  %560 = vmatprep.subr.bf16.mxu0 0
  %561 = vmatpush2.bf16.msra.mxu0 0
  %562 = vmatprep.subr.bf16.mxu0 0
  %563 = vmatpush2.bf16.msra.mxu0 0
  %564 = vmatprep.subr.bf16.mxu0 0
  %565 = vmatpush2.bf16.msra.mxu0 0
  %566 = vmatprep.mubr.bf16.mxu0 0
  %567 = vmatmul.mubr.bf16.gmra.mxu0 %v529
  %v568 = vpop.f32.mrf.mxu0
  %v569 = vadd.f32 0.0, %v568
  %v570 = vpop.f32.mrf.mxu0
  %v571 = vpop.f32.mrf.mxu0
  %v572 = vpop.f32.mrf.mxu0
  %573 = vdwg.mxu0
  %575 = vrot.lane.b32.xlu0 %v464, 96
  %v576 = vpop.permute.xlu0 %575
  %577 = vrot.lane.b32.xlu0 %v465, 32
  %v578 = vpop.permute.xlu0 %577
  %v580 = vsel %vm238, %v576, 0
  %v583 = vsel %vm238, %v578, 0
  %585 = vmatprep.subr.bf16.mxu0 0
  %586 = vmatpush1.bf16.xpose.msra.mxu0 0
  %587 = vmatprep.subr.bf16.mxu0 0
  %588 = vmatpush1.bf16.xpose.msra.mxu0 0
  %589 = vmatprep.subr.bf16.mxu0 0
  %590 = vmatpush1.bf16.xpose.msra.mxu0 0
  %591 = vmatprep.subr.bf16.mxu0 0
  %592 = vmatpush1.bf16.xpose.msra.mxu0 0
  %593 = vmatprep.subr.bf16.mxu0 0
  %594 = vmatpush1.bf16.xpose.msra.mxu0 0
  %595 = vmatprep.subr.bf16.mxu0 0
  %596 = vmatpush1.bf16.xpose.msra.mxu0 0
  %597 = vmatprep.subr.bf16.mxu0 0
  %598 = vmatpush1.bf16.xpose.msra.mxu0 0
  %599 = vmatprep.subr.bf16.mxu0 0
  %600 = vmatpush1.bf16.xpose.msra.mxu0 %v583
  %601 = vmatprep.subr.bf16.mxu0 0
  %602 = vmatpush2.bf16.xpose.msra.mxu0 0
  %603 = vmatprep.subr.bf16.mxu0 0
  %604 = vmatpush2.bf16.xpose.msra.mxu0 0
  %605 = vmatprep.subr.bf16.mxu0 0
  %606 = vmatpush2.bf16.xpose.msra.mxu0 0
  %607 = vmatprep.subr.bf16.mxu0 0
  %608 = vmatpush2.bf16.xpose.msra.mxu0 0
  %609 = vmatprep.subr.bf16.mxu0 0
  %610 = vmatpush2.bf16.xpose.msra.mxu0 0
  %611 = vmatprep.subr.bf16.mxu0 0
  %612 = vmatpush2.bf16.xpose.msra.mxu0 0
  %613 = vmatprep.subr.bf16.mxu0 0
  %614 = vmatpush2.bf16.xpose.msra.mxu0 0
  %615 = vmatprep.subr.bf16.mxu0 0
  %616 = vmatpush2.bf16.xpose.msra.mxu0 0
  %617 = vmatprep.mubr.bf16.mxu0 0
  %618 = vmatmul.mubr.bf16.gmra.mxu0 %v580
  %v619 = vpop.f32.mrf.mxu0
  %v620 = vadd.f32 %v75, %v619
  %v621 = vpop.f32.mrf.mxu0
  %v622 = vpop.f32.mrf.mxu0
  %v623 = vpop.f32.mrf.mxu0
  %624 = vdwg.mxu0
  %v625 = vsel %vm285, %v620, -inf
  %626 = vmax.xlane.f32.xlu0 %v625
  %v627 = vpop.xlane.xlu0 %626
  %v628 = vsub.f32 %v620, %v627
  %v629 = vmul.f32 %v628, 1.442695
  %v630 = vpow.pop %v629
  %v631 = vsel %vm285, %v630, 0.0
  %632 = vadd.xlane.f32.xlu0 %v631
  %v633 = vpop.xlane.xlu0 %632
  %v634 = vrcp.pop %v633
  %v635 = vmul.f32 %v630, %v634
  %v636 = vpack.c.bf16 %v635, %v635
  %638 = vrot.lane.b32.xlu0 %v527, 96
  %v639 = vpop.permute.xlu0 %638
  %v641 = vsel %vm285, %v636, 0
  %v644 = vsel %vm302, %v639, 0
  %646 = vmatprep.subr.bf16.mxu0 0
  %647 = vmatpush1.bf16.msra.mxu0 0
  %648 = vmatprep.subr.bf16.mxu0 0
  %649 = vmatpush1.bf16.msra.mxu0 0
  %650 = vmatprep.subr.bf16.mxu0 0
  %651 = vmatpush1.bf16.msra.mxu0 0
  %652 = vmatprep.subr.bf16.mxu0 0
  %653 = vmatpush1.bf16.msra.mxu0 0
  %654 = vmatprep.subr.bf16.mxu0 0
  %655 = vmatpush1.bf16.msra.mxu0 0
  %656 = vmatprep.subr.bf16.mxu0 0
  %657 = vmatpush1.bf16.msra.mxu0 0
  %658 = vmatprep.subr.bf16.mxu0 0
  %659 = vmatpush1.bf16.msra.mxu0 0
  %660 = vmatprep.subr.bf16.mxu0 0
  %661 = vmatpush1.bf16.msra.mxu0 %v644
  %662 = vmatprep.subr.bf16.mxu0 0
  %663 = vmatpush2.bf16.msra.mxu0 0
  %664 = vmatprep.subr.bf16.mxu0 0
  %665 = vmatpush2.bf16.msra.mxu0 0
  %666 = vmatprep.subr.bf16.mxu0 0
  %667 = vmatpush2.bf16.msra.mxu0 0
  %668 = vmatprep.subr.bf16.mxu0 0
  %669 = vmatpush2.bf16.msra.mxu0 0
  %670 = vmatprep.subr.bf16.mxu0 0
  %671 = vmatpush2.bf16.msra.mxu0 0
  %672 = vmatprep.subr.bf16.mxu0 0
  %673 = vmatpush2.bf16.msra.mxu0 0
  %674 = vmatprep.subr.bf16.mxu0 0
  %675 = vmatpush2.bf16.msra.mxu0 0
  %676 = vmatprep.subr.bf16.mxu0 0
  %677 = vmatpush2.bf16.msra.mxu0 0
  %678 = vmatprep.mubr.bf16.mxu0 0
  %679 = vmatmul.mubr.bf16.gmra.mxu0 %v641
  %v680 = vpop.f32.mrf.mxu0
  %v681 = vadd.f32 0.0, %v680
  %v682 = vpop.f32.mrf.mxu0
  %v683 = vpop.f32.mrf.mxu0
  %v684 = vpop.f32.mrf.mxu0
  %685 = vdwg.mxu0
  %687 = vrot.lane.b32.xlu0 %v681, 32
  %v688 = vpop.permute.xlu0 %687
  %v690 = vsel %vm238, %v569, %v688
  %v691 = vpack.c.bf16 %v690, %v462
  %v692 = vld [vmem:[%s7] sm:$0xf]
  %v693 = vld [vmem:[%s7 + $0x4] sm:$0xf]
  %v694 = vld [vmem:[%s7 + $0x8] sm:$0xf]
  %v695 = vld [vmem:[%s7 + $0xc] sm:$0xf]
  %v696 = vld [vmem:[%s7 + $0x10] sm:$0xf]
  %v697 = vld [vmem:[%s7 + $0x14] sm:$0xf]
  %v698 = vld [vmem:[%s7 + $0x18] sm:$0xf]
  %v699 = vld [vmem:[%s7 + $0x1c] sm:$0xf]
  %v708 = vunpack.c.l.b16 %v692
  %v709 = vunpack.c.l.b16 %v693
  %v710 = vunpack.c.l.b16 %v694
  %v711 = vunpack.c.l.b16 %v695
  %v712 = vunpack.c.l.b16 %v696
  %v713 = vunpack.c.l.b16 %v697
  %v714 = vunpack.c.l.b16 %v698
  %v715 = vunpack.c.l.b16 %v699
  %v716 = vpack.c.b16 %v709, %v708
  %v717 = vpack.c.b16 %v711, %v710
  %v718 = vpack.c.b16 %v713, %v712
  %v719 = vpack.c.b16 %v715, %v714
  %v725 = vsel %vm78, %v691, 0
  %727 = vmatprep.subr.bf16.mxu0 0
  %728 = vmatpush1.bf16.msra.mxu0 0
  %729 = vmatprep.subr.bf16.mxu0 0
  %730 = vmatpush1.bf16.msra.mxu0 0
  %731 = vmatprep.subr.bf16.mxu0 0
  %732 = vmatpush1.bf16.msra.mxu0 0
  %733 = vmatprep.subr.bf16.mxu0 0
  %734 = vmatpush1.bf16.msra.mxu0 0
  %735 = vmatprep.subr.bf16.mxu0 0
  %736 = vmatpush1.bf16.msra.mxu0 %v719
  %737 = vmatprep.subr.bf16.mxu0 0
  %738 = vmatpush1.bf16.msra.mxu0 %v718
  %739 = vmatprep.subr.bf16.mxu0 0
  %740 = vmatpush1.bf16.msra.mxu0 %v717
  %741 = vmatprep.subr.bf16.mxu0 0
  %742 = vmatpush1.bf16.msra.mxu0 %v716
  %743 = vmatprep.subr.bf16.mxu0 0
  %744 = vmatpush2.bf16.msra.mxu0 0
  %745 = vmatprep.subr.bf16.mxu0 0
  %746 = vmatpush2.bf16.msra.mxu0 0
  %747 = vmatprep.subr.bf16.mxu0 0
  %748 = vmatpush2.bf16.msra.mxu0 0
  %749 = vmatprep.subr.bf16.mxu0 0
  %750 = vmatpush2.bf16.msra.mxu0 0
  %751 = vmatprep.subr.bf16.mxu0 0
  %752 = vmatpush2.bf16.msra.mxu0 0
  %753 = vmatprep.subr.bf16.mxu0 0
  %754 = vmatpush2.bf16.msra.mxu0 0
  %755 = vmatprep.subr.bf16.mxu0 0
  %756 = vmatpush2.bf16.msra.mxu0 0
  %757 = vmatprep.subr.bf16.mxu0 0
  %758 = vmatpush2.bf16.msra.mxu0 0
  %759 = vmatprep.mubr.bf16.mxu0 0
  %760 = vmatmul.mubr.bf16.gmra.mxu0 %v725
  %v761 = vpop.f32.mrf.mxu0
  %v762 = vadd.f32 0.0, %v761
  %v763 = vpop.f32.mrf.mxu0
  %v764 = vpop.f32.mrf.mxu0
  %v765 = vadd.f32 0.0, %v764
  %v766 = vpop.f32.mrf.mxu0
  %767 = vdwg.mxu0
  %v768 = vadd.f32 %v68, %v762
  %v769 = vadd.f32 %v69, %v765
  %v770 = vld [vmem:[%s8] sm:$0x1]
  %v772 = vlaneseq
  %v773 = vshrl.u32 %v772, 7
  %v774 = vsub.s32 0, %v773
  %v775 = vrot.slane %v770, %v774
  %v777 = vadd.f32 %v768, %v775
  %v778 = vadd.f32 %v769, %v775
  %v779 = vld [vmem:[%s9] sm:$0x1]
  %v780 = vld [vmem:[%s10] sm:$0x1]
  %v781 = vsel %vm78, %v777, 0.0
  %782 = vadd.xlane.f32.xlu0 %v781
  %v783 = vpop.xlane.xlu0 %782
  %v784 = vsel %vm78, %v778, 0.0
  %785 = vadd.xlane.f32.xlu0 %v784
  %v786 = vpop.xlane.xlu0 %785
  %v787 = vmul.f32 %v777, %v777
  %v788 = vmul.f32 %v778, %v778
  %v789 = vsel %vm78, %v787, 0.0
  %790 = vadd.xlane.f32.xlu0 %v789
  %v791 = vpop.xlane.xlu0 %790
  %v792 = vsel %vm78, %v788, 0.0
  %793 = vadd.xlane.f32.xlu0 %v792
  %v794 = vpop.xlane.xlu0 %793
  %v795 = vmul.f32 %v783, 0.015625
  %v796 = vmul.f32 %v786, 0.015625
  %v797 = vmul.f32 %v791, 0.015625
  %v798 = vmul.f32 %v794, 0.015625
  %v799 = vmul.f32 %v795, %v795
  %v800 = vmul.f32 %v796, %v796
  %v801 = vsub.f32 %v797, %v799
  %v802 = vsub.f32 %v798, %v800
  %v803 = vsub.f32 %v777, %v795
  %v804 = vsub.f32 %v778, %v796
  %v805 = vadd.f32 %v801, 1e-05
  %v806 = vadd.f32 %v802, 1e-05
  %v807 = vrsqrt.pop %v805
  %v808 = vrsqrt.pop %v806
  %v809 = vmul.f32 %v803, %v807
  %v810 = vmul.f32 %v804, %v808
  %v812 = vlaneseq
  %v813 = vshrl.u32 %v812, 7
  %v814 = vsub.s32 0, %v813
  %v815 = vrot.slane %v779, %v814
  %v817 = vmul.f32 %v809, %v815
  %v818 = vmul.f32 %v810, %v815
  %v820 = vlaneseq
  %v821 = vshrl.u32 %v820, 7
  %v822 = vsub.s32 0, %v821
  %v823 = vrot.slane %v780, %v822
  %v825 = vadd.f32 %v817, %v823
  %v826 = vadd.f32 %v818, %v823
  %v827 = vpack.c.bf16 %v826, %v825
  %v828 = vld [vmem:[%s11] sm:$0xff]
  %v829 = vld [vmem:[%s11 + $0x8] sm:$0xff]
  %v830 = vld [vmem:[%s11 + $0x10] sm:$0xff]
  %v831 = vld [vmem:[%s11 + $0x18] sm:$0xff]
  %v832 = vld [vmem:[%s11 + $0x20] sm:$0xff]
  %v833 = vld [vmem:[%s11 + $0x28] sm:$0xff]
  %v834 = vld [vmem:[%s11 + $0x30] sm:$0xff]
  %v835 = vld [vmem:[%s11 + $0x38] sm:$0xff]
  %v836 = vld [vmem:[%s12] sm:$0x3]
  %v838 = vlaneseq
  %v839 = vshrl.u32 %v838, 7
  %v840 = vsub.s32 0, %v839
  %v841 = vrot.slane %v836, %v840
  %v842 = vlaneseq
  %v843 = vshrl.u32 %v842, 7
  %v844 = vsub.s32 1, %v843
  %v845 = vrot.slane %v836, %v844
  %v856 = vunpack.c.l.b16 %v828
  %v857 = vunpack.c.h.b16 %v828
  %v858 = vunpack.c.l.b16 %v829
  %v859 = vunpack.c.h.b16 %v829
  %v860 = vunpack.c.l.b16 %v830
  %v861 = vunpack.c.h.b16 %v830
  %v862 = vunpack.c.l.b16 %v831
  %v863 = vunpack.c.h.b16 %v831
  %v864 = vunpack.c.l.b16 %v832
  %v865 = vunpack.c.h.b16 %v832
  %v866 = vunpack.c.l.b16 %v833
  %v867 = vunpack.c.h.b16 %v833
  %v868 = vunpack.c.l.b16 %v834
  %v869 = vunpack.c.h.b16 %v834
  %v870 = vunpack.c.l.b16 %v835
  %v871 = vunpack.c.h.b16 %v835
  %v872 = vpack.c.b16 %v858, %v856
  %v873 = vpack.c.b16 %v859, %v857
  %v874 = vpack.c.b16 %v862, %v860
  %v875 = vpack.c.b16 %v863, %v861
  %v876 = vpack.c.b16 %v866, %v864
  %v877 = vpack.c.b16 %v867, %v865
  %v878 = vpack.c.b16 %v870, %v868
  %v879 = vpack.c.b16 %v871, %v869
  %v889 = vsel %vm78, %v827, 0
  %891 = vmatprep.subr.bf16.mxu0 0
  %892 = vmatpush1.bf16.msra.mxu0 0
  %893 = vmatprep.subr.bf16.mxu0 0
  %894 = vmatpush1.bf16.msra.mxu0 0
  %895 = vmatprep.subr.bf16.mxu0 0
  %896 = vmatpush1.bf16.msra.mxu0 0
  %897 = vmatprep.subr.bf16.mxu0 0
  %898 = vmatpush1.bf16.msra.mxu0 0
  %899 = vmatprep.subr.bf16.mxu0 %v879
  %900 = vmatpush1.bf16.msra.mxu0 %v878
  %901 = vmatprep.subr.bf16.mxu0 %v877
  %902 = vmatpush1.bf16.msra.mxu0 %v876
  %903 = vmatprep.subr.bf16.mxu0 %v875
  %904 = vmatpush1.bf16.msra.mxu0 %v874
  %905 = vmatprep.subr.bf16.mxu0 %v873
  %906 = vmatpush1.bf16.msra.mxu0 %v872
  %907 = vmatprep.subr.bf16.mxu0 0
  %908 = vmatpush2.bf16.msra.mxu0 0
  %909 = vmatprep.subr.bf16.mxu0 0
  %910 = vmatpush2.bf16.msra.mxu0 0
  %911 = vmatprep.subr.bf16.mxu0 0
  %912 = vmatpush2.bf16.msra.mxu0 0
  %913 = vmatprep.subr.bf16.mxu0 0
  %914 = vmatpush2.bf16.msra.mxu0 0
  %915 = vmatprep.subr.bf16.mxu0 0
  %916 = vmatpush2.bf16.msra.mxu0 0
  %917 = vmatprep.subr.bf16.mxu0 0
  %918 = vmatpush2.bf16.msra.mxu0 0
  %919 = vmatprep.subr.bf16.mxu0 0
  %920 = vmatpush2.bf16.msra.mxu0 0
  %921 = vmatprep.subr.bf16.mxu0 0
  %922 = vmatpush2.bf16.msra.mxu0 0
  %923 = vmatprep.mubr.bf16.mxu0 0
  %924 = vmatmul.mubr.bf16.gmra.mxu0 %v889
  %v925 = vpop.f32.mrf.mxu0
  %v926 = vadd.f32 %v841, %v925
  %v927 = vpop.f32.mrf.mxu0
  %v928 = vadd.f32 %v845, %v927
  %v929 = vpop.f32.mrf.mxu0
  %v930 = vadd.f32 %v841, %v929
  %v931 = vpop.f32.mrf.mxu0
  %v932 = vadd.f32 %v845, %v931
  %933 = vdwg.mxu0
  %v934 = vmul.f32 %v926, 1.702
  %v935 = vmul.f32 %v928, 1.702
  %v936 = vmul.f32 %v930, 1.702
  %v937 = vmul.f32 %v932, 1.702
  %v938 = vxor.u32 %v934, 2147483648
  %v939 = vxor.u32 %v935, 2147483648
  %v940 = vxor.u32 %v936, 2147483648
  %v941 = vxor.u32 %v937, 2147483648
  %v942 = vmul.f32 %v938, 1.442695
  %v943 = vpow.pop %v942
  %v944 = vmul.f32 %v939, 1.442695
  %v945 = vpow.pop %v944
  %v946 = vmul.f32 %v940, 1.442695
  %v947 = vpow.pop %v946
  %v948 = vmul.f32 %v941, 1.442695
  %v949 = vpow.pop %v948
  %v950 = vadd.f32 %v943, 1.0
  %v951 = vadd.f32 %v945, 1.0
  %v952 = vadd.f32 %v947, 1.0
  %v953 = vadd.f32 %v949, 1.0
  %v954 = vrcp.pop %v950
  %v955 = vmul.f32 1.0, %v954
  %v956 = vrcp.pop %v951
  %v957 = vmul.f32 1.0, %v956
  %v958 = vrcp.pop %v952
  %v959 = vmul.f32 1.0, %v958
  %v960 = vrcp.pop %v953
  %v961 = vmul.f32 1.0, %v960
  %v962 = vmul.f32 %v926, %v955
  %v963 = vmul.f32 %v928, %v957
  %v964 = vmul.f32 %v930, %v959
  %v965 = vmul.f32 %v932, %v961
  %v966 = vpack.c.bf16 %v964, %v962
  %v967 = vpack.c.bf16 %v965, %v963
  %v968 = vld [vmem:[%s13] sm:$0xf]
  %v969 = vld [vmem:[%s13 + $0x4] sm:$0xf]
  %v970 = vld [vmem:[%s13 + $0x8] sm:$0xf]
  %v971 = vld [vmem:[%s13 + $0xc] sm:$0xf]
  %v972 = vld [vmem:[%s13 + $0x10] sm:$0xf]
  %v973 = vld [vmem:[%s13 + $0x14] sm:$0xf]
  %v974 = vld [vmem:[%s13 + $0x18] sm:$0xf]
  %v975 = vld [vmem:[%s13 + $0x1c] sm:$0xf]
  %v976 = vld [vmem:[%s13 + $0x20] sm:$0xf]
  %v977 = vld [vmem:[%s13 + $0x24] sm:$0xf]
  %v978 = vld [vmem:[%s13 + $0x28] sm:$0xf]
  %v979 = vld [vmem:[%s13 + $0x2c] sm:$0xf]
  %v980 = vld [vmem:[%s13 + $0x30] sm:$0xf]
  %v981 = vld [vmem:[%s13 + $0x34] sm:$0xf]
  %v982 = vld [vmem:[%s13 + $0x38] sm:$0xf]
  %v983 = vld [vmem:[%s13 + $0x3c] sm:$0xf]
  %v984 = vld [vmem:[%s13 + $0x40] sm:$0xf]
  %v985 = vld [vmem:[%s13 + $0x44] sm:$0xf]
  %v986 = vld [vmem:[%s13 + $0x48] sm:$0xf]
  %v987 = vld [vmem:[%s13 + $0x4c] sm:$0xf]
  %v988 = vld [vmem:[%s13 + $0x50] sm:$0xf]
  %v989 = vld [vmem:[%s13 + $0x54] sm:$0xf]
  %v990 = vld [vmem:[%s13 + $0x58] sm:$0xf]
  %v991 = vld [vmem:[%s13 + $0x5c] sm:$0xf]
  %v992 = vld [vmem:[%s13 + $0x60] sm:$0xf]
  %v993 = vld [vmem:[%s13 + $0x64] sm:$0xf]
  %v994 = vld [vmem:[%s13 + $0x68] sm:$0xf]
  %v995 = vld [vmem:[%s13 + $0x6c] sm:$0xf]
  %v996 = vld [vmem:[%s13 + $0x70] sm:$0xf]
  %v997 = vld [vmem:[%s13 + $0x74] sm:$0xf]
  %v998 = vld [vmem:[%s13 + $0x78] sm:$0xf]
  %v999 = vld [vmem:[%s13 + $0x7c] sm:$0xf]
  %v1000 = vld [vmem:[%s14] sm:$0x1]
  %v1002 = vlaneseq
  %v1003 = vshrl.u32 %v1002, 7
  %v1004 = vsub.s32 0, %v1003
  %v1005 = vrot.slane %v1000, %v1004
  %v1039 = vunpack.c.l.b16 %v968
  %v1040 = vunpack.c.l.b16 %v969
  %v1041 = vunpack.c.l.b16 %v970
  %v1042 = vunpack.c.l.b16 %v971
  %v1043 = vunpack.c.l.b16 %v972
  %v1044 = vunpack.c.l.b16 %v973
  %v1045 = vunpack.c.l.b16 %v974
  %v1046 = vunpack.c.l.b16 %v975
  %v1047 = vunpack.c.l.b16 %v976
  %v1048 = vunpack.c.l.b16 %v977
  %v1049 = vunpack.c.l.b16 %v978
  %v1050 = vunpack.c.l.b16 %v979
  %v1051 = vunpack.c.l.b16 %v980
  %v1052 = vunpack.c.l.b16 %v981
  %v1053 = vunpack.c.l.b16 %v982
  %v1054 = vunpack.c.l.b16 %v983
  %v1055 = vunpack.c.l.b16 %v984
  %v1056 = vunpack.c.l.b16 %v985
  %v1057 = vunpack.c.l.b16 %v986
  %v1058 = vunpack.c.l.b16 %v987
  %v1059 = vunpack.c.l.b16 %v988
  %v1060 = vunpack.c.l.b16 %v989
  %v1061 = vunpack.c.l.b16 %v990
  %v1062 = vunpack.c.l.b16 %v991
  %v1063 = vunpack.c.l.b16 %v992
  %v1064 = vunpack.c.l.b16 %v993
  %v1065 = vunpack.c.l.b16 %v994
  %v1066 = vunpack.c.l.b16 %v995
  %v1067 = vunpack.c.l.b16 %v996
  %v1068 = vunpack.c.l.b16 %v997
  %v1069 = vunpack.c.l.b16 %v998
  %v1070 = vunpack.c.l.b16 %v999
  %v1071 = vpack.c.b16 %v1040, %v1039
  %v1072 = vpack.c.b16 %v1042, %v1041
  %v1073 = vpack.c.b16 %v1044, %v1043
  %v1074 = vpack.c.b16 %v1046, %v1045
  %v1075 = vpack.c.b16 %v1048, %v1047
  %v1076 = vpack.c.b16 %v1050, %v1049
  %v1077 = vpack.c.b16 %v1052, %v1051
  %v1078 = vpack.c.b16 %v1054, %v1053
  %v1079 = vpack.c.b16 %v1056, %v1055
  %v1080 = vpack.c.b16 %v1058, %v1057
  %v1081 = vpack.c.b16 %v1060, %v1059
  %v1082 = vpack.c.b16 %v1062, %v1061
  %v1083 = vpack.c.b16 %v1064, %v1063
  %v1084 = vpack.c.b16 %v1066, %v1065
  %v1085 = vpack.c.b16 %v1068, %v1067
  %v1086 = vpack.c.b16 %v1070, %v1069
  %1103 = vmatprep.subr.bf16.mxu0 0
  %1104 = vmatpush1.bf16.msra.mxu0 %v1078
  %1105 = vmatprep.subr.bf16.mxu0 0
  %1106 = vmatpush1.bf16.msra.mxu0 %v1077
  %1107 = vmatprep.subr.bf16.mxu0 0
  %1108 = vmatpush1.bf16.msra.mxu0 %v1076
  %1109 = vmatprep.subr.bf16.mxu0 0
  %1110 = vmatpush1.bf16.msra.mxu0 %v1075
  %1111 = vmatprep.subr.bf16.mxu0 0
  %1112 = vmatpush1.bf16.msra.mxu0 %v1074
  %1113 = vmatprep.subr.bf16.mxu0 0
  %1114 = vmatpush1.bf16.msra.mxu0 %v1073
  %1115 = vmatprep.subr.bf16.mxu0 0
  %1116 = vmatpush1.bf16.msra.mxu0 %v1072
  %1117 = vmatprep.subr.bf16.mxu0 0
  %1118 = vmatpush1.bf16.msra.mxu0 %v1071
  %1119 = vmatprep.subr.bf16.mxu0 0
  %1120 = vmatpush2.bf16.msra.mxu0 %v1086
  %1121 = vmatprep.subr.bf16.mxu0 0
  %1122 = vmatpush2.bf16.msra.mxu0 %v1085
  %1123 = vmatprep.subr.bf16.mxu0 0
  %1124 = vmatpush2.bf16.msra.mxu0 %v1084
  %1125 = vmatprep.subr.bf16.mxu0 0
  %1126 = vmatpush2.bf16.msra.mxu0 %v1083
  %1127 = vmatprep.subr.bf16.mxu0 0
  %1128 = vmatpush2.bf16.msra.mxu0 %v1082
  %1129 = vmatprep.subr.bf16.mxu0 0
  %1130 = vmatpush2.bf16.msra.mxu0 %v1081
  %1131 = vmatprep.subr.bf16.mxu0 0
  %1132 = vmatpush2.bf16.msra.mxu0 %v1080
  %1133 = vmatprep.subr.bf16.mxu0 0
  %1134 = vmatpush2.bf16.msra.mxu0 %v1079
  %1135 = vmatprep.mubr.bf16.mxu0 %v967
  %1136 = vmatmul.mubr.bf16.gmra.mxu0 %v966
  %v1137 = vpop.f32.mrf.mxu0
  %v1138 = vadd.f32 %v1005, %v1137
  %v1139 = vpop.f32.mrf.mxu0
  %v1140 = vpop.f32.mrf.mxu0
  %v1141 = vadd.f32 %v1005, %v1140
  %v1142 = vpop.f32.mrf.mxu0
  %1143 = vdwg.mxu0
  %v1144 = vadd.f32 %v777, %v1138
  %v1145 = vadd.f32 %v778, %v1141
  %s1146 = scalar_lea.vmem %s3, 1
  %v1147 = vld [vmem:[%s1146] sm:$0x1]
  %s1148 = scalar_lea.vmem %s4, 1
  %v1149 = vld [vmem:[%s1148] sm:$0x1]
  %v1150 = vsel %vm78, %v1144, 0.0
  %1151 = vadd.xlane.f32.xlu0 %v1150
  %v1152 = vpop.xlane.xlu0 %1151
  %v1153 = vsel %vm78, %v1145, 0.0
  %1154 = vadd.xlane.f32.xlu0 %v1153
  %v1155 = vpop.xlane.xlu0 %1154
  %v1156 = vmul.f32 %v1144, %v1144
  %v1157 = vmul.f32 %v1145, %v1145
  %v1158 = vsel %vm78, %v1156, 0.0
  %1159 = vadd.xlane.f32.xlu0 %v1158
  %v1160 = vpop.xlane.xlu0 %1159
  %v1161 = vsel %vm78, %v1157, 0.0
  %1162 = vadd.xlane.f32.xlu0 %v1161
  %v1163 = vpop.xlane.xlu0 %1162
  %v1164 = vmul.f32 %v1152, 0.015625
  %v1165 = vmul.f32 %v1155, 0.015625
  %v1166 = vmul.f32 %v1160, 0.015625
  %v1167 = vmul.f32 %v1163, 0.015625
  %v1168 = vmul.f32 %v1164, %v1164
  %v1169 = vmul.f32 %v1165, %v1165
  %v1170 = vsub.f32 %v1166, %v1168
  %v1171 = vsub.f32 %v1167, %v1169
  %v1172 = vsub.f32 %v1144, %v1164
  %v1173 = vsub.f32 %v1145, %v1165
  %v1174 = vadd.f32 %v1170, 1e-05
  %v1175 = vadd.f32 %v1171, 1e-05
  %v1176 = vrsqrt.pop %v1174
  %v1177 = vrsqrt.pop %v1175
  %v1178 = vmul.f32 %v1172, %v1176
  %v1179 = vmul.f32 %v1173, %v1177
  %v1181 = vlaneseq
  %v1182 = vshrl.u32 %v1181, 7
  %v1183 = vsub.s32 0, %v1182
  %v1184 = vrot.slane %v1147, %v1183
  %v1186 = vmul.f32 %v1178, %v1184
  %v1187 = vmul.f32 %v1179, %v1184
  %v1189 = vlaneseq
  %v1190 = vshrl.u32 %v1189, 7
  %v1191 = vsub.s32 0, %v1190
  %v1192 = vrot.slane %v1149, %v1191
  %v1194 = vadd.f32 %v1186, %v1192
  %v1195 = vadd.f32 %v1187, %v1192
  %v1196 = vpack.c.bf16 %v1195, %v1194
  %s1197 = scalar_lea.vmem %s5, 64
  %v1198 = vld [vmem:[%s1197] sm:$0xff]
  %v1199 = vld [vmem:[%s1197 + $0x8] sm:$0xff]
  %v1200 = vld [vmem:[%s1197 + $0x10] sm:$0xff]
  %v1201 = vld [vmem:[%s1197 + $0x18] sm:$0xff]
  %v1202 = vld [vmem:[%s1197 + $0x20] sm:$0xff]
  %v1203 = vld [vmem:[%s1197 + $0x28] sm:$0xff]
  %v1204 = vld [vmem:[%s1197 + $0x30] sm:$0xff]
  %v1205 = vld [vmem:[%s1197 + $0x38] sm:$0xff]
  %s1206 = scalar_lea.vmem %s6, 2
  %v1207 = vld [vmem:[%s1206] sm:$0x3]
  %v1209 = vlaneseq
  %v1210 = vshrl.u32 %v1209, 7
  %v1211 = vsub.s32 0, %v1210
  %v1212 = vrot.slane %v1207, %v1211
  %v1213 = vlaneseq
  %v1214 = vshrl.u32 %v1213, 7
  %v1215 = vsub.s32 1, %v1214
  %v1216 = vrot.slane %v1207, %v1215
  %v1227 = vunpack.c.l.b16 %v1198
  %v1228 = vunpack.c.h.b16 %v1198
  %v1229 = vunpack.c.l.b16 %v1199
  %v1230 = vunpack.c.h.b16 %v1199
  %v1231 = vunpack.c.l.b16 %v1200
  %v1232 = vunpack.c.h.b16 %v1200
  %v1233 = vunpack.c.l.b16 %v1201
  %v1234 = vunpack.c.h.b16 %v1201
  %v1235 = vunpack.c.l.b16 %v1202
  %v1236 = vunpack.c.h.b16 %v1202
  %v1237 = vunpack.c.l.b16 %v1203
  %v1238 = vunpack.c.h.b16 %v1203
  %v1239 = vunpack.c.l.b16 %v1204
  %v1240 = vunpack.c.h.b16 %v1204
  %v1241 = vunpack.c.l.b16 %v1205
  %v1242 = vunpack.c.h.b16 %v1205
  %v1243 = vpack.c.b16 %v1229, %v1227
  %v1244 = vpack.c.b16 %v1230, %v1228
  %v1245 = vpack.c.b16 %v1233, %v1231
  %v1246 = vpack.c.b16 %v1234, %v1232
  %v1247 = vpack.c.b16 %v1237, %v1235
  %v1248 = vpack.c.b16 %v1238, %v1236
  %v1249 = vpack.c.b16 %v1241, %v1239
  %v1250 = vpack.c.b16 %v1242, %v1240
  %v1260 = vsel %vm78, %v1196, 0
  %1262 = vmatprep.subr.bf16.mxu0 0
  %1263 = vmatpush1.bf16.msra.mxu0 0
  %1264 = vmatprep.subr.bf16.mxu0 0
  %1265 = vmatpush1.bf16.msra.mxu0 0
  %1266 = vmatprep.subr.bf16.mxu0 0
  %1267 = vmatpush1.bf16.msra.mxu0 0
  %1268 = vmatprep.subr.bf16.mxu0 0
  %1269 = vmatpush1.bf16.msra.mxu0 0
  %1270 = vmatprep.subr.bf16.mxu0 %v1250
  %1271 = vmatpush1.bf16.msra.mxu0 %v1249
  %1272 = vmatprep.subr.bf16.mxu0 %v1248
  %1273 = vmatpush1.bf16.msra.mxu0 %v1247
  %1274 = vmatprep.subr.bf16.mxu0 %v1246
  %1275 = vmatpush1.bf16.msra.mxu0 %v1245
  %1276 = vmatprep.subr.bf16.mxu0 %v1244
  %1277 = vmatpush1.bf16.msra.mxu0 %v1243
  %1278 = vmatprep.subr.bf16.mxu0 0
  %1279 = vmatpush2.bf16.msra.mxu0 0
  %1280 = vmatprep.subr.bf16.mxu0 0
  %1281 = vmatpush2.bf16.msra.mxu0 0
  %1282 = vmatprep.subr.bf16.mxu0 0
  %1283 = vmatpush2.bf16.msra.mxu0 0
  %1284 = vmatprep.subr.bf16.mxu0 0
  %1285 = vmatpush2.bf16.msra.mxu0 0
  %1286 = vmatprep.subr.bf16.mxu0 0
  %1287 = vmatpush2.bf16.msra.mxu0 0
  %1288 = vmatprep.subr.bf16.mxu0 0
  %1289 = vmatpush2.bf16.msra.mxu0 0
  %1290 = vmatprep.subr.bf16.mxu0 0
  %1291 = vmatpush2.bf16.msra.mxu0 0
  %1292 = vmatprep.subr.bf16.mxu0 0
  %1293 = vmatpush2.bf16.msra.mxu0 0
  %1294 = vmatprep.mubr.bf16.mxu0 0
  %1295 = vmatmul.mubr.bf16.gmra.mxu0 %v1260
  %v1296 = vpop.f32.mrf.mxu0
  %v1297 = vadd.f32 %v1212, %v1296
  %v1298 = vpop.f32.mrf.mxu0
  %v1299 = vadd.f32 %v1216, %v1298
  %v1300 = vpop.f32.mrf.mxu0
  %v1301 = vadd.f32 %v1212, %v1300
  %v1302 = vpop.f32.mrf.mxu0
  %v1303 = vadd.f32 %v1216, %v1302
  %1304 = vdwg.mxu0
  %v1305 = vmul.f32 %v1297, 0.17677669
  %v1306 = vpack.c.bf16 %v1305, %v1305
  %v1307 = vpack.c.bf16 %v1297, %v1297
  %1309 = vrot.lane.b32.xlu0 %v1307, 64
  %v1310 = vpop.permute.xlu0 %1309
  %v1312 = vsel %vm238, %v1306, 0
  %v1315 = vsel %vm238, %v1310, 0
  %1317 = vmatprep.subr.bf16.mxu0 0
  %1318 = vmatpush1.bf16.xpose.msra.mxu0 0
  %1319 = vmatprep.subr.bf16.mxu0 0
  %1320 = vmatpush1.bf16.xpose.msra.mxu0 0
  %1321 = vmatprep.subr.bf16.mxu0 0
  %1322 = vmatpush1.bf16.xpose.msra.mxu0 0
  %1323 = vmatprep.subr.bf16.mxu0 0
  %1324 = vmatpush1.bf16.xpose.msra.mxu0 0
  %1325 = vmatprep.subr.bf16.mxu0 0
  %1326 = vmatpush1.bf16.xpose.msra.mxu0 0
  %1327 = vmatprep.subr.bf16.mxu0 0
  %1328 = vmatpush1.bf16.xpose.msra.mxu0 0
  %1329 = vmatprep.subr.bf16.mxu0 0
  %1330 = vmatpush1.bf16.xpose.msra.mxu0 0
  %1331 = vmatprep.subr.bf16.mxu0 0
  %1332 = vmatpush1.bf16.xpose.msra.mxu0 %v1315
  %1333 = vmatprep.subr.bf16.mxu0 0
  %1334 = vmatpush2.bf16.xpose.msra.mxu0 0
  %1335 = vmatprep.subr.bf16.mxu0 0
  %1336 = vmatpush2.bf16.xpose.msra.mxu0 0
  %1337 = vmatprep.subr.bf16.mxu0 0
  %1338 = vmatpush2.bf16.xpose.msra.mxu0 0
  %1339 = vmatprep.subr.bf16.mxu0 0
  %1340 = vmatpush2.bf16.xpose.msra.mxu0 0
  %1341 = vmatprep.subr.bf16.mxu0 0
  %1342 = vmatpush2.bf16.xpose.msra.mxu0 0
  %1343 = vmatprep.subr.bf16.mxu0 0
  %1344 = vmatpush2.bf16.xpose.msra.mxu0 0
  %1345 = vmatprep.subr.bf16.mxu0 0
  %1346 = vmatpush2.bf16.xpose.msra.mxu0 0
  %1347 = vmatprep.subr.bf16.mxu0 0
  %1348 = vmatpush2.bf16.xpose.msra.mxu0 0
  %1349 = vmatprep.mubr.bf16.mxu0 0
  %1350 = vmatmul.mubr.bf16.gmra.mxu0 %v1312
  %v1351 = vpop.f32.mrf.mxu0
  %v1352 = vadd.f32 %v75, %v1351
  %v1353 = vpop.f32.mrf.mxu0
  %v1354 = vpop.f32.mrf.mxu0
  %v1355 = vpop.f32.mrf.mxu0
  %1356 = vdwg.mxu0
  %v1357 = vsel %vm285, %v1352, -inf
  %1358 = vmax.xlane.f32.xlu0 %v1357
  %v1359 = vpop.xlane.xlu0 %1358
  %v1360 = vsub.f32 %v1352, %v1359
  %v1361 = vmul.f32 %v1360, 1.442695
  %v1362 = vpow.pop %v1361
  %v1363 = vsel %vm285, %v1362, 0.0
  %1364 = vadd.xlane.f32.xlu0 %v1363
  %v1365 = vpop.xlane.xlu0 %1364
  %v1366 = vrcp.pop %v1365
  %v1367 = vmul.f32 %v1362, %v1366
  %v1368 = vpack.c.bf16 %v1367, %v1367
  %v1369 = vpack.c.bf16 %v1299, %v1299
  %v1371 = vsel %vm285, %v1368, 0
  %v1374 = vsel %vm302, %v1369, 0
  %1376 = vmatprep.subr.bf16.mxu0 0
  %1377 = vmatpush1.bf16.msra.mxu0 0
  %1378 = vmatprep.subr.bf16.mxu0 0
  %1379 = vmatpush1.bf16.msra.mxu0 0
  %1380 = vmatprep.subr.bf16.mxu0 0
  %1381 = vmatpush1.bf16.msra.mxu0 0
  %1382 = vmatprep.subr.bf16.mxu0 0
  %1383 = vmatpush1.bf16.msra.mxu0 0
  %1384 = vmatprep.subr.bf16.mxu0 0
  %1385 = vmatpush1.bf16.msra.mxu0 0
  %1386 = vmatprep.subr.bf16.mxu0 0
  %1387 = vmatpush1.bf16.msra.mxu0 0
  %1388 = vmatprep.subr.bf16.mxu0 0
  %1389 = vmatpush1.bf16.msra.mxu0 0
  %1390 = vmatprep.subr.bf16.mxu0 0
  %1391 = vmatpush1.bf16.msra.mxu0 %v1374
  %1392 = vmatprep.subr.bf16.mxu0 0
  %1393 = vmatpush2.bf16.msra.mxu0 0
  %1394 = vmatprep.subr.bf16.mxu0 0
  %1395 = vmatpush2.bf16.msra.mxu0 0
  %1396 = vmatprep.subr.bf16.mxu0 0
  %1397 = vmatpush2.bf16.msra.mxu0 0
  %1398 = vmatprep.subr.bf16.mxu0 0
  %1399 = vmatpush2.bf16.msra.mxu0 0
  %1400 = vmatprep.subr.bf16.mxu0 0
  %1401 = vmatpush2.bf16.msra.mxu0 0
  %1402 = vmatprep.subr.bf16.mxu0 0
  %1403 = vmatpush2.bf16.msra.mxu0 0
  %1404 = vmatprep.subr.bf16.mxu0 0
  %1405 = vmatpush2.bf16.msra.mxu0 0
  %1406 = vmatprep.subr.bf16.mxu0 0
  %1407 = vmatpush2.bf16.msra.mxu0 0
  %1408 = vmatprep.mubr.bf16.mxu0 0
  %1409 = vmatmul.mubr.bf16.gmra.mxu0 %v1371
  %v1410 = vpop.f32.mrf.mxu0
  %v1411 = vadd.f32 0.0, %v1410
  %v1412 = vpop.f32.mrf.mxu0
  %v1413 = vpop.f32.mrf.mxu0
  %v1414 = vpop.f32.mrf.mxu0
  %1415 = vdwg.mxu0
  %1417 = vrot.lane.b32.xlu0 %v1306, 96
  %v1418 = vpop.permute.xlu0 %1417
  %1419 = vrot.lane.b32.xlu0 %v1307, 32
  %v1420 = vpop.permute.xlu0 %1419
  %v1422 = vsel %vm238, %v1418, 0
  %v1425 = vsel %vm238, %v1420, 0
  %1427 = vmatprep.subr.bf16.mxu0 0
  %1428 = vmatpush1.bf16.xpose.msra.mxu0 0
  %1429 = vmatprep.subr.bf16.mxu0 0
  %1430 = vmatpush1.bf16.xpose.msra.mxu0 0
  %1431 = vmatprep.subr.bf16.mxu0 0
  %1432 = vmatpush1.bf16.xpose.msra.mxu0 0
  %1433 = vmatprep.subr.bf16.mxu0 0
  %1434 = vmatpush1.bf16.xpose.msra.mxu0 0
  %1435 = vmatprep.subr.bf16.mxu0 0
  %1436 = vmatpush1.bf16.xpose.msra.mxu0 0
  %1437 = vmatprep.subr.bf16.mxu0 0
  %1438 = vmatpush1.bf16.xpose.msra.mxu0 0
  %1439 = vmatprep.subr.bf16.mxu0 0
  %1440 = vmatpush1.bf16.xpose.msra.mxu0 0
  %1441 = vmatprep.subr.bf16.mxu0 0
  %1442 = vmatpush1.bf16.xpose.msra.mxu0 %v1425
  %1443 = vmatprep.subr.bf16.mxu0 0
  %1444 = vmatpush2.bf16.xpose.msra.mxu0 0
  %1445 = vmatprep.subr.bf16.mxu0 0
  %1446 = vmatpush2.bf16.xpose.msra.mxu0 0
  %1447 = vmatprep.subr.bf16.mxu0 0
  %1448 = vmatpush2.bf16.xpose.msra.mxu0 0
  %1449 = vmatprep.subr.bf16.mxu0 0
  %1450 = vmatpush2.bf16.xpose.msra.mxu0 0
  %1451 = vmatprep.subr.bf16.mxu0 0
  %1452 = vmatpush2.bf16.xpose.msra.mxu0 0
  %1453 = vmatprep.subr.bf16.mxu0 0
  %1454 = vmatpush2.bf16.xpose.msra.mxu0 0
  %1455 = vmatprep.subr.bf16.mxu0 0
  %1456 = vmatpush2.bf16.xpose.msra.mxu0 0
  %1457 = vmatprep.subr.bf16.mxu0 0
  %1458 = vmatpush2.bf16.xpose.msra.mxu0 0
  %1459 = vmatprep.mubr.bf16.mxu0 0
  %1460 = vmatmul.mubr.bf16.gmra.mxu0 %v1422
  %v1461 = vpop.f32.mrf.mxu0
  %v1462 = vadd.f32 %v75, %v1461
  %v1463 = vpop.f32.mrf.mxu0
  %v1464 = vpop.f32.mrf.mxu0
  %v1465 = vpop.f32.mrf.mxu0
  %1466 = vdwg.mxu0
  %v1467 = vsel %vm285, %v1462, -inf
  %1468 = vmax.xlane.f32.xlu0 %v1467
  %v1469 = vpop.xlane.xlu0 %1468
  %v1470 = vsub.f32 %v1462, %v1469
  %v1471 = vmul.f32 %v1470, 1.442695
  %v1472 = vpow.pop %v1471
  %v1473 = vsel %vm285, %v1472, 0.0
  %1474 = vadd.xlane.f32.xlu0 %v1473
  %v1475 = vpop.xlane.xlu0 %1474
  %v1476 = vrcp.pop %v1475
  %v1477 = vmul.f32 %v1472, %v1476
  %v1478 = vpack.c.bf16 %v1477, %v1477
  %1480 = vrot.lane.b32.xlu0 %v1369, 96
  %v1481 = vpop.permute.xlu0 %1480
  %v1483 = vsel %vm285, %v1478, 0
  %v1486 = vsel %vm302, %v1481, 0
  %1488 = vmatprep.subr.bf16.mxu0 0
  %1489 = vmatpush1.bf16.msra.mxu0 0
  %1490 = vmatprep.subr.bf16.mxu0 0
  %1491 = vmatpush1.bf16.msra.mxu0 0
  %1492 = vmatprep.subr.bf16.mxu0 0
  %1493 = vmatpush1.bf16.msra.mxu0 0
  %1494 = vmatprep.subr.bf16.mxu0 0
  %1495 = vmatpush1.bf16.msra.mxu0 0
  %1496 = vmatprep.subr.bf16.mxu0 0
  %1497 = vmatpush1.bf16.msra.mxu0 0
  %1498 = vmatprep.subr.bf16.mxu0 0
  %1499 = vmatpush1.bf16.msra.mxu0 0
  %1500 = vmatprep.subr.bf16.mxu0 0
  %1501 = vmatpush1.bf16.msra.mxu0 0
  %1502 = vmatprep.subr.bf16.mxu0 0
  %1503 = vmatpush1.bf16.msra.mxu0 %v1486
  %1504 = vmatprep.subr.bf16.mxu0 0
  %1505 = vmatpush2.bf16.msra.mxu0 0
  %1506 = vmatprep.subr.bf16.mxu0 0
  %1507 = vmatpush2.bf16.msra.mxu0 0
  %1508 = vmatprep.subr.bf16.mxu0 0
  %1509 = vmatpush2.bf16.msra.mxu0 0
  %1510 = vmatprep.subr.bf16.mxu0 0
  %1511 = vmatpush2.bf16.msra.mxu0 0
  %1512 = vmatprep.subr.bf16.mxu0 0
  %1513 = vmatpush2.bf16.msra.mxu0 0
  %1514 = vmatprep.subr.bf16.mxu0 0
  %1515 = vmatpush2.bf16.msra.mxu0 0
  %1516 = vmatprep.subr.bf16.mxu0 0
  %1517 = vmatpush2.bf16.msra.mxu0 0
  %1518 = vmatprep.subr.bf16.mxu0 0
  %1519 = vmatpush2.bf16.msra.mxu0 0
  %1520 = vmatprep.mubr.bf16.mxu0 0
  %1521 = vmatmul.mubr.bf16.gmra.mxu0 %v1483
  %v1522 = vpop.f32.mrf.mxu0
  %v1523 = vadd.f32 0.0, %v1522
  %v1524 = vpop.f32.mrf.mxu0
  %v1525 = vpop.f32.mrf.mxu0
  %v1526 = vpop.f32.mrf.mxu0
  %1527 = vdwg.mxu0
  %1529 = vrot.lane.b32.xlu0 %v1523, 32
  %v1530 = vpop.permute.xlu0 %1529
  %v1532 = vsel %vm238, %v1411, %v1530
  %v1533 = vmul.f32 %v1301, 0.17677669
  %v1534 = vpack.c.bf16 %v1533, %v1533
  %v1535 = vpack.c.bf16 %v1301, %v1301
  %1537 = vrot.lane.b32.xlu0 %v1535, 64
  %v1538 = vpop.permute.xlu0 %1537
  %v1540 = vsel %vm238, %v1534, 0
  %v1543 = vsel %vm238, %v1538, 0
  %1545 = vmatprep.subr.bf16.mxu0 0
  %1546 = vmatpush1.bf16.xpose.msra.mxu0 0
  %1547 = vmatprep.subr.bf16.mxu0 0
  %1548 = vmatpush1.bf16.xpose.msra.mxu0 0
  %1549 = vmatprep.subr.bf16.mxu0 0
  %1550 = vmatpush1.bf16.xpose.msra.mxu0 0
  %1551 = vmatprep.subr.bf16.mxu0 0
  %1552 = vmatpush1.bf16.xpose.msra.mxu0 0
  %1553 = vmatprep.subr.bf16.mxu0 0
  %1554 = vmatpush1.bf16.xpose.msra.mxu0 0
  %1555 = vmatprep.subr.bf16.mxu0 0
  %1556 = vmatpush1.bf16.xpose.msra.mxu0 0
  %1557 = vmatprep.subr.bf16.mxu0 0
  %1558 = vmatpush1.bf16.xpose.msra.mxu0 0
  %1559 = vmatprep.subr.bf16.mxu0 0
  %1560 = vmatpush1.bf16.xpose.msra.mxu0 %v1543
  %1561 = vmatprep.subr.bf16.mxu0 0
  %1562 = vmatpush2.bf16.xpose.msra.mxu0 0
  %1563 = vmatprep.subr.bf16.mxu0 0
  %1564 = vmatpush2.bf16.xpose.msra.mxu0 0
  %1565 = vmatprep.subr.bf16.mxu0 0
  %1566 = vmatpush2.bf16.xpose.msra.mxu0 0
  %1567 = vmatprep.subr.bf16.mxu0 0
  %1568 = vmatpush2.bf16.xpose.msra.mxu0 0
  %1569 = vmatprep.subr.bf16.mxu0 0
  %1570 = vmatpush2.bf16.xpose.msra.mxu0 0
  %1571 = vmatprep.subr.bf16.mxu0 0
  %1572 = vmatpush2.bf16.xpose.msra.mxu0 0
  %1573 = vmatprep.subr.bf16.mxu0 0
  %1574 = vmatpush2.bf16.xpose.msra.mxu0 0
  %1575 = vmatprep.subr.bf16.mxu0 0
  %1576 = vmatpush2.bf16.xpose.msra.mxu0 0
  %1577 = vmatprep.mubr.bf16.mxu0 0
  %1578 = vmatmul.mubr.bf16.gmra.mxu0 %v1540
  %v1579 = vpop.f32.mrf.mxu0
  %v1580 = vadd.f32 %v75, %v1579
  %v1581 = vpop.f32.mrf.mxu0
  %v1582 = vpop.f32.mrf.mxu0
  %v1583 = vpop.f32.mrf.mxu0
  %1584 = vdwg.mxu0
  %v1585 = vsel %vm285, %v1580, -inf
  %1586 = vmax.xlane.f32.xlu0 %v1585
  %v1587 = vpop.xlane.xlu0 %1586
  %v1588 = vsub.f32 %v1580, %v1587
  %v1589 = vmul.f32 %v1588, 1.442695
  %v1590 = vpow.pop %v1589
  %v1591 = vsel %vm285, %v1590, 0.0
  %1592 = vadd.xlane.f32.xlu0 %v1591
  %v1593 = vpop.xlane.xlu0 %1592
  %v1594 = vrcp.pop %v1593
  %v1595 = vmul.f32 %v1590, %v1594
  %v1596 = vpack.c.bf16 %v1595, %v1595
  %v1597 = vpack.c.bf16 %v1303, %v1303
  %v1599 = vsel %vm285, %v1596, 0
  %v1602 = vsel %vm302, %v1597, 0
  %1604 = vmatprep.subr.bf16.mxu0 0
  %1605 = vmatpush1.bf16.msra.mxu0 0
  %1606 = vmatprep.subr.bf16.mxu0 0
  %1607 = vmatpush1.bf16.msra.mxu0 0
  %1608 = vmatprep.subr.bf16.mxu0 0
  %1609 = vmatpush1.bf16.msra.mxu0 0
  %1610 = vmatprep.subr.bf16.mxu0 0
  %1611 = vmatpush1.bf16.msra.mxu0 0
  %1612 = vmatprep.subr.bf16.mxu0 0
  %1613 = vmatpush1.bf16.msra.mxu0 0
  %1614 = vmatprep.subr.bf16.mxu0 0
  %1615 = vmatpush1.bf16.msra.mxu0 0
  %1616 = vmatprep.subr.bf16.mxu0 0
  %1617 = vmatpush1.bf16.msra.mxu0 0
  %1618 = vmatprep.subr.bf16.mxu0 0
  %1619 = vmatpush1.bf16.msra.mxu0 %v1602
  %1620 = vmatprep.subr.bf16.mxu0 0
  %1621 = vmatpush2.bf16.msra.mxu0 0
  %1622 = vmatprep.subr.bf16.mxu0 0
  %1623 = vmatpush2.bf16.msra.mxu0 0
  %1624 = vmatprep.subr.bf16.mxu0 0
  %1625 = vmatpush2.bf16.msra.mxu0 0
  %1626 = vmatprep.subr.bf16.mxu0 0
  %1627 = vmatpush2.bf16.msra.mxu0 0
  %1628 = vmatprep.subr.bf16.mxu0 0
  %1629 = vmatpush2.bf16.msra.mxu0 0
  %1630 = vmatprep.subr.bf16.mxu0 0
  %1631 = vmatpush2.bf16.msra.mxu0 0
  %1632 = vmatprep.subr.bf16.mxu0 0
  %1633 = vmatpush2.bf16.msra.mxu0 0
  %1634 = vmatprep.subr.bf16.mxu0 0
  %1635 = vmatpush2.bf16.msra.mxu0 0
  %1636 = vmatprep.mubr.bf16.mxu0 0
  %1637 = vmatmul.mubr.bf16.gmra.mxu0 %v1599
  %v1638 = vpop.f32.mrf.mxu0
  %v1639 = vadd.f32 0.0, %v1638
  %v1640 = vpop.f32.mrf.mxu0
  %v1641 = vpop.f32.mrf.mxu0
  %v1642 = vpop.f32.mrf.mxu0
  %1643 = vdwg.mxu0
  %1645 = vrot.lane.b32.xlu0 %v1534, 96
  %v1646 = vpop.permute.xlu0 %1645
  %1647 = vrot.lane.b32.xlu0 %v1535, 32
  %v1648 = vpop.permute.xlu0 %1647
  %v1650 = vsel %vm238, %v1646, 0
  %v1653 = vsel %vm238, %v1648, 0
  %1655 = vmatprep.subr.bf16.mxu0 0
  %1656 = vmatpush1.bf16.xpose.msra.mxu0 0
  %1657 = vmatprep.subr.bf16.mxu0 0
  %1658 = vmatpush1.bf16.xpose.msra.mxu0 0
  %1659 = vmatprep.subr.bf16.mxu0 0
  %1660 = vmatpush1.bf16.xpose.msra.mxu0 0
  %1661 = vmatprep.subr.bf16.mxu0 0
  %1662 = vmatpush1.bf16.xpose.msra.mxu0 0
  %1663 = vmatprep.subr.bf16.mxu0 0
  %1664 = vmatpush1.bf16.xpose.msra.mxu0 0
  %1665 = vmatprep.subr.bf16.mxu0 0
  %1666 = vmatpush1.bf16.xpose.msra.mxu0 0
  %1667 = vmatprep.subr.bf16.mxu0 0
  %1668 = vmatpush1.bf16.xpose.msra.mxu0 0
  %1669 = vmatprep.subr.bf16.mxu0 0
  %1670 = vmatpush1.bf16.xpose.msra.mxu0 %v1653
  %1671 = vmatprep.subr.bf16.mxu0 0
  %1672 = vmatpush2.bf16.xpose.msra.mxu0 0
  %1673 = vmatprep.subr.bf16.mxu0 0
  %1674 = vmatpush2.bf16.xpose.msra.mxu0 0
  %1675 = vmatprep.subr.bf16.mxu0 0
  %1676 = vmatpush2.bf16.xpose.msra.mxu0 0
  %1677 = vmatprep.subr.bf16.mxu0 0
  %1678 = vmatpush2.bf16.xpose.msra.mxu0 0
  %1679 = vmatprep.subr.bf16.mxu0 0
  %1680 = vmatpush2.bf16.xpose.msra.mxu0 0
  %1681 = vmatprep.subr.bf16.mxu0 0
  %1682 = vmatpush2.bf16.xpose.msra.mxu0 0
  %1683 = vmatprep.subr.bf16.mxu0 0
  %1684 = vmatpush2.bf16.xpose.msra.mxu0 0
  %1685 = vmatprep.subr.bf16.mxu0 0
  %1686 = vmatpush2.bf16.xpose.msra.mxu0 0
  %1687 = vmatprep.mubr.bf16.mxu0 0
  %1688 = vmatmul.mubr.bf16.gmra.mxu0 %v1650
  %v1689 = vpop.f32.mrf.mxu0
  %v1690 = vadd.f32 %v75, %v1689
  %v1691 = vpop.f32.mrf.mxu0
  %v1692 = vpop.f32.mrf.mxu0
  %v1693 = vpop.f32.mrf.mxu0
  %1694 = vdwg.mxu0
  %v1695 = vsel %vm285, %v1690, -inf
  %1696 = vmax.xlane.f32.xlu0 %v1695
  %v1697 = vpop.xlane.xlu0 %1696
  %v1698 = vsub.f32 %v1690, %v1697
  %v1699 = vmul.f32 %v1698, 1.442695
  %v1700 = vpow.pop %v1699
  %v1701 = vsel %vm285, %v1700, 0.0
  %1702 = vadd.xlane.f32.xlu0 %v1701
  %v1703 = vpop.xlane.xlu0 %1702
  %v1704 = vrcp.pop %v1703
  %v1705 = vmul.f32 %v1700, %v1704
  %v1706 = vpack.c.bf16 %v1705, %v1705
  %1708 = vrot.lane.b32.xlu0 %v1597, 96
  %v1709 = vpop.permute.xlu0 %1708
  %v1711 = vsel %vm285, %v1706, 0
  %v1714 = vsel %vm302, %v1709, 0
  %1716 = vmatprep.subr.bf16.mxu0 0
  %1717 = vmatpush1.bf16.msra.mxu0 0
  %1718 = vmatprep.subr.bf16.mxu0 0
  %1719 = vmatpush1.bf16.msra.mxu0 0
  %1720 = vmatprep.subr.bf16.mxu0 0
  %1721 = vmatpush1.bf16.msra.mxu0 0
  %1722 = vmatprep.subr.bf16.mxu0 0
  %1723 = vmatpush1.bf16.msra.mxu0 0
  %1724 = vmatprep.subr.bf16.mxu0 0
  %1725 = vmatpush1.bf16.msra.mxu0 0
  %1726 = vmatprep.subr.bf16.mxu0 0
  %1727 = vmatpush1.bf16.msra.mxu0 0
  %1728 = vmatprep.subr.bf16.mxu0 0
  %1729 = vmatpush1.bf16.msra.mxu0 0
  %1730 = vmatprep.subr.bf16.mxu0 0
  %1731 = vmatpush1.bf16.msra.mxu0 %v1714
  %1732 = vmatprep.subr.bf16.mxu0 0
  %1733 = vmatpush2.bf16.msra.mxu0 0
  %1734 = vmatprep.subr.bf16.mxu0 0
  %1735 = vmatpush2.bf16.msra.mxu0 0
  %1736 = vmatprep.subr.bf16.mxu0 0
  %1737 = vmatpush2.bf16.msra.mxu0 0
  %1738 = vmatprep.subr.bf16.mxu0 0
  %1739 = vmatpush2.bf16.msra.mxu0 0
  %1740 = vmatprep.subr.bf16.mxu0 0
  %1741 = vmatpush2.bf16.msra.mxu0 0
  %1742 = vmatprep.subr.bf16.mxu0 0
  %1743 = vmatpush2.bf16.msra.mxu0 0
  %1744 = vmatprep.subr.bf16.mxu0 0
  %1745 = vmatpush2.bf16.msra.mxu0 0
  %1746 = vmatprep.subr.bf16.mxu0 0
  %1747 = vmatpush2.bf16.msra.mxu0 0
  %1748 = vmatprep.mubr.bf16.mxu0 0
  %1749 = vmatmul.mubr.bf16.gmra.mxu0 %v1711
  %v1750 = vpop.f32.mrf.mxu0
  %v1751 = vadd.f32 0.0, %v1750
  %v1752 = vpop.f32.mrf.mxu0
  %v1753 = vpop.f32.mrf.mxu0
  %v1754 = vpop.f32.mrf.mxu0
  %1755 = vdwg.mxu0
  %1757 = vrot.lane.b32.xlu0 %v1751, 32
  %v1758 = vpop.permute.xlu0 %1757
  %v1760 = vsel %vm238, %v1639, %v1758
  %v1761 = vpack.c.bf16 %v1760, %v1532
  %s1762 = scalar_lea.vmem %s7, 32
  %v1763 = vld [vmem:[%s1762] sm:$0xf]
  %v1764 = vld [vmem:[%s1762 + $0x4] sm:$0xf]
  %v1765 = vld [vmem:[%s1762 + $0x8] sm:$0xf]
  %v1766 = vld [vmem:[%s1762 + $0xc] sm:$0xf]
  %v1767 = vld [vmem:[%s1762 + $0x10] sm:$0xf]
  %v1768 = vld [vmem:[%s1762 + $0x14] sm:$0xf]
  %v1769 = vld [vmem:[%s1762 + $0x18] sm:$0xf]
  %v1770 = vld [vmem:[%s1762 + $0x1c] sm:$0xf]
  %v1779 = vunpack.c.l.b16 %v1763
  %v1780 = vunpack.c.l.b16 %v1764
  %v1781 = vunpack.c.l.b16 %v1765
  %v1782 = vunpack.c.l.b16 %v1766
  %v1783 = vunpack.c.l.b16 %v1767
  %v1784 = vunpack.c.l.b16 %v1768
  %v1785 = vunpack.c.l.b16 %v1769
  %v1786 = vunpack.c.l.b16 %v1770
  %v1787 = vpack.c.b16 %v1780, %v1779
  %v1788 = vpack.c.b16 %v1782, %v1781
  %v1789 = vpack.c.b16 %v1784, %v1783
  %v1790 = vpack.c.b16 %v1786, %v1785
  %v1796 = vsel %vm78, %v1761, 0
  %1798 = vmatprep.subr.bf16.mxu0 0
  %1799 = vmatpush1.bf16.msra.mxu0 0
  %1800 = vmatprep.subr.bf16.mxu0 0
  %1801 = vmatpush1.bf16.msra.mxu0 0
  %1802 = vmatprep.subr.bf16.mxu0 0
  %1803 = vmatpush1.bf16.msra.mxu0 0
  %1804 = vmatprep.subr.bf16.mxu0 0
  %1805 = vmatpush1.bf16.msra.mxu0 0
  %1806 = vmatprep.subr.bf16.mxu0 0
  %1807 = vmatpush1.bf16.msra.mxu0 %v1790
  %1808 = vmatprep.subr.bf16.mxu0 0
  %1809 = vmatpush1.bf16.msra.mxu0 %v1789
  %1810 = vmatprep.subr.bf16.mxu0 0
  %1811 = vmatpush1.bf16.msra.mxu0 %v1788
  %1812 = vmatprep.subr.bf16.mxu0 0
  %1813 = vmatpush1.bf16.msra.mxu0 %v1787
  %1814 = vmatprep.subr.bf16.mxu0 0
  %1815 = vmatpush2.bf16.msra.mxu0 0
  %1816 = vmatprep.subr.bf16.mxu0 0
  %1817 = vmatpush2.bf16.msra.mxu0 0
  %1818 = vmatprep.subr.bf16.mxu0 0
  %1819 = vmatpush2.bf16.msra.mxu0 0
  %1820 = vmatprep.subr.bf16.mxu0 0
  %1821 = vmatpush2.bf16.msra.mxu0 0
  %1822 = vmatprep.subr.bf16.mxu0 0
  %1823 = vmatpush2.bf16.msra.mxu0 0
  %1824 = vmatprep.subr.bf16.mxu0 0
  %1825 = vmatpush2.bf16.msra.mxu0 0
  %1826 = vmatprep.subr.bf16.mxu0 0
  %1827 = vmatpush2.bf16.msra.mxu0 0
  %1828 = vmatprep.subr.bf16.mxu0 0
  %1829 = vmatpush2.bf16.msra.mxu0 0
  %1830 = vmatprep.mubr.bf16.mxu0 0
  %1831 = vmatmul.mubr.bf16.gmra.mxu0 %v1796
  %v1832 = vpop.f32.mrf.mxu0
  %v1833 = vadd.f32 0.0, %v1832
  %v1834 = vpop.f32.mrf.mxu0
  %v1835 = vpop.f32.mrf.mxu0
  %v1836 = vadd.f32 0.0, %v1835
  %v1837 = vpop.f32.mrf.mxu0
  %1838 = vdwg.mxu0
  %v1839 = vadd.f32 %v1144, %v1833
  %v1840 = vadd.f32 %v1145, %v1836
  %s1841 = scalar_lea.vmem %s8, 1
  %v1842 = vld [vmem:[%s1841] sm:$0x1]
  %v1844 = vlaneseq
  %v1845 = vshrl.u32 %v1844, 7
  %v1846 = vsub.s32 0, %v1845
  %v1847 = vrot.slane %v1842, %v1846
  %v1849 = vadd.f32 %v1839, %v1847
  %v1850 = vadd.f32 %v1840, %v1847
  %s1851 = scalar_lea.vmem %s9, 1
  %v1852 = vld [vmem:[%s1851] sm:$0x1]
  %s1853 = scalar_lea.vmem %s10, 1
  %v1854 = vld [vmem:[%s1853] sm:$0x1]
  %v1855 = vsel %vm78, %v1849, 0.0
  %1856 = vadd.xlane.f32.xlu0 %v1855
  %v1857 = vpop.xlane.xlu0 %1856
  %v1858 = vsel %vm78, %v1850, 0.0
  %1859 = vadd.xlane.f32.xlu0 %v1858
  %v1860 = vpop.xlane.xlu0 %1859
  %v1861 = vmul.f32 %v1849, %v1849
  %v1862 = vmul.f32 %v1850, %v1850
  %v1863 = vsel %vm78, %v1861, 0.0
  %1864 = vadd.xlane.f32.xlu0 %v1863
  %v1865 = vpop.xlane.xlu0 %1864
  %v1866 = vsel %vm78, %v1862, 0.0
  %1867 = vadd.xlane.f32.xlu0 %v1866
  %v1868 = vpop.xlane.xlu0 %1867
  %v1869 = vmul.f32 %v1857, 0.015625
  %v1870 = vmul.f32 %v1860, 0.015625
  %v1871 = vmul.f32 %v1865, 0.015625
  %v1872 = vmul.f32 %v1868, 0.015625
  %v1873 = vmul.f32 %v1869, %v1869
  %v1874 = vmul.f32 %v1870, %v1870
  %v1875 = vsub.f32 %v1871, %v1873
  %v1876 = vsub.f32 %v1872, %v1874
  %v1877 = vsub.f32 %v1849, %v1869
  %v1878 = vsub.f32 %v1850, %v1870
  %v1879 = vadd.f32 %v1875, 1e-05
  %v1880 = vadd.f32 %v1876, 1e-05
  %v1881 = vrsqrt.pop %v1879
  %v1882 = vrsqrt.pop %v1880
  %v1883 = vmul.f32 %v1877, %v1881
  %v1884 = vmul.f32 %v1878, %v1882
  %v1886 = vlaneseq
  %v1887 = vshrl.u32 %v1886, 7
  %v1888 = vsub.s32 0, %v1887
  %v1889 = vrot.slane %v1852, %v1888
  %v1891 = vmul.f32 %v1883, %v1889
  %v1892 = vmul.f32 %v1884, %v1889
  %v1894 = vlaneseq
  %v1895 = vshrl.u32 %v1894, 7
  %v1896 = vsub.s32 0, %v1895
  %v1897 = vrot.slane %v1854, %v1896
  %v1899 = vadd.f32 %v1891, %v1897
  %v1900 = vadd.f32 %v1892, %v1897
  %v1901 = vpack.c.bf16 %v1900, %v1899
  %s1902 = scalar_lea.vmem %s11, 64
  %v1903 = vld [vmem:[%s1902] sm:$0xff]
  %v1904 = vld [vmem:[%s1902 + $0x8] sm:$0xff]
  %v1905 = vld [vmem:[%s1902 + $0x10] sm:$0xff]
  %v1906 = vld [vmem:[%s1902 + $0x18] sm:$0xff]
  %v1907 = vld [vmem:[%s1902 + $0x20] sm:$0xff]
  %v1908 = vld [vmem:[%s1902 + $0x28] sm:$0xff]
  %v1909 = vld [vmem:[%s1902 + $0x30] sm:$0xff]
  %v1910 = vld [vmem:[%s1902 + $0x38] sm:$0xff]
  %s1911 = scalar_lea.vmem %s12, 2
  %v1912 = vld [vmem:[%s1911] sm:$0x3]
  %v1914 = vlaneseq
  %v1915 = vshrl.u32 %v1914, 7
  %v1916 = vsub.s32 0, %v1915
  %v1917 = vrot.slane %v1912, %v1916
  %v1918 = vlaneseq
  %v1919 = vshrl.u32 %v1918, 7
  %v1920 = vsub.s32 1, %v1919
  %v1921 = vrot.slane %v1912, %v1920
  %v1932 = vunpack.c.l.b16 %v1903
  %v1933 = vunpack.c.h.b16 %v1903
  %v1934 = vunpack.c.l.b16 %v1904
  %v1935 = vunpack.c.h.b16 %v1904
  %v1936 = vunpack.c.l.b16 %v1905
  %v1937 = vunpack.c.h.b16 %v1905
  %v1938 = vunpack.c.l.b16 %v1906
  %v1939 = vunpack.c.h.b16 %v1906
  %v1940 = vunpack.c.l.b16 %v1907
  %v1941 = vunpack.c.h.b16 %v1907
  %v1942 = vunpack.c.l.b16 %v1908
  %v1943 = vunpack.c.h.b16 %v1908
  %v1944 = vunpack.c.l.b16 %v1909
  %v1945 = vunpack.c.h.b16 %v1909
  %v1946 = vunpack.c.l.b16 %v1910
  %v1947 = vunpack.c.h.b16 %v1910
  %v1948 = vpack.c.b16 %v1934, %v1932
  %v1949 = vpack.c.b16 %v1935, %v1933
  %v1950 = vpack.c.b16 %v1938, %v1936
  %v1951 = vpack.c.b16 %v1939, %v1937
  %v1952 = vpack.c.b16 %v1942, %v1940
  %v1953 = vpack.c.b16 %v1943, %v1941
  %v1954 = vpack.c.b16 %v1946, %v1944
  %v1955 = vpack.c.b16 %v1947, %v1945
  %v1965 = vsel %vm78, %v1901, 0
  %1967 = vmatprep.subr.bf16.mxu0 0
  %1968 = vmatpush1.bf16.msra.mxu0 0
  %1969 = vmatprep.subr.bf16.mxu0 0
  %1970 = vmatpush1.bf16.msra.mxu0 0
  %1971 = vmatprep.subr.bf16.mxu0 0
  %1972 = vmatpush1.bf16.msra.mxu0 0
  %1973 = vmatprep.subr.bf16.mxu0 0
  %1974 = vmatpush1.bf16.msra.mxu0 0
  %1975 = vmatprep.subr.bf16.mxu0 %v1955
  %1976 = vmatpush1.bf16.msra.mxu0 %v1954
  %1977 = vmatprep.subr.bf16.mxu0 %v1953
  %1978 = vmatpush1.bf16.msra.mxu0 %v1952
  %1979 = vmatprep.subr.bf16.mxu0 %v1951
  %1980 = vmatpush1.bf16.msra.mxu0 %v1950
  %1981 = vmatprep.subr.bf16.mxu0 %v1949
  %1982 = vmatpush1.bf16.msra.mxu0 %v1948
  %1983 = vmatprep.subr.bf16.mxu0 0
  %1984 = vmatpush2.bf16.msra.mxu0 0
  %1985 = vmatprep.subr.bf16.mxu0 0
  %1986 = vmatpush2.bf16.msra.mxu0 0
  %1987 = vmatprep.subr.bf16.mxu0 0
  %1988 = vmatpush2.bf16.msra.mxu0 0
  %1989 = vmatprep.subr.bf16.mxu0 0
  %1990 = vmatpush2.bf16.msra.mxu0 0
  %1991 = vmatprep.subr.bf16.mxu0 0
  %1992 = vmatpush2.bf16.msra.mxu0 0
  %1993 = vmatprep.subr.bf16.mxu0 0
  %1994 = vmatpush2.bf16.msra.mxu0 0
  %1995 = vmatprep.subr.bf16.mxu0 0
  %1996 = vmatpush2.bf16.msra.mxu0 0
  %1997 = vmatprep.subr.bf16.mxu0 0
  %1998 = vmatpush2.bf16.msra.mxu0 0
  %1999 = vmatprep.mubr.bf16.mxu0 0
  %2000 = vmatmul.mubr.bf16.gmra.mxu0 %v1965
  %v2001 = vpop.f32.mrf.mxu0
  %v2002 = vadd.f32 %v1917, %v2001
  %v2003 = vpop.f32.mrf.mxu0
  %v2004 = vadd.f32 %v1921, %v2003
  %v2005 = vpop.f32.mrf.mxu0
  %v2006 = vadd.f32 %v1917, %v2005
  %v2007 = vpop.f32.mrf.mxu0
  %v2008 = vadd.f32 %v1921, %v2007
  %2009 = vdwg.mxu0
  %v2010 = vmul.f32 %v2002, 1.702
  %v2011 = vmul.f32 %v2004, 1.702
  %v2012 = vmul.f32 %v2006, 1.702
  %v2013 = vmul.f32 %v2008, 1.702
  %v2014 = vxor.u32 %v2010, 2147483648
  %v2015 = vxor.u32 %v2011, 2147483648
  %v2016 = vxor.u32 %v2012, 2147483648
  %v2017 = vxor.u32 %v2013, 2147483648
  %v2018 = vmul.f32 %v2014, 1.442695
  %v2019 = vpow.pop %v2018
  %v2020 = vmul.f32 %v2015, 1.442695
  %v2021 = vpow.pop %v2020
  %v2022 = vmul.f32 %v2016, 1.442695
  %v2023 = vpow.pop %v2022
  %v2024 = vmul.f32 %v2017, 1.442695
  %v2025 = vpow.pop %v2024
  %v2026 = vadd.f32 %v2019, 1.0
  %v2027 = vadd.f32 %v2021, 1.0
  %v2028 = vadd.f32 %v2023, 1.0
  %v2029 = vadd.f32 %v2025, 1.0
  %v2030 = vrcp.pop %v2026
  %v2031 = vmul.f32 1.0, %v2030
  %v2032 = vrcp.pop %v2027
  %v2033 = vmul.f32 1.0, %v2032
  %v2034 = vrcp.pop %v2028
  %v2035 = vmul.f32 1.0, %v2034
  %v2036 = vrcp.pop %v2029
  %v2037 = vmul.f32 1.0, %v2036
  %v2038 = vmul.f32 %v2002, %v2031
  %v2039 = vmul.f32 %v2004, %v2033
  %v2040 = vmul.f32 %v2006, %v2035
  %v2041 = vmul.f32 %v2008, %v2037
  %v2042 = vpack.c.bf16 %v2040, %v2038
  %v2043 = vpack.c.bf16 %v2041, %v2039
  %s2044 = scalar_lea.vmem %s13, 128
  %v2045 = vld [vmem:[%s2044] sm:$0xf]
  %v2046 = vld [vmem:[%s2044 + $0x4] sm:$0xf]
  %v2047 = vld [vmem:[%s2044 + $0x8] sm:$0xf]
  %v2048 = vld [vmem:[%s2044 + $0xc] sm:$0xf]
  %v2049 = vld [vmem:[%s2044 + $0x10] sm:$0xf]
  %v2050 = vld [vmem:[%s2044 + $0x14] sm:$0xf]
  %v2051 = vld [vmem:[%s2044 + $0x18] sm:$0xf]
  %v2052 = vld [vmem:[%s2044 + $0x1c] sm:$0xf]
  %v2053 = vld [vmem:[%s2044 + $0x20] sm:$0xf]
  %v2054 = vld [vmem:[%s2044 + $0x24] sm:$0xf]
  %v2055 = vld [vmem:[%s2044 + $0x28] sm:$0xf]
  %v2056 = vld [vmem:[%s2044 + $0x2c] sm:$0xf]
  %v2057 = vld [vmem:[%s2044 + $0x30] sm:$0xf]
  %v2058 = vld [vmem:[%s2044 + $0x34] sm:$0xf]
  %v2059 = vld [vmem:[%s2044 + $0x38] sm:$0xf]
  %v2060 = vld [vmem:[%s2044 + $0x3c] sm:$0xf]
  %v2061 = vld [vmem:[%s2044 + $0x40] sm:$0xf]
  %v2062 = vld [vmem:[%s2044 + $0x44] sm:$0xf]
  %v2063 = vld [vmem:[%s2044 + $0x48] sm:$0xf]
  %v2064 = vld [vmem:[%s2044 + $0x4c] sm:$0xf]
  %v2065 = vld [vmem:[%s2044 + $0x50] sm:$0xf]
  %v2066 = vld [vmem:[%s2044 + $0x54] sm:$0xf]
  %v2067 = vld [vmem:[%s2044 + $0x58] sm:$0xf]
  %v2068 = vld [vmem:[%s2044 + $0x5c] sm:$0xf]
  %v2069 = vld [vmem:[%s2044 + $0x60] sm:$0xf]
  %v2070 = vld [vmem:[%s2044 + $0x64] sm:$0xf]
  %v2071 = vld [vmem:[%s2044 + $0x68] sm:$0xf]
  %v2072 = vld [vmem:[%s2044 + $0x6c] sm:$0xf]
  %v2073 = vld [vmem:[%s2044 + $0x70] sm:$0xf]
  %v2074 = vld [vmem:[%s2044 + $0x74] sm:$0xf]
  %v2075 = vld [vmem:[%s2044 + $0x78] sm:$0xf]
  %v2076 = vld [vmem:[%s2044 + $0x7c] sm:$0xf]
  %s2077 = scalar_lea.vmem %s14, 1
  %v2078 = vld [vmem:[%s2077] sm:$0x1]
  %v2080 = vlaneseq
  %v2081 = vshrl.u32 %v2080, 7
  %v2082 = vsub.s32 0, %v2081
  %v2083 = vrot.slane %v2078, %v2082
  %v2117 = vunpack.c.l.b16 %v2045
  %v2118 = vunpack.c.l.b16 %v2046
  %v2119 = vunpack.c.l.b16 %v2047
  %v2120 = vunpack.c.l.b16 %v2048
  %v2121 = vunpack.c.l.b16 %v2049
  %v2122 = vunpack.c.l.b16 %v2050
  %v2123 = vunpack.c.l.b16 %v2051
  %v2124 = vunpack.c.l.b16 %v2052
  %v2125 = vunpack.c.l.b16 %v2053
  %v2126 = vunpack.c.l.b16 %v2054
  %v2127 = vunpack.c.l.b16 %v2055
  %v2128 = vunpack.c.l.b16 %v2056
  %v2129 = vunpack.c.l.b16 %v2057
  %v2130 = vunpack.c.l.b16 %v2058
  %v2131 = vunpack.c.l.b16 %v2059
  %v2132 = vunpack.c.l.b16 %v2060
  %v2133 = vunpack.c.l.b16 %v2061
  %v2134 = vunpack.c.l.b16 %v2062
  %v2135 = vunpack.c.l.b16 %v2063
  %v2136 = vunpack.c.l.b16 %v2064
  %v2137 = vunpack.c.l.b16 %v2065
  %v2138 = vunpack.c.l.b16 %v2066
  %v2139 = vunpack.c.l.b16 %v2067
  %v2140 = vunpack.c.l.b16 %v2068
  %v2141 = vunpack.c.l.b16 %v2069
  %v2142 = vunpack.c.l.b16 %v2070
  %v2143 = vunpack.c.l.b16 %v2071
  %v2144 = vunpack.c.l.b16 %v2072
  %v2145 = vunpack.c.l.b16 %v2073
  %v2146 = vunpack.c.l.b16 %v2074
  %v2147 = vunpack.c.l.b16 %v2075
  %v2148 = vunpack.c.l.b16 %v2076
  %v2149 = vpack.c.b16 %v2118, %v2117
  %v2150 = vpack.c.b16 %v2120, %v2119
  %v2151 = vpack.c.b16 %v2122, %v2121
  %v2152 = vpack.c.b16 %v2124, %v2123
  %v2153 = vpack.c.b16 %v2126, %v2125
  %v2154 = vpack.c.b16 %v2128, %v2127
  %v2155 = vpack.c.b16 %v2130, %v2129
  %v2156 = vpack.c.b16 %v2132, %v2131
  %v2157 = vpack.c.b16 %v2134, %v2133
  %v2158 = vpack.c.b16 %v2136, %v2135
  %v2159 = vpack.c.b16 %v2138, %v2137
  %v2160 = vpack.c.b16 %v2140, %v2139
  %v2161 = vpack.c.b16 %v2142, %v2141
  %v2162 = vpack.c.b16 %v2144, %v2143
  %v2163 = vpack.c.b16 %v2146, %v2145
  %v2164 = vpack.c.b16 %v2148, %v2147
  %2181 = vmatprep.subr.bf16.mxu0 0
  %2182 = vmatpush1.bf16.msra.mxu0 %v2156
  %2183 = vmatprep.subr.bf16.mxu0 0
  %2184 = vmatpush1.bf16.msra.mxu0 %v2155
  %2185 = vmatprep.subr.bf16.mxu0 0
  %2186 = vmatpush1.bf16.msra.mxu0 %v2154
  %2187 = vmatprep.subr.bf16.mxu0 0
  %2188 = vmatpush1.bf16.msra.mxu0 %v2153
  %2189 = vmatprep.subr.bf16.mxu0 0
  %2190 = vmatpush1.bf16.msra.mxu0 %v2152
  %2191 = vmatprep.subr.bf16.mxu0 0
  %2192 = vmatpush1.bf16.msra.mxu0 %v2151
  %2193 = vmatprep.subr.bf16.mxu0 0
  %2194 = vmatpush1.bf16.msra.mxu0 %v2150
  %2195 = vmatprep.subr.bf16.mxu0 0
  %2196 = vmatpush1.bf16.msra.mxu0 %v2149
  %2197 = vmatprep.subr.bf16.mxu0 0
  %2198 = vmatpush2.bf16.msra.mxu0 %v2164
  %2199 = vmatprep.subr.bf16.mxu0 0
  %2200 = vmatpush2.bf16.msra.mxu0 %v2163
  %2201 = vmatprep.subr.bf16.mxu0 0
  %2202 = vmatpush2.bf16.msra.mxu0 %v2162
  %2203 = vmatprep.subr.bf16.mxu0 0
  %2204 = vmatpush2.bf16.msra.mxu0 %v2161
  %2205 = vmatprep.subr.bf16.mxu0 0
  %2206 = vmatpush2.bf16.msra.mxu0 %v2160
  %2207 = vmatprep.subr.bf16.mxu0 0
  %2208 = vmatpush2.bf16.msra.mxu0 %v2159
  %2209 = vmatprep.subr.bf16.mxu0 0
  %2210 = vmatpush2.bf16.msra.mxu0 %v2158
  %2211 = vmatprep.subr.bf16.mxu0 0
  %2212 = vmatpush2.bf16.msra.mxu0 %v2157
  %2213 = vmatprep.mubr.bf16.mxu0 %v2043
  %2214 = vmatmul.mubr.bf16.gmra.mxu0 %v2042
  %v2215 = vpop.f32.mrf.mxu0
  %v2216 = vadd.f32 %v2083, %v2215
  %v2217 = vpop.f32.mrf.mxu0
  %v2218 = vpop.f32.mrf.mxu0
  %v2219 = vadd.f32 %v2083, %v2218
  %v2220 = vpop.f32.mrf.mxu0
  %2221 = vdwg.mxu0
  %v2222 = vadd.f32 %v1849, %v2216
  %v2223 = vadd.f32 %v1850, %v2219
  %2224 = vst.msk [vmem:[#allocation2] sm:$0xff] %vm78, %v2222
  %2225 = vst.msk [vmem:[#allocation2 + $0x8] sm:$0xff] %vm78, %v2223
  %s2226 = smul.u32 0, 2
  %s2227 = sld [smem:[#allocation4 + %s2226]]
  %s2228 = scalar_lea.vmem [#allocation2], %s2227
  %v2229 = vld [vmem:[%s2228] sm:$0x1]
  %s2230 = sadd.s32 %s2226, 1
  %s2231 = sld [smem:[#allocation4 + %s2230]]
  %s2232 = sadd.s32 %s2231, 8
  %s2233 = scalar_lea.vmem [#allocation2], %s2232
  %v2234 = vld [vmem:[%s2233] sm:$0x1]
  %v2236 = vrot.slane %v2234, 7
  %vm2238 = vcmask 1040384
  %v2239 = vsel %vm2238, %v2229, %v2236
  %v2240 = vld [vmem:[%s15] sm:$0x1]
  %v2241 = vld [vmem:[%s16] sm:$0x1]
  %vm2242 = vcmask 517120
  %v2243 = vsel %vm2242, %v2239, 0.0
  %2244 = vadd.xlane.f32.xlu0 %v2243
  %v2245 = vpop.xlane.xlu0 %2244
  %v2246 = vmul.f32 %v2239, %v2239
  %v2247 = vsel %vm2242, %v2246, 0.0
  %2248 = vadd.xlane.f32.xlu0 %v2247
  %v2249 = vpop.xlane.xlu0 %2248
  %v2250 = vmul.f32 %v2245, 0.015625
  %v2251 = vmul.f32 %v2249, 0.015625
  %v2252 = vmul.f32 %v2250, %v2250
  %v2253 = vsub.f32 %v2251, %v2252
  %v2254 = vsub.f32 %v2239, %v2250
  %v2255 = vadd.f32 %v2253, 1e-05
  %v2256 = vrsqrt.pop %v2255
  %v2257 = vmul.f32 %v2254, %v2256
  %v2259 = vlaneseq
  %v2260 = vshrl.u32 %v2259, 7
  %v2261 = vsub.s32 0, %v2260
  %v2262 = vrot.slane %v2240, %v2261
  %v2264 = vmul.f32 %v2257, %v2262
  %v2266 = vlaneseq
  %v2267 = vshrl.u32 %v2266, 7
  %v2268 = vsub.s32 0, %v2267
  %v2269 = vrot.slane %v2241, %v2268
  %v2271 = vadd.f32 %v2264, %v2269
  %v2272 = vpack.c.bf16 %v2271, %v2271
  %v2273 = vld [vmem:[%s17] sm:$0xf]
  %v2274 = vld [vmem:[%s17 + $0x4] sm:$0xf]
  %v2275 = vld [vmem:[%s17 + $0x8] sm:$0xf]
  %v2276 = vld [vmem:[%s17 + $0xc] sm:$0xf]
  %v2277 = vld [vmem:[%s17 + $0x10] sm:$0xf]
  %v2278 = vld [vmem:[%s17 + $0x14] sm:$0xf]
  %v2279 = vld [vmem:[%s17 + $0x18] sm:$0xf]
  %v2280 = vld [vmem:[%s17 + $0x1c] sm:$0xf]
  %v2289 = vunpack.c.l.b16 %v2273
  %v2290 = vunpack.c.l.b16 %v2274
  %v2291 = vunpack.c.l.b16 %v2275
  %v2292 = vunpack.c.l.b16 %v2276
  %v2293 = vunpack.c.l.b16 %v2277
  %v2294 = vunpack.c.l.b16 %v2278
  %v2295 = vunpack.c.l.b16 %v2279
  %v2296 = vunpack.c.l.b16 %v2280
  %v2297 = vpack.c.b16 %v2290, %v2289
  %v2298 = vpack.c.b16 %v2292, %v2291
  %v2299 = vpack.c.b16 %v2294, %v2293
  %v2300 = vpack.c.b16 %v2296, %v2295
  %v2306 = vsel %vm78, %v2272, 0
  %2308 = vmatprep.subr.bf16.mxu0 0
  %2309 = vmatpush1.bf16.msra.mxu0 0
  %2310 = vmatprep.subr.bf16.mxu0 0
  %2311 = vmatpush1.bf16.msra.mxu0 0
  %2312 = vmatprep.subr.bf16.mxu0 0
  %2313 = vmatpush1.bf16.msra.mxu0 0
  %2314 = vmatprep.subr.bf16.mxu0 0
  %2315 = vmatpush1.bf16.msra.mxu0 0
  %2316 = vmatprep.subr.bf16.mxu0 0
  %2317 = vmatpush1.bf16.msra.mxu0 %v2300
  %2318 = vmatprep.subr.bf16.mxu0 0
  %2319 = vmatpush1.bf16.msra.mxu0 %v2299
  %2320 = vmatprep.subr.bf16.mxu0 0
  %2321 = vmatpush1.bf16.msra.mxu0 %v2298
  %2322 = vmatprep.subr.bf16.mxu0 0
  %2323 = vmatpush1.bf16.msra.mxu0 %v2297
  %2324 = vmatprep.subr.bf16.mxu0 0
  %2325 = vmatpush2.bf16.msra.mxu0 0
  %2326 = vmatprep.subr.bf16.mxu0 0
  %2327 = vmatpush2.bf16.msra.mxu0 0
  %2328 = vmatprep.subr.bf16.mxu0 0
  %2329 = vmatpush2.bf16.msra.mxu0 0
  %2330 = vmatprep.subr.bf16.mxu0 0
  %2331 = vmatpush2.bf16.msra.mxu0 0
  %2332 = vmatprep.subr.bf16.mxu0 0
  %2333 = vmatpush2.bf16.msra.mxu0 0
  %2334 = vmatprep.subr.bf16.mxu0 0
  %2335 = vmatpush2.bf16.msra.mxu0 0
  %2336 = vmatprep.subr.bf16.mxu0 0
  %2337 = vmatpush2.bf16.msra.mxu0 0
  %2338 = vmatprep.subr.bf16.mxu0 0
  %2339 = vmatpush2.bf16.msra.mxu0 0
  %2340 = vmatprep.mubr.bf16.mxu0 0
  %2341 = vmatmul.mubr.bf16.gmra.mxu0 %v2306
  %v2342 = vpop.f32.mrf.mxu0
  %v2343 = vadd.f32 0.0, %v2342
  %v2344 = vpop.f32.mrf.mxu0
  %v2345 = vpop.f32.mrf.mxu0
  %v2346 = vpop.f32.mrf.mxu0
  %2347 = vdwg.mxu0
  %vm2348 = vcmask 254976
  %2349 = vst.msk [vmem:[%s18] sm:$0x3] %vm2348, %v2343
  // Predicated region
  $region70: #{clip_forward.4} parent=0 // pred_check
    _
  $region71: #{clip_forward.4} parent=0 // pred_check_branch
    %2351 = sbr.rel (0) target = $region73
  $region72: #{clip_forward.4} parent=0 // pred_region
    _
  $region73: #{clip_forward.4} parent=0 // pred_fallthru
    _
  // Predicated region
  $region74: #{clip_forward.4} parent=0 // pred_check
    _
  $region75: #{clip_forward.4} parent=0 // pred_check_branch
    %2353 = sbr.rel (0) target = $region77
  $region76: #{clip_forward.4} parent=0 // pred_region
    _
  $region77: #{clip_forward.4} parent=0 // pred_fallthru
    _

</llo_original>
